<compile_context>
chip_gen: v5e
topology: v5e:2x2
jax: 0.10.0
libtpu: 0.0.40
codegen_flags: <defaults>
</compile_context>

<pallas_src>
import functools
import math

import jax
import jax.numpy as jnp
from jax.experimental import pallas as pl
from jax.experimental.pallas import tpu as pltpu

EPS = 1e-5  # torch.nn.InstanceNorm{1,2}d default eps


# ----------------------------- Pallas kernels ------------------------------

def _meshconv_in_relu_kernel(g_ref, w_ref, o_ref):
    # Fused MeshConv matmul + InstanceNorm2d(affine=False) + ReLU.
    # g_ref: (1, K, E) bf16   w_ref: (TCo, K) bf16   o_ref: (1, TCo, E) f32
    acc = jnp.dot(w_ref[...], g_ref[0], preferred_element_type=jnp.float32)  # (TCo, E)
    mean = jnp.mean(acc, axis=1, keepdims=True)
    var = jnp.mean(acc * acc, axis=1, keepdims=True) - mean * mean   # biased, one pass
    y = (acc - mean) * jax.lax.rsqrt(var + EPS)
    o_ref[0] = jnp.maximum(y, 0.0)


def _meshconv_in_res_relu_kernel(g_ref, w_ref, r_ref, o_ref):
    # Fused MeshConv matmul + InstanceNorm2d + residual add + ReLU.
    # g_ref: (1, K, E) bf16   w_ref: (TCo, K) bf16   r_ref/o_ref: (1, TCo, E) f32
    acc = jnp.dot(w_ref[...], g_ref[0], preferred_element_type=jnp.float32)
    mean = jnp.mean(acc, axis=1, keepdims=True)
    var = jnp.mean(acc * acc, axis=1, keepdims=True) - mean * mean
    y = (acc - mean) * jax.lax.rsqrt(var + EPS) + r_ref[0]
    o_ref[0] = jnp.maximum(y, 0.0)


def _linear_in1d_kernel(x_ref, w_ref, b_ref, o_ref, *, relu):
    # Fused Linear + InstanceNorm1d(affine=False, on the unsqueezed (B,1,F) tensor)
    # + optional ReLU.   x: (B, Fin)  w: (Fin, Fout)  b: (1, Fout)  o: (B, Fout)
    acc = jnp.dot(x_ref[...], w_ref[...], preferred_element_type=jnp.float32)
    acc = acc + b_ref[...]
    mean = jnp.mean(acc, axis=1, keepdims=True)
    var = jnp.mean(acc * acc, axis=1, keepdims=True) - mean * mean
    y = (acc - mean) * jax.lax.rsqrt(var + EPS)
    if relu:
        y = jnp.maximum(y, 0.0)
    o_ref[...] = y


# --------------------------- Pallas call wrappers ---------------------------

def fused_meshconv(g2, w2, residual=None):
    """(Cout, K) x (B, K, E) matmul fused with InstanceNorm (+residual) + ReLU."""
    B, K, E = g2.shape
    Cout = w2.shape[0]
    # Tile Cout (per-channel norm => channel tiling is exact) to get >1 grid step per
    # core; 16-row tiles keep bf16 / f32 sublane alignment.
    tc = 16 if (Cout % 16 == 0) else Cout
    grid = (B, Cout // tc)

    g_spec = pl.BlockSpec((1, K, E), lambda b, j: (b, 0, 0))
    w_spec = pl.BlockSpec((tc, K), lambda b, j: (j, 0))
    o_spec = pl.BlockSpec((1, tc, E), lambda b, j: (b, j, 0))

    if residual is None:
        kernel = _meshconv_in_relu_kernel
        in_specs = [g_spec, w_spec]
        args = (g2, w2)
    else:
        kernel = _meshconv_in_res_relu_kernel
        in_specs = [g_spec, w_spec, pl.BlockSpec((1, tc, E), lambda b, j: (b, j, 0))]
        args = (g2, w2, residual)

    return pl.pallas_call(
        kernel,
        out_shape=jax.ShapeDtypeStruct((B, Cout, E), jnp.float32),
        grid=grid,
        in_specs=in_specs,
        out_specs=o_spec,
        compiler_params=pltpu.CompilerParams(
            dimension_semantics=("parallel", "parallel")),
    )(*args)


def fused_linear_instnorm(x, w, b, relu):
    """Linear (x @ w + b) fused with InstanceNorm1d over features (+ optional ReLU)."""
    B, Fin = x.shape
    Fout = w.shape[1]
    kernel = functools.partial(_linear_in1d_kernel, relu=relu)
    return pl.pallas_call(
        kernel,
        out_shape=jax.ShapeDtypeStruct((B, Fout), jnp.float32),
        grid=(1,),
        in_specs=[
            pl.BlockSpec((B, Fin), lambda i: (0, 0)),
            pl.BlockSpec((Fin, Fout), lambda i: (0, 0)),
            pl.BlockSpec((1, Fout), lambda i: (0, 0)),
        ],
        out_specs=pl.BlockSpec((B, Fout), lambda i: (0, 0)),
    )(x, w, b.reshape(1, Fout))


# ----------------------------- MeshConv glue --------------------------------

def build_gemm_features(x, gemm):
    """Build the MeshConv GeMM 5-tap features, tap-major on channels: (B, 5*C, E) bf16.

    x:    (B, C, E) edge features
    gemm: (B, E, 5) int32 neighbor indices (col 0 = edge itself, -1 = pad)
    """
    B, C, E = x.shape
    xb = x.astype(jnp.bfloat16)                                       # halve gather bytes
    xp = jnp.concatenate([jnp.zeros((B, C, 1), jnp.bfloat16), xb], axis=2)  # (B, C, E+1)
    gi = (gemm + 1).astype(jnp.int32)                                 # -1 -> zero column
    # TODO(synk): the irregular per-edge neighbor gather stays in XLA glue (a per-lane
    # dynamic gather has no cheap in-kernel lowering); taps are stacked tap-major on the
    # channel axis so NO lane-axis transpose is materialized between the gather and the
    # Pallas matmul.
    f = jax.vmap(lambda xpb, gb: xpb[:, gb])(xp, gi)                  # (B, C, E, 5)
    f1, f2, f3, f4 = f[..., 1], f[..., 2], f[..., 3], f[..., 4]
    return jnp.concatenate(
        [f[..., 0], f1 + f3, f2 + f4, jnp.abs(f1 - f3), jnp.abs(f2 - f4)], axis=1)


# ----------------------------- DownConv / Encoder ----------------------------

def down_conv_forward(p, fe, gemm, pool_idx):
    """MeshCNN DownConv: conv1 + IN + ReLU, `blocks` residual convs, optional pool."""
    g = build_gemm_features(fe, gemm)
    x1 = fused_meshconv(g, p["conv1"])                       # conv1 + bn[0] + relu
    x2 = x1
    for wb in p["conv2"]:
        g = build_gemm_features(x1, gemm)
        x2 = fused_meshconv(g, wb, residual=x1)              # conv + bn + (+x1) + relu
        x1 = x2
    before_pool = None
    if pool_idx is not None:
        before_pool = x2
        # TODO(synk): the true MeshPool priority-queue edge collapse is CPU-side mesh
        # bookkeeping; it is modeled here as a precomputed edge-selection gather
        # (replaces the dense 0/1 matmul formulation -- O(C*Eout) copy, no MXU waste).
        x2 = jnp.take_along_axis(x2, pool_idx[:, None, :], axis=2)
    return x2, before_pool


def mesh_encoder_forward(params, fe, gemm_by_edges, pool_indices):
    encoder_outs = []
    for i, dp in enumerate(params["down_convs"]):
        gemm = gemm_by_edges[fe.shape[2]]
        fe, before_pool = down_conv_forward(dp, fe, gemm, pool_indices[i])
        encoder_outs.append(before_pool)
        # TODO(synk): the `writer is not False` matplotlib/tensorboard visualization
        # branch has no compute semantics and is omitted.
    if params["fcs"] is not None:
        B = fe.shape[0]
        # TODO(synk): global max/avg pool variant not implemented (global_pool=None path).
        fe = fe.reshape(B, -1)                               # contiguous view(B, -1)
        n = len(params["fcs"])
        for i, fcp in enumerate(params["fcs"]):
            fe = fused_linear_instnorm(fe, fcp["w"], fcp["b"], relu=(i < n - 1))
    return fe, encoder_outs


# ------------------------------ parameter init ------------------------------

def init_meshconv(key, cin, cout):
    # nn.init.xavier_normal_ on Conv2d(cin, cout, kernel=(1,5)); stored flattened
    # TAP-MAJOR as (cout, 5*cin) to match build_gemm_features' stacking (i.i.d. normal,
    # so the layout change is distribution-preserving).  The Conv2d bias is dropped:
    # weight_init sets it to 0, and it would cancel under InstanceNorm anyway.
    std = math.sqrt(2.0 / (5.0 * (cin + cout)))
    w = jax.random.normal(key, (cout, 5 * cin), jnp.float32) * std
    return w.astype(jnp.bfloat16)


def init_linear(key, fin, fout):
    # torch nn.Linear default init (kaiming_uniform(a=sqrt(5)) == U(-1/sqrt(fin), ...)).
    kw, kb = jax.random.split(key)
    bound = 1.0 / math.sqrt(fin)
    return {"w": jax.random.uniform(kw, (fin, fout), jnp.float32, -bound, bound),
            "b": jax.random.uniform(kb, (fout,), jnp.float32, -bound, bound)}


def init_mesh_encoder(key, pools, convs, fcs=None, blocks=0, global_pool=None):
    params = {"down_convs": [], "fcs": None}
    for i in range(len(convs) - 1):
        key, k1 = jax.random.split(key)
        dc = {"conv1": init_meshconv(k1, convs[i], convs[i + 1]), "conv2": []}
        for _ in range(blocks):
            key, kb = jax.random.split(key)
            dc["conv2"].append(init_meshconv(kb, convs[i + 1], convs[i + 1]))
        params["down_convs"].append(dc)
    if fcs is not None:
        assert global_pool is None, "global max/avg pool path not implemented"
        last_length = convs[-1] * pools[-1]
        if fcs[0] == last_length:
            fcs = fcs[1:]
        fc_params = []
        for length in fcs:
            key, kf = jax.random.split(key)
            fc_params.append(init_linear(kf, last_length, length))
            last_length = length
        params["fcs"] = fc_params
    return params


# ------------------------------ synthetic meshes ----------------------------

def make_gemm(key, batch, n_edges):
    """Synthetic gemm_edges: col 0 = self index, cols 1..4 = neighbors (-1 = pad)."""
    self_idx = jnp.broadcast_to(
        jnp.arange(n_edges, dtype=jnp.int32)[None, :, None], (batch, n_edges, 1))
    nbrs = jax.random.randint(key, (batch, n_edges, 4), -1, n_edges, dtype=jnp.int32)
    return jnp.concatenate([self_idx, nbrs], axis=2)


def make_pool_idx(key, batch, e_in, e_out):
    """Synthetic MeshPool: per-batch selection of e_out surviving edge indices."""
    rows = [jnp.sort(jax.random.permutation(k, e_in)[:e_out])
            for k in jax.random.split(key, batch)]
    return jnp.stack(rows).astype(jnp.int32)


# ----------------------------------- main -----------------------------------

if __name__ == "__main__":
    key = jax.random.PRNGKey(0)

    B = 2
    pools = [256, 128]          # pools[0] = input edge count; DownConv0 pools to 128
    convs = [5, 16, 32]         # MeshEncoder(pools, convs=[5,16,32], fcs=[64,32], blocks=1)
    blocks = 1
    fcs = [64, 32]

    key, kp, kf, kg0, kg1, kpl = jax.random.split(key, 6)
    params = init_mesh_encoder(kp, pools, convs, fcs=fcs, blocks=blocks)

    fe = jax.random.normal(kf, (B, convs[0], pools[0]), jnp.float32)   # input edge features
    gemm_by_edges = {pools[0]: make_gemm(kg0, B, pools[0]),
                     pools[1]: make_gemm(kg1, B, pools[1])}

    # Pool targets per DownConv (same rule as the torch constructor: pools[i+1] or 0).
    pool_indices = []
    e_cur = pools[0]
    kk = kpl
    for i in range(len(convs) - 1):
        tgt = pools[i + 1] if i + 1 < len(pools) else 0
        if tgt:
            kk, ks = jax.random.split(kk)
            pool_indices.append(make_pool_idx(ks, B, e_cur, tgt))
            e_cur = tgt
        else:
            pool_indices.append(None)

    fwd = jax.jit(mesh_encoder_forward)
    out_fe, encoder_outs = fwd(params, fe, gemm_by_edges, pool_indices)
    out_fe = jax.block_until_ready(out_fe)

    assert out_fe.shape == (B, fcs[-1]), out_fe.shape
    assert encoder_outs[0].shape == (B, convs[1], pools[0]), encoder_outs[0].shape
    assert encoder_outs[1] is None
    assert bool(jnp.all(jnp.isfinite(out_fe)))
    print("KERNEL_OK")
</pallas_src>

<mosaic_0001>
module attributes {stable_mosaic.version = 11 : i64} {
  func.func @_meshconv_in_relu_kernel(%arg0: i32, %arg1: i32, %arg2: memref<1x25x256xbf16, #tpu.memory_space<vmem>>, %arg3: memref<16x25xbf16, #tpu.memory_space<vmem>>, %arg4: memref<1x16x256xf32, #tpu.memory_space<vmem>>) attributes {dimension_semantics = [#tpu.dimension_semantics<parallel>, #tpu.dimension_semantics<parallel>], iteration_bounds = array<i64: 2, 1>, scalar_prefetch = 0 : i64, scratch_operands = 0 : i64, tpu.core_type = #tpu.core_type<tc>, window_params = [{transform_indices = @transform_0, window_bounds = array<i64: 1, 25, 256>}, {transform_indices = @transform_1, window_bounds = array<i64: 16, 25>}, {transform_indices = @transform_2, window_bounds = array<i64: 1, 16, 256>}]} {
    %c0 = arith.constant 0 : index
    %c0_0 = arith.constant 0 : index
    %0 = vector.load %arg3[%c0, %c0_0] : memref<16x25xbf16, #tpu.memory_space<vmem>>, vector<16x25xbf16>
    %c0_1 = arith.constant 0 : index
    %c0_2 = arith.constant 0 : index
    %c0_3 = arith.constant 0 : index
    %1 = vector.load %arg2[%c0_1, %c0_2, %c0_3] : memref<1x25x256xbf16, #tpu.memory_space<vmem>>, vector<1x25x256xbf16>
    %2 = vector.shape_cast %1 : vector<1x25x256xbf16> to vector<25x256xbf16>
    %cst = arith.constant dense<0.000000e+00> : vector<16x256xf32>
    %3 = tpu.matmul %0, %2, %cst {dimension_numbers = #tpu.dot_dimension_numbers<[1], [0], [0], [1], [0, 0, 1, 1], [], []>} : vector<16x25xbf16>, vector<25x256xbf16>, vector<16x256xf32> -> vector<16x256xf32>
    %cst_4 = arith.constant dense<0.000000e+00> : vector<16xf32>
    %4 = vector.multi_reduction <add>, %3, %cst_4 [1] : vector<16x256xf32> to vector<16xf32>
    %5 = vector.shape_cast %4 : vector<16xf32> to vector<16x1xf32>
    %cst_5 = arith.constant 2.560000e+02 : f32
    %6 = vector.broadcast %cst_5 : f32 to vector<16x1xf32>
    %7 = arith.divf %5, %6 : vector<16x1xf32>
    %8 = arith.mulf %3, %3 : vector<16x256xf32>
    %cst_6 = arith.constant dense<0.000000e+00> : vector<16xf32>
    %9 = vector.multi_reduction <add>, %8, %cst_6 [1] : vector<16x256xf32> to vector<16xf32>
    %10 = vector.shape_cast %9 : vector<16xf32> to vector<16x1xf32>
    %cst_7 = arith.constant 2.560000e+02 : f32
    %11 = vector.broadcast %cst_7 : f32 to vector<16x1xf32>
    %12 = arith.divf %10, %11 : vector<16x1xf32>
    %13 = arith.mulf %7, %7 : vector<16x1xf32>
    %14 = arith.subf %12, %13 : vector<16x1xf32>
    %15 = vector.broadcast %7 : vector<16x1xf32> to vector<16x256xf32>
    %16 = arith.subf %3, %15 : vector<16x256xf32>
    %cst_8 = arith.constant 9.99999974E-6 : f32
    %17 = vector.broadcast %cst_8 : f32 to vector<16x1xf32>
    %18 = arith.addf %14, %17 : vector<16x1xf32>
    %19 = math.rsqrt %18 : vector<16x1xf32>
    %20 = vector.broadcast %19 : vector<16x1xf32> to vector<16x256xf32>
    %21 = arith.mulf %16, %20 : vector<16x256xf32>
    %cst_9 = arith.constant 0.000000e+00 : f32
    %22 = vector.broadcast %cst_9 : f32 to vector<16x256xf32>
    %23 = arith.maximumf %21, %22 : vector<16x256xf32>
    %c0_10 = arith.constant 0 : index
    %c0_11 = arith.constant 0 : index
    %c0_12 = arith.constant 0 : index
    %24 = vector.load %arg4[%c0_10, %c0_11, %c0_12] : memref<1x16x256xf32, #tpu.memory_space<vmem>>, vector<1x16x256xf32>
    %25 = vector.shape_cast %24 : vector<1x16x256xf32> to vector<16x256xf32>
    %26 = vector.shape_cast %23 : vector<16x256xf32> to vector<1x16x256xf32>
    tpu.vector_store %arg4[%c0_10, %c0_11, %c0_12], %26 {strides = array<i32>} : memref<1x16x256xf32, #tpu.memory_space<vmem>>, vector<1x16x256xf32>,
    return
  }
  func.func @transform_0(%arg0: i32, %arg1: i32) -> (i32, i32, i32) {
    %c0_i32 = arith.constant 0 : i32
    %c0_i32_0 = arith.constant 0 : i32
    %c0_i32_1 = arith.constant 0 : i32
    return %arg0, %c0_i32, %c0_i32_0 : i32, i32, i32
  }
  func.func @transform_1(%arg0: i32, %arg1: i32) -> (i32, i32) {
    %c0_i32 = arith.constant 0 : i32
    %c0_i32_0 = arith.constant 0 : i32
    return %arg1, %c0_i32 : i32, i32
  }
  func.func @transform_2(%arg0: i32, %arg1: i32) -> (i32, i32, i32) {
    %c0_i32 = arith.constant 0 : i32
    %c0_i32_0 = arith.constant 0 : i32
    return %arg0, %arg1, %c0_i32 : i32, i32, i32
  }
}

module attributes {stable_mosaic.version = 11 : i64} {
  func.func @_meshconv_in_res_relu_kernel(%arg0: i32, %arg1: i32, %arg2: memref<1x80x256xbf16, #tpu.memory_space<vmem>>, %arg3: memref<16x80xbf16, #tpu.memory_space<vmem>>, %arg4: memref<1x16x256xf32, #tpu.memory_space<vmem>>, %arg5: memref<1x16x256xf32, #tpu.memory_space<vmem>>) attributes {dimension_semantics = [#tpu.dimension_semantics<parallel>, #tpu.dimension_semantics<parallel>], iteration_bounds = array<i64: 2, 1>, scalar_prefetch = 0 : i64, scratch_operands = 0 : i64, tpu.core_type = #tpu.core_type<tc>, window_params = [{transform_indices = @transform_0, window_bounds = array<i64: 1, 80, 256>}, {transform_indices = @transform_1, window_bounds = array<i64: 16, 80>}, {transform_indices = @transform_2, window_bounds = array<i64: 1, 16, 256>}, {transform_indices = @transform_3, window_bounds = array<i64: 1, 16, 256>}]} {
    %c0 = arith.constant 0 : index
    %c0_0 = arith.constant 0 : index
    %0 = vector.load %arg3[%c0, %c0_0] : memref<16x80xbf16, #tpu.memory_space<vmem>>, vector<16x80xbf16>
    %c0_1 = arith.constant 0 : index
    %c0_2 = arith.constant 0 : index
    %c0_3 = arith.constant 0 : index
    %1 = vector.load %arg2[%c0_1, %c0_2, %c0_3] : memref<1x80x256xbf16, #tpu.memory_space<vmem>>, vector<1x80x256xbf16>
    %2 = vector.shape_cast %1 : vector<1x80x256xbf16> to vector<80x256xbf16>
    %cst = arith.constant dense<0.000000e+00> : vector<16x256xf32>
    %3 = tpu.matmul %0, %2, %cst {dimension_numbers = #tpu.dot_dimension_numbers<[1], [0], [0], [1], [0, 0, 1, 1], [], []>} : vector<16x80xbf16>, vector<80x256xbf16>, vector<16x256xf32> -> vector<16x256xf32>
    %cst_4 = arith.constant dense<0.000000e+00> : vector<16xf32>
    %4 = vector.multi_reduction <add>, %3, %cst_4 [1] : vector<16x256xf32> to vector<16xf32>
    %5 = vector.shape_cast %4 : vector<16xf32> to vector<16x1xf32>
    %cst_5 = arith.constant 2.560000e+02 : f32
    %6 = vector.broadcast %cst_5 : f32 to vector<16x1xf32>
    %7 = arith.divf %5, %6 : vector<16x1xf32>
    %8 = arith.mulf %3, %3 : vector<16x256xf32>
    %cst_6 = arith.constant dense<0.000000e+00> : vector<16xf32>
    %9 = vector.multi_reduction <add>, %8, %cst_6 [1] : vector<16x256xf32> to vector<16xf32>
    %10 = vector.shape_cast %9 : vector<16xf32> to vector<16x1xf32>
    %cst_7 = arith.constant 2.560000e+02 : f32
    %11 = vector.broadcast %cst_7 : f32 to vector<16x1xf32>
    %12 = arith.divf %10, %11 : vector<16x1xf32>
    %13 = arith.mulf %7, %7 : vector<16x1xf32>
    %14 = arith.subf %12, %13 : vector<16x1xf32>
    %15 = vector.broadcast %7 : vector<16x1xf32> to vector<16x256xf32>
    %16 = arith.subf %3, %15 : vector<16x256xf32>
    %cst_8 = arith.constant 9.99999974E-6 : f32
    %17 = vector.broadcast %cst_8 : f32 to vector<16x1xf32>
    %18 = arith.addf %14, %17 : vector<16x1xf32>
    %19 = math.rsqrt %18 : vector<16x1xf32>
    %20 = vector.broadcast %19 : vector<16x1xf32> to vector<16x256xf32>
    %21 = arith.mulf %16, %20 : vector<16x256xf32>
    %c0_9 = arith.constant 0 : index
    %c0_10 = arith.constant 0 : index
    %c0_11 = arith.constant 0 : index
    %22 = vector.load %arg4[%c0_9, %c0_10, %c0_11] : memref<1x16x256xf32, #tpu.memory_space<vmem>>, vector<1x16x256xf32>
    %23 = vector.shape_cast %22 : vector<1x16x256xf32> to vector<16x256xf32>
    %24 = arith.addf %21, %23 : vector<16x256xf32>
    %cst_12 = arith.constant 0.000000e+00 : f32
    %25 = vector.broadcast %cst_12 : f32 to vector<16x256xf32>
    %26 = arith.maximumf %24, %25 : vector<16x256xf32>
    %c0_13 = arith.constant 0 : index
    %c0_14 = arith.constant 0 : index
    %c0_15 = arith.constant 0 : index
    %27 = vector.load %arg5[%c0_13, %c0_14, %c0_15] : memref<1x16x256xf32, #tpu.memory_space<vmem>>, vector<1x16x256xf32>
    %28 = vector.shape_cast %27 : vector<1x16x256xf32> to vector<16x256xf32>
    %29 = vector.shape_cast %26 : vector<16x256xf32> to vector<1x16x256xf32>
    tpu.vector_store %arg5[%c0_13, %c0_14, %c0_15], %29 {strides = array<i32>} : memref<1x16x256xf32, #tpu.memory_space<vmem>>, vector<1x16x256xf32>,
    return
  }
  func.func @transform_0(%arg0: i32, %arg1: i32) -> (i32, i32, i32) {
    %c0_i32 = arith.constant 0 : i32
    %c0_i32_0 = arith.constant 0 : i32
    %c0_i32_1 = arith.constant 0 : i32
    return %arg0, %c0_i32, %c0_i32_0 : i32, i32, i32
  }
  func.func @transform_1(%arg0: i32, %arg1: i32) -> (i32, i32) {
    %c0_i32 = arith.constant 0 : i32
    %c0_i32_0 = arith.constant 0 : i32
    return %arg1, %c0_i32 : i32, i32
  }
  func.func @transform_2(%arg0: i32, %arg1: i32) -> (i32, i32, i32) {
    %c0_i32 = arith.constant 0 : i32
    %c0_i32_0 = arith.constant 0 : i32
    return %arg0, %arg1, %c0_i32 : i32, i32, i32
  }
  func.func @transform_3(%arg0: i32, %arg1: i32) -> (i32, i32, i32) {
    %c0_i32 = arith.constant 0 : i32
    %c0_i32_0 = arith.constant 0 : i32
    return %arg0, %arg1, %c0_i32 : i32, i32, i32
  }
}

module attributes {stable_mosaic.version = 11 : i64} {
  func.func @_meshconv_in_relu_kernel(%arg0: i32, %arg1: i32, %arg2: memref<1x80x128xbf16, #tpu.memory_space<vmem>>, %arg3: memref<16x80xbf16, #tpu.memory_space<vmem>>, %arg4: memref<1x16x128xf32, #tpu.memory_space<vmem>>) attributes {dimension_semantics = [#tpu.dimension_semantics<parallel>, #tpu.dimension_semantics<parallel>], iteration_bounds = array<i64: 2, 2>, scalar_prefetch = 0 : i64, scratch_operands = 0 : i64, tpu.core_type = #tpu.core_type<tc>, window_params = [{transform_indices = @transform_0, window_bounds = array<i64: 1, 80, 128>}, {transform_indices = @transform_1, window_bounds = array<i64: 16, 80>}, {transform_indices = @transform_2, window_bounds = array<i64: 1, 16, 128>}]} {
    %c0 = arith.constant 0 : index
    %c0_0 = arith.constant 0 : index
    %0 = vector.load %arg3[%c0, %c0_0] : memref<16x80xbf16, #tpu.memory_space<vmem>>, vector<16x80xbf16>
    %c0_1 = arith.constant 0 : index
    %c0_2 = arith.constant 0 : index
    %c0_3 = arith.constant 0 : index
    %1 = vector.load %arg2[%c0_1, %c0_2, %c0_3] : memref<1x80x128xbf16, #tpu.memory_space<vmem>>, vector<1x80x128xbf16>
    %2 = vector.shape_cast %1 : vector<1x80x128xbf16> to vector<80x128xbf16>
    %cst = arith.constant dense<0.000000e+00> : vector<16x128xf32>
    %3 = tpu.matmul %0, %2, %cst {dimension_numbers = #tpu.dot_dimension_numbers<[1], [0], [0], [1], [0, 0, 1, 1], [], []>} : vector<16x80xbf16>, vector<80x128xbf16>, vector<16x128xf32> -> vector<16x128xf32>
    %cst_4 = arith.constant dense<0.000000e+00> : vector<16xf32>
    %4 = vector.multi_reduction <add>, %3, %cst_4 [1] : vector<16x128xf32> to vector<16xf32>
    %5 = vector.shape_cast %4 : vector<16xf32> to vector<16x1xf32>
    %cst_5 = arith.constant 1.280000e+02 : f32
    %6 = vector.broadcast %cst_5 : f32 to vector<16x1xf32>
    %7 = arith.divf %5, %6 : vector<16x1xf32>
    %8 = arith.mulf %3, %3 : vector<16x128xf32>
    %cst_6 = arith.constant dense<0.000000e+00> : vector<16xf32>
    %9 = vector.multi_reduction <add>, %8, %cst_6 [1] : vector<16x128xf32> to vector<16xf32>
    %10 = vector.shape_cast %9 : vector<16xf32> to vector<16x1xf32>
    %cst_7 = arith.constant 1.280000e+02 : f32
    %11 = vector.broadcast %cst_7 : f32 to vector<16x1xf32>
    %12 = arith.divf %10, %11 : vector<16x1xf32>
    %13 = arith.mulf %7, %7 : vector<16x1xf32>
    %14 = arith.subf %12, %13 : vector<16x1xf32>
    %15 = vector.broadcast %7 : vector<16x1xf32> to vector<16x128xf32>
    %16 = arith.subf %3, %15 : vector<16x128xf32>
    %cst_8 = arith.constant 9.99999974E-6 : f32
    %17 = vector.broadcast %cst_8 : f32 to vector<16x1xf32>
    %18 = arith.addf %14, %17 : vector<16x1xf32>
    %19 = math.rsqrt %18 : vector<16x1xf32>
    %20 = vector.broadcast %19 : vector<16x1xf32> to vector<16x128xf32>
    %21 = arith.mulf %16, %20 : vector<16x128xf32>
    %cst_9 = arith.constant 0.000000e+00 : f32
    %22 = vector.broadcast %cst_9 : f32 to vector<16x128xf32>
    %23 = arith.maximumf %21, %22 : vector<16x128xf32>
    %c0_10 = arith.constant 0 : index
    %c0_11 = arith.constant 0 : index
    %c0_12 = arith.constant 0 : index
    %24 = vector.load %arg4[%c0_10, %c0_11, %c0_12] : memref<1x16x128xf32, #tpu.memory_space<vmem>>, vector<1x16x128xf32>
    %25 = vector.shape_cast %24 : vector<1x16x128xf32> to vector<16x128xf32>
    %26 = vector.shape_cast %23 : vector<16x128xf32> to vector<1x16x128xf32>
    tpu.vector_store %arg4[%c0_10, %c0_11, %c0_12], %26 {strides = array<i32>} : memref<1x16x128xf32, #tpu.memory_space<vmem>>, vector<1x16x128xf32>,
    return
  }
  func.func @transform_0(%arg0: i32, %arg1: i32) -> (i32, i32, i32) {
    %c0_i32 = arith.constant 0 : i32
    %c0_i32_0 = arith.constant 0 : i32
    %c0_i32_1 = arith.constant 0 : i32
    return %arg0, %c0_i32, %c0_i32_0 : i32, i32, i32
  }
  func.func @transform_1(%arg0: i32, %arg1: i32) -> (i32, i32) {
    %c0_i32 = arith.constant 0 : i32
    %c0_i32_0 = arith.constant 0 : i32
    return %arg1, %c0_i32 : i32, i32
  }
  func.func @transform_2(%arg0: i32, %arg1: i32) -> (i32, i32, i32) {
    %c0_i32 = arith.constant 0 : i32
    %c0_i32_0 = arith.constant 0 : i32
    return %arg0, %arg1, %c0_i32 : i32, i32, i32
  }
}

module attributes {stable_mosaic.version = 11 : i64} {
  func.func @_meshconv_in_res_relu_kernel(%arg0: i32, %arg1: i32, %arg2: memref<1x160x128xbf16, #tpu.memory_space<vmem>>, %arg3: memref<16x160xbf16, #tpu.memory_space<vmem>>, %arg4: memref<1x16x128xf32, #tpu.memory_space<vmem>>, %arg5: memref<1x16x128xf32, #tpu.memory_space<vmem>>) attributes {dimension_semantics = [#tpu.dimension_semantics<parallel>, #tpu.dimension_semantics<parallel>], iteration_bounds = array<i64: 2, 2>, scalar_prefetch = 0 : i64, scratch_operands = 0 : i64, tpu.core_type = #tpu.core_type<tc>, window_params = [{transform_indices = @transform_0, window_bounds = array<i64: 1, 160, 128>}, {transform_indices = @transform_1, window_bounds = array<i64: 16, 160>}, {transform_indices = @transform_2, window_bounds = array<i64: 1, 16, 128>}, {transform_indices = @transform_3, window_bounds = array<i64: 1, 16, 128>}]} {
    %c0 = arith.constant 0 : index
    %c0_0 = arith.constant 0 : index
    %0 = vector.load %arg3[%c0, %c0_0] : memref<16x160xbf16, #tpu.memory_space<vmem>>, vector<16x160xbf16>
    %c0_1 = arith.constant 0 : index
    %c0_2 = arith.constant 0 : index
    %c0_3 = arith.constant 0 : index
    %1 = vector.load %arg2[%c0_1, %c0_2, %c0_3] : memref<1x160x128xbf16, #tpu.memory_space<vmem>>, vector<1x160x128xbf16>
    %2 = vector.shape_cast %1 : vector<1x160x128xbf16> to vector<160x128xbf16>
    %cst = arith.constant dense<0.000000e+00> : vector<16x128xf32>
    %3 = tpu.matmul %0, %2, %cst {dimension_numbers = #tpu.dot_dimension_numbers<[1], [0], [0], [1], [0, 0, 1, 1], [], []>} : vector<16x160xbf16>, vector<160x128xbf16>, vector<16x128xf32> -> vector<16x128xf32>
    %cst_4 = arith.constant dense<0.000000e+00> : vector<16xf32>
    %4 = vector.multi_reduction <add>, %3, %cst_4 [1] : vector<16x128xf32> to vector<16xf32>
    %5 = vector.shape_cast %4 : vector<16xf32> to vector<16x1xf32>
    %cst_5 = arith.constant 1.280000e+02 : f32
    %6 = vector.broadcast %cst_5 : f32 to vector<16x1xf32>
    %7 = arith.divf %5, %6 : vector<16x1xf32>
    %8 = arith.mulf %3, %3 : vector<16x128xf32>
    %cst_6 = arith.constant dense<0.000000e+00> : vector<16xf32>
    %9 = vector.multi_reduction <add>, %8, %cst_6 [1] : vector<16x128xf32> to vector<16xf32>
    %10 = vector.shape_cast %9 : vector<16xf32> to vector<16x1xf32>
    %cst_7 = arith.constant 1.280000e+02 : f32
    %11 = vector.broadcast %cst_7 : f32 to vector<16x1xf32>
    %12 = arith.divf %10, %11 : vector<16x1xf32>
    %13 = arith.mulf %7, %7 : vector<16x1xf32>
    %14 = arith.subf %12, %13 : vector<16x1xf32>
    %15 = vector.broadcast %7 : vector<16x1xf32> to vector<16x128xf32>
    %16 = arith.subf %3, %15 : vector<16x128xf32>
    %cst_8 = arith.constant 9.99999974E-6 : f32
    %17 = vector.broadcast %cst_8 : f32 to vector<16x1xf32>
    %18 = arith.addf %14, %17 : vector<16x1xf32>
    %19 = math.rsqrt %18 : vector<16x1xf32>
    %20 = vector.broadcast %19 : vector<16x1xf32> to vector<16x128xf32>
    %21 = arith.mulf %16, %20 : vector<16x128xf32>
    %c0_9 = arith.constant 0 : index
    %c0_10 = arith.constant 0 : index
    %c0_11 = arith.constant 0 : index
    %22 = vector.load %arg4[%c0_9, %c0_10, %c0_11] : memref<1x16x128xf32, #tpu.memory_space<vmem>>, vector<1x16x128xf32>
    %23 = vector.shape_cast %22 : vector<1x16x128xf32> to vector<16x128xf32>
    %24 = arith.addf %21, %23 : vector<16x128xf32>
    %cst_12 = arith.constant 0.000000e+00 : f32
    %25 = vector.broadcast %cst_12 : f32 to vector<16x128xf32>
    %26 = arith.maximumf %24, %25 : vector<16x128xf32>
    %c0_13 = arith.constant 0 : index
    %c0_14 = arith.constant 0 : index
    %c0_15 = arith.constant 0 : index
    %27 = vector.load %arg5[%c0_13, %c0_14, %c0_15] : memref<1x16x128xf32, #tpu.memory_space<vmem>>, vector<1x16x128xf32>
    %28 = vector.shape_cast %27 : vector<1x16x128xf32> to vector<16x128xf32>
    %29 = vector.shape_cast %26 : vector<16x128xf32> to vector<1x16x128xf32>
    tpu.vector_store %arg5[%c0_13, %c0_14, %c0_15], %29 {strides = array<i32>} : memref<1x16x128xf32, #tpu.memory_space<vmem>>, vector<1x16x128xf32>,
    return
  }
  func.func @transform_0(%arg0: i32, %arg1: i32) -> (i32, i32, i32) {
    %c0_i32 = arith.constant 0 : i32
    %c0_i32_0 = arith.constant 0 : i32
    %c0_i32_1 = arith.constant 0 : i32
    return %arg0, %c0_i32, %c0_i32_0 : i32, i32, i32
  }
  func.func @transform_1(%arg0: i32, %arg1: i32) -> (i32, i32) {
    %c0_i32 = arith.constant 0 : i32
    %c0_i32_0 = arith.constant 0 : i32
    return %arg1, %c0_i32 : i32, i32
  }
  func.func @transform_2(%arg0: i32, %arg1: i32) -> (i32, i32, i32) {
    %c0_i32 = arith.constant 0 : i32
    %c0_i32_0 = arith.constant 0 : i32
    return %arg0, %arg1, %c0_i32 : i32, i32, i32
  }
  func.func @transform_3(%arg0: i32, %arg1: i32) -> (i32, i32, i32) {
    %c0_i32 = arith.constant 0 : i32
    %c0_i32_0 = arith.constant 0 : i32
    return %arg0, %arg1, %c0_i32 : i32, i32, i32
  }
}

module attributes {stable_mosaic.version = 11 : i64} {
  func.func @_linear_in1d_kernel(%arg0: i32, %arg1: memref<2x4096xf32, #tpu.memory_space<vmem>>, %arg2: memref<4096x64xf32, #tpu.memory_space<vmem>>, %arg3: memref<1x64xf32, #tpu.memory_space<vmem>>, %arg4: memref<2x64xf32, #tpu.memory_space<vmem>>) attributes {dimension_semantics = [#tpu.dimension_semantics<arbitrary>], iteration_bounds = array<i64: 1>, scalar_prefetch = 0 : i64, scratch_operands = 0 : i64, tpu.core_type = #tpu.core_type<tc>, window_params = [{pipeline_mode = #tpu.pipeline_mode<synchronous>, transform_indices = @transform_0, window_bounds = array<i64: 2, 4096>}, {pipeline_mode = #tpu.pipeline_mode<synchronous>, transform_indices = @transform_1, window_bounds = array<i64: 4096, 64>}, {pipeline_mode = #tpu.pipeline_mode<synchronous>, transform_indices = @transform_2, window_bounds = array<i64: 1, 64>}, {pipeline_mode = #tpu.pipeline_mode<synchronous>, transform_indices = @transform_3, window_bounds = array<i64: 2, 64>}]} {
    %c0 = arith.constant 0 : index
    %c0_0 = arith.constant 0 : index
    %0 = vector.load %arg1[%c0, %c0_0] : memref<2x4096xf32, #tpu.memory_space<vmem>>, vector<2x4096xf32>
    %c0_1 = arith.constant 0 : index
    %c0_2 = arith.constant 0 : index
    %1 = vector.load %arg2[%c0_1, %c0_2] : memref<4096x64xf32, #tpu.memory_space<vmem>>, vector<4096x64xf32>
    %cst = arith.constant dense<0.000000e+00> : vector<2x64xf32>
    %2 = tpu.matmul %0, %1, %cst {dimension_numbers = #tpu.dot_dimension_numbers<[1], [0], [0], [1], [0, 0, 1, 1], [], []>} : vector<2x4096xf32>, vector<4096x64xf32>, vector<2x64xf32> -> vector<2x64xf32>
    %c0_3 = arith.constant 0 : index
    %c0_4 = arith.constant 0 : index
    %3 = vector.load %arg3[%c0_3, %c0_4] : memref<1x64xf32, #tpu.memory_space<vmem>>, vector<1x64xf32>
    %4 = vector.broadcast %3 : vector<1x64xf32> to vector<2x64xf32>
    %5 = arith.addf %2, %4 : vector<2x64xf32>
    %cst_5 = arith.constant dense<0.000000e+00> : vector<2xf32>
    %6 = vector.multi_reduction <add>, %5, %cst_5 [1] : vector<2x64xf32> to vector<2xf32>
    %7 = vector.shape_cast %6 : vector<2xf32> to vector<2x1xf32>
    %cst_6 = arith.constant 6.400000e+01 : f32
    %8 = vector.broadcast %cst_6 : f32 to vector<2x1xf32>
    %9 = arith.divf %7, %8 : vector<2x1xf32>
    %10 = arith.mulf %5, %5 : vector<2x64xf32>
    %cst_7 = arith.constant dense<0.000000e+00> : vector<2xf32>
    %11 = vector.multi_reduction <add>, %10, %cst_7 [1] : vector<2x64xf32> to vector<2xf32>
    %12 = vector.shape_cast %11 : vector<2xf32> to vector<2x1xf32>
    %cst_8 = arith.constant 6.400000e+01 : f32
    %13 = vector.broadcast %cst_8 : f32 to vector<2x1xf32>
    %14 = arith.divf %12, %13 : vector<2x1xf32>
    %15 = arith.mulf %9, %9 : vector<2x1xf32>
    %16 = arith.subf %14, %15 : vector<2x1xf32>
    %17 = vector.broadcast %9 : vector<2x1xf32> to vector<2x64xf32>
    %18 = arith.subf %5, %17 : vector<2x64xf32>
    %cst_9 = arith.constant 9.99999974E-6 : f32
    %19 = vector.broadcast %cst_9 : f32 to vector<2x1xf32>
    %20 = arith.addf %16, %19 : vector<2x1xf32>
    %21 = math.rsqrt %20 : vector<2x1xf32>
    %22 = vector.broadcast %21 : vector<2x1xf32> to vector<2x64xf32>
    %23 = arith.mulf %18, %22 : vector<2x64xf32>
    %cst_10 = arith.constant 0.000000e+00 : f32
    %24 = vector.broadcast %cst_10 : f32 to vector<2x64xf32>
    %25 = arith.maximumf %23, %24 : vector<2x64xf32>
    %c0_11 = arith.constant 0 : index
    %c0_12 = arith.constant 0 : index
    %26 = vector.load %arg4[%c0_11, %c0_12] : memref<2x64xf32, #tpu.memory_space<vmem>>, vector<2x64xf32>
    tpu.vector_store %arg4[%c0_11, %c0_12], %25 {strides = array<i32>} : memref<2x64xf32, #tpu.memory_space<vmem>>, vector<2x64xf32>,
    return
  }
  func.func @transform_0(%arg0: i32) -> (i32, i32) {
    %c0_i32 = arith.constant 0 : i32
    %c0_i32_0 = arith.constant 0 : i32
    %c0_i32_1 = arith.constant 0 : i32
    return %c0_i32, %c0_i32_0 : i32, i32
  }
  func.func @transform_1(%arg0: i32) -> (i32, i32) {
    %c0_i32 = arith.constant 0 : i32
    %c0_i32_0 = arith.constant 0 : i32
    %c0_i32_1 = arith.constant 0 : i32
    return %c0_i32, %c0_i32_0 : i32, i32
  }
  func.func @transform_2(%arg0: i32) -> (i32, i32) {
    %c0_i32 = arith.constant 0 : i32
    %c0_i32_0 = arith.constant 0 : i32
    %c0_i32_1 = arith.constant 0 : i32
    return %c0_i32, %c0_i32_0 : i32, i32
  }
  func.func @transform_3(%arg0: i32) -> (i32, i32) {
    %c0_i32 = arith.constant 0 : i32
    %c0_i32_0 = arith.constant 0 : i32
    %c0_i32_1 = arith.constant 0 : i32
    return %c0_i32, %c0_i32_0 : i32, i32
  }
}

module attributes {stable_mosaic.version = 11 : i64} {
  func.func @_linear_in1d_kernel(%arg0: i32, %arg1: memref<2x64xf32, #tpu.memory_space<vmem>>, %arg2: memref<64x32xf32, #tpu.memory_space<vmem>>, %arg3: memref<1x32xf32, #tpu.memory_space<vmem>>, %arg4: memref<2x32xf32, #tpu.memory_space<vmem>>) attributes {dimension_semantics = [#tpu.dimension_semantics<arbitrary>], iteration_bounds = array<i64: 1>, scalar_prefetch = 0 : i64, scratch_operands = 0 : i64, tpu.core_type = #tpu.core_type<tc>, window_params = [{pipeline_mode = #tpu.pipeline_mode<synchronous>, transform_indices = @transform_0, window_bounds = array<i64: 2, 64>}, {pipeline_mode = #tpu.pipeline_mode<synchronous>, transform_indices = @transform_1, window_bounds = array<i64: 64, 32>}, {pipeline_mode = #tpu.pipeline_mode<synchronous>, transform_indices = @transform_2, window_bounds = array<i64: 1, 32>}, {pipeline_mode = #tpu.pipeline_mode<synchronous>, transform_indices = @transform_3, window_bounds = array<i64: 2, 32>}]} {
    %c0 = arith.constant 0 : index
    %c0_0 = arith.constant 0 : index
    %0 = vector.load %arg1[%c0, %c0_0] : memref<2x64xf32, #tpu.memory_space<vmem>>, vector<2x64xf32>
    %c0_1 = arith.constant 0 : index
    %c0_2 = arith.constant 0 : index
    %1 = vector.load %arg2[%c0_1, %c0_2] : memref<64x32xf32, #tpu.memory_space<vmem>>, vector<64x32xf32>
    %cst = arith.constant dense<0.000000e+00> : vector<2x32xf32>
    %2 = tpu.matmul %0, %1, %cst {dimension_numbers = #tpu.dot_dimension_numbers<[1], [0], [0], [1], [0, 0, 1, 1], [], []>} : vector<2x64xf32>, vector<64x32xf32>, vector<2x32xf32> -> vector<2x32xf32>
    %c0_3 = arith.constant 0 : index
    %c0_4 = arith.constant 0 : index
    %3 = vector.load %arg3[%c0_3, %c0_4] : memref<1x32xf32, #tpu.memory_space<vmem>>, vector<1x32xf32>
    %4 = vector.broadcast %3 : vector<1x32xf32> to vector<2x32xf32>
    %5 = arith.addf %2, %4 : vector<2x32xf32>
    %cst_5 = arith.constant dense<0.000000e+00> : vector<2xf32>
    %6 = vector.multi_reduction <add>, %5, %cst_5 [1] : vector<2x32xf32> to vector<2xf32>
    %7 = vector.shape_cast %6 : vector<2xf32> to vector<2x1xf32>
    %cst_6 = arith.constant 3.200000e+01 : f32
    %8 = vector.broadcast %cst_6 : f32 to vector<2x1xf32>
    %9 = arith.divf %7, %8 : vector<2x1xf32>
    %10 = arith.mulf %5, %5 : vector<2x32xf32>
    %cst_7 = arith.constant dense<0.000000e+00> : vector<2xf32>
    %11 = vector.multi_reduction <add>, %10, %cst_7 [1] : vector<2x32xf32> to vector<2xf32>
    %12 = vector.shape_cast %11 : vector<2xf32> to vector<2x1xf32>
    %cst_8 = arith.constant 3.200000e+01 : f32
    %13 = vector.broadcast %cst_8 : f32 to vector<2x1xf32>
    %14 = arith.divf %12, %13 : vector<2x1xf32>
    %15 = arith.mulf %9, %9 : vector<2x1xf32>
    %16 = arith.subf %14, %15 : vector<2x1xf32>
    %17 = vector.broadcast %9 : vector<2x1xf32> to vector<2x32xf32>
    %18 = arith.subf %5, %17 : vector<2x32xf32>
    %cst_9 = arith.constant 9.99999974E-6 : f32
    %19 = vector.broadcast %cst_9 : f32 to vector<2x1xf32>
    %20 = arith.addf %16, %19 : vector<2x1xf32>
    %21 = math.rsqrt %20 : vector<2x1xf32>
    %22 = vector.broadcast %21 : vector<2x1xf32> to vector<2x32xf32>
    %23 = arith.mulf %18, %22 : vector<2x32xf32>
    %c0_10 = arith.constant 0 : index
    %c0_11 = arith.constant 0 : index
    %24 = vector.load %arg4[%c0_10, %c0_11] : memref<2x32xf32, #tpu.memory_space<vmem>>, vector<2x32xf32>
    tpu.vector_store %arg4[%c0_10, %c0_11], %23 {strides = array<i32>} : memref<2x32xf32, #tpu.memory_space<vmem>>, vector<2x32xf32>,
    return
  }
  func.func @transform_0(%arg0: i32) -> (i32, i32) {
    %c0_i32 = arith.constant 0 : i32
    %c0_i32_0 = arith.constant 0 : i32
    %c0_i32_1 = arith.constant 0 : i32
    return %c0_i32, %c0_i32_0 : i32, i32
  }
  func.func @transform_1(%arg0: i32) -> (i32, i32) {
    %c0_i32 = arith.constant 0 : i32
    %c0_i32_0 = arith.constant 0 : i32
    %c0_i32_1 = arith.constant 0 : i32
    return %c0_i32, %c0_i32_0 : i32, i32
  }
  func.func @transform_2(%arg0: i32) -> (i32, i32) {
    %c0_i32 = arith.constant 0 : i32
    %c0_i32_0 = arith.constant 0 : i32
    %c0_i32_1 = arith.constant 0 : i32
    return %c0_i32, %c0_i32_0 : i32, i32
  }
  func.func @transform_3(%arg0: i32) -> (i32, i32) {
    %c0_i32 = arith.constant 0 : i32
    %c0_i32_0 = arith.constant 0 : i32
    %c0_i32_1 = arith.constant 0 : i32
    return %c0_i32, %c0_i32_0 : i32, i32
  }
}

</mosaic_0001>

<llo_original>
// kernel: mesh_encoder_forward.6
$region0: #{mesh_encoder_forward.6}
  #allocation0 [shape = 'u32[]', space=smem, size = 0x4, offset = 0x4, fixed_abs, tag = 'smem constant byte address 0x4 - core index']
  #allocation1 [shape = 'u32[72,128]{1,0:T(1,128)}', space=vmem, size = 0x9000, scoped, tag = 'internal scratch']
  %s0 = inlined_call_operand.vmem [shape: bf16[2,25,256], index: 0, kind: input, shape index: {}]
  %s1 = inlined_call_operand.vmem [shape: bf16[16,25], index: 1, kind: input, shape index: {}]
  %s2 = inlined_call_operand.vmem [shape: f32[2,16,256], index: 2, kind: output, shape index: {}]
  %s3 = sld [smem:[#allocation0]]
  $region41: #{mesh_encoder_forward.6} parent=0
    _
  %s5 = ssub.s32 1, %s3
  %s6 = scalar_select 0, %s5, %s3
  loop: start=0, step=1, limit=4
  $region2: #{mesh_encoder_forward.6} parent=0 // loop_pre_header
    _
  $region3: #{mesh_encoder_forward.6} parent=0 // loop_header
    %s8 = sphi 0, %s12
    %p9 = scmp.ge.s32.totalorder %s8, 4
    %s15 = sphi 0, %s27
    %s16 = sphi 0, %s23
    %s17 = sphi 0, %s15
    %s18 = sphi 0, %s16
    %s19 = sphi 0, %s17
    %s20 = sphi 0, %s18
    %s30 = sphi 0, %s32
    %s33 = sphi 0, %s30
    %s34 = sphi 0, %s33
    %s50 = sphi 0, %s34
    %s56 = sphi 0, %s58
    %s59 = sphi 0, %s56
    %s60 = sphi 0, %s59
    %s76 = sphi 0, %s60
    %s84 = sphi 0, %s86
    %s87 = sphi 0, %s84
    %s88 = sphi 0, %s87
    %s104 = sphi 0, %s88
  $region4: #{mesh_encoder_forward.6} parent=0 // loop_header_branch
    %11 = sbr.rel (%p9) target = $region8
  $region5: #{mesh_encoder_forward.6} parent=0 // loop_body
    %s13 = ssub.s32 %s8, 1
    %s14 = ssub.s32 %s8, 2
    %s21 = sadd.s32 1, %s16
    %p22 = scmp.ge.s32.totalorder %s21, 1
    %s23 = scalar_select %p22, 0, %s21
    %s24 = sadd.s32 1, %s15
    %s25 = scalar_select %p22, %s24, %s15
    %p26 = scmp.ge.s32.totalorder %s25, 2
    %s27 = scalar_select %p26, 0, %s25
    %s28 = ssub.s32 %s15, %s27
    %p29 = scmp.eq.s32.totalorder %s28, 0
    %s31 = sadd.s32 %s30, 1
    %s32 = scalar_select %p29, %s30, %s31
    %p35 = pneg %p29
    %p36 = scmp.eq.s32.totalorder %s8, 1
    %p37 = por %p35, %p36
    %p38 = scmp.ne.s32.totalorder %s30, %s33
    %p39 = scmp.eq.s32.totalorder %s8, 0
    %p40 = por %p38, %p39
    %p41 = scmp.ne.s32.totalorder %s30, %s33
    %p42 = scmp.eq.s32.totalorder %s13, 1
    %p43 = por %p41, %p42
    %p44 = scmp.ne.s32.totalorder %s33, %s34
    %p45 = scmp.eq.s32.totalorder %s13, 0
    %p46 = por %p44, %p45
    %p47 = scmp.ne.s32.totalorder %s33, %s34
    %p48 = scmp.eq.s32.totalorder %s14, 1
    %p49 = por %p47, %p48
    %p51 = scmp.ne.s32.totalorder %s34, %s50
    %p52 = scmp.eq.s32.totalorder %s14, 0
    %p53 = por %p51, %p52
    %s54 = ssub.s32 %s16, %s23
    %p55 = scmp.eq.s32.totalorder %s54, 0
    %s57 = sadd.s32 %s56, 1
    %s58 = scalar_select %p55, %s56, %s57
    %p61 = pneg %p55
    %p62 = scmp.eq.s32.totalorder %s8, 1
    %p63 = por %p61, %p62
    %p64 = scmp.ne.s32.totalorder %s56, %s59
    %p65 = scmp.eq.s32.totalorder %s8, 0
    %p66 = por %p64, %p65
    %p67 = scmp.ne.s32.totalorder %s56, %s59
    %p68 = scmp.eq.s32.totalorder %s13, 1
    %p69 = por %p67, %p68
    %p70 = scmp.ne.s32.totalorder %s59, %s60
    %p71 = scmp.eq.s32.totalorder %s13, 0
    %p72 = por %p70, %p71
    %p73 = scmp.ne.s32.totalorder %s59, %s60
    %p74 = scmp.eq.s32.totalorder %s14, 1
    %p75 = por %p73, %p74
    %p77 = scmp.ne.s32.totalorder %s60, %s76
    %p78 = scmp.eq.s32.totalorder %s14, 0
    %p79 = por %p77, %p78
    %s80 = ssub.s32 %s15, %s27
    %s81 = ssub.s32 %s16, %s23
    %s82 = sor.u32 %s80, %s81
    %p83 = scmp.eq.s32.totalorder %s82, 0
    %s85 = sadd.s32 %s84, 1
    %s86 = scalar_select %p83, %s84, %s85
    %p89 = pneg %p83
    %p90 = scmp.eq.s32.totalorder %s8, 1
    %p91 = por %p89, %p90
    %p92 = scmp.ne.s32.totalorder %s84, %s87
    %p93 = scmp.eq.s32.totalorder %s8, 0
    %p94 = por %p92, %p93
    %p95 = scmp.ne.s32.totalorder %s84, %s87
    %p96 = scmp.eq.s32.totalorder %s13, 1
    %p97 = por %p95, %p96
    %p98 = scmp.ne.s32.totalorder %s87, %s88
    %p99 = scmp.eq.s32.totalorder %s13, 0
    %p100 = por %p98, %p99
    %p101 = scmp.ne.s32.totalorder %s87, %s88
    %p102 = scmp.eq.s32.totalorder %s14, 1
    %p103 = por %p101, %p102
    %p105 = scmp.ne.s32.totalorder %s88, %s104
    %p106 = scmp.eq.s32.totalorder %s14, 0
    %p107 = por %p105, %p106
    %p108 = scmp.le.s32.totalorder 1, %s8
    %p109 = scmp.lt.s32.totalorder %s8, 3
    %p110 = pnand %p108, %p109
    %p111 = pneg %p110
    // Predicated region
    $region9: #{mesh_encoder_forward.6} parent=5 // pred_check
      _
    $region10: #{mesh_encoder_forward.6} parent=5 // pred_check_branch
      %113 = sbr.rel (%p110) target = $region12
    $region11: #{mesh_encoder_forward.6} parent=5 // pred_region
      %s114 = ssub.s32 %s8, 1
      // Predicated region
      $region13: #{mesh_encoder_forward.6} parent=11 // pred_check
        %p115 = pneg %p72
      $region14: #{mesh_encoder_forward.6} parent=11 // pred_check_branch
        %117 = sbr.rel (%p115) target = $region16
      $region15: #{mesh_encoder_forward.6} parent=11 // pred_region
        %s118 = smul.u32 2, %s18
        %p119 = scmp.lt.s32.totalorder %s118, 1
        %s120 = scalar_select %p119, %s118, 1
        %s121 = smul.addr %s120, 4
        %s122 = scalar_lea.vmem %s1, %s121
        %s123 = smul.u32 2, %s18
      $region16: #{mesh_encoder_forward.6} parent=11 // pred_fallthru
        _
    $region12: #{mesh_encoder_forward.6} parent=5 // pred_fallthru
      _
    %p124 = scmp.lt.s32.totalorder %s8, 2
    // Predicated region
    $region17: #{mesh_encoder_forward.6} parent=5 // pred_check
      %p125 = pneg %p124
    $region18: #{mesh_encoder_forward.6} parent=5 // pred_check_branch
      %127 = sbr.rel (%p125) target = $region20
    $region19: #{mesh_encoder_forward.6} parent=5 // pred_region
      // Predicated region
      $region21: #{mesh_encoder_forward.6} parent=19 // pred_check
        %p128 = pneg %p40
      $region22: #{mesh_encoder_forward.6} parent=19 // pred_check_branch
        %130 = sbr.rel (%p128) target = $region24
      $region23: #{mesh_encoder_forward.6} parent=19 // pred_region
        %p131 = scmp.lt.s32.totalorder %s15, 1
        %s132 = scalar_select %p131, %s15, 1
        %s133 = smul.addr %s132, 8
        %s134 = smul.addr %s133, 4
        %s135 = scalar_lea.vmem %s0, %s134
      $region24: #{mesh_encoder_forward.6} parent=19 // pred_fallthru
        _
    $region20: #{mesh_encoder_forward.6} parent=5 // pred_fallthru
      _
    %p136 = scmp.le.s32.totalorder 1, %s8
    %p137 = scmp.lt.s32.totalorder %s8, 3
    %p138 = pnand %p136, %p137
    %p139 = pneg %p138
    // Predicated region
    $region25: #{mesh_encoder_forward.6} parent=5 // pred_check
      _
    $region26: #{mesh_encoder_forward.6} parent=5 // pred_check_branch
      %141 = sbr.rel (%p138) target = $region28
    $region27: #{mesh_encoder_forward.6} parent=5 // pred_region
      %s142 = ssub.s32 %s8, 1
      %p143 = scmp.lt.s32.totalorder %s17, 1
      %s144 = scalar_select %p143, %s17, 1
      %s145 = smul.addr %s144, 8
      %s146 = smul.addr %s145, 4
      %s147 = scalar_lea.vmem %s0, %s146
      %p148 = pneg %p46
      %p149 = pneg %p43
      %s150 = smul.u32 2, %s18
      %p151 = scmp.lt.s32.totalorder %s150, 1
      %s152 = scalar_select %p151, %s150, 1
      %s153 = smul.addr %s152, 4
      %s154 = scalar_lea.vmem %s1, %s153
      %p155 = pneg %p72
      %p156 = pneg %p69
      %p157 = pneg %p100
      %p158 = pneg %p97
      %s159 = smul.u32 2, %s18
      %p160 = scmp.lt.s32.totalorder %s17, 1
      %s161 = scalar_select %p160, %s17, 1
      %p162 = scmp.lt.s32.totalorder %s159, 1
      %s163 = scalar_select %p162, %s159, 1
      %s164 = smul.addr %s163, 2
      %s165 = smul.addr %s161, 4
      %s166 = sadd.s32 %s164, %s165
      %s167 = smul.addr %s166, 8
      %s168 = scalar_lea.vmem %s2, %s167
      %p169 = scmp.lt.s32.totalorder %s17, 1
      %s170 = scalar_select %p169, %s17, 1
      %s171 = smul.addr %s170, 8
      %s172 = smul.addr %s171, 4
      %s173 = scalar_lea.vmem %s0, %s172
      %s174 = smul.u32 2, %s18
      %p175 = scmp.lt.s32.totalorder %s174, 1
      %s176 = scalar_select %p175, %s174, 1
      %s177 = smul.addr %s176, 4
      %s178 = scalar_lea.vmem %s1, %s177
      %s179 = smul.u32 2, %s18
      %s180 = smul.u32 2, %s18
      %p181 = scmp.lt.s32.totalorder %s17, 1
      %s182 = scalar_select %p181, %s17, 1
      %p183 = scmp.lt.s32.totalorder %s180, 1
      %s184 = scalar_select %p183, %s180, 1
      %s185 = smul.addr %s184, 2
      %s186 = smul.addr %s182, 4
      %s187 = sadd.s32 %s185, %s186
      %s188 = smul.addr %s187, 8
      %s189 = scalar_lea.vmem %s2, %s188
      %s190 = smul.u32 2, %s18
      %v192 = vld [vmem:[%s178] sm:$0xf]
      %v193 = vld [vmem:[%s178 + $0x4] sm:$0xf]
      %v194 = vld [vmem:[%s173] sm:$0xff]
      %v195 = vld [vmem:[%s173 + $0x8] sm:$0xff]
      %v196 = vld [vmem:[%s173 + $0x10] sm:$0xff]
      %v197 = vld [vmem:[%s173 + $0x18] sm:$0x11]
      %v200 = vunpack.c.l.b16 %v192
      %v201 = vunpack.c.l.b16 %v193
      %v202 = vpack.c.b16 %v201, %v200
      %v207 = vunpack.c.l.b16 %v194
      %v208 = vunpack.c.h.b16 %v194
      %v209 = vunpack.c.l.b16 %v195
      %v210 = vunpack.c.h.b16 %v195
      %v211 = vunpack.c.l.b16 %v196
      %v212 = vunpack.c.h.b16 %v196
      %v213 = vunpack.c.l.b16 %v197
      %v214 = vunpack.c.h.b16 %v197
      %v215 = vpack.c.b16 %v209, %v207
      %v216 = vpack.c.b16 %v210, %v208
      %v217 = vpack.c.b16 %v213, %v211
      %v218 = vpack.c.b16 %v214, %v212
      %vm221 = vcmask 203776
      %v223 = vsel %vm221, %v202, 0
      %vm225 = vcmask 1043456
      %vm226 = vcmask 1044480
      %v227 = vsel %vm225, 4294967295, 65535
      %v228 = vsel %vm226, %v227, 0
      %v230 = vand.u32 %v217, %v228
      %v233 = vand.u32 %v218, %v228
      %235 = vmatpush.bf16.msra.mxu0 0
      %236 = vmatpush.bf16.msra.mxu0 0
      %237 = vmatpush.bf16.msra.mxu0 0
      %238 = vmatpush.bf16.msra.mxu0 0
      %239 = vmatpush.bf16.msra.mxu0 0
      %240 = vmatpush.bf16.msra.mxu0 0
      %241 = vmatpush.bf16.msra.mxu0 %v230
      %242 = vmatpush.bf16.msra.mxu0 %v215
      %243 = vmatmul.bf16.gmra.mxu0 %v223
      %v244 = vpop.f32.mrf.mxu0
      %v245 = vadd.f32 0.0, %v244
      %v246 = vpop.f32.mrf.mxu0
      %v247 = vadd.f32 0.0, %v246
      %248 = vdwg.mxu0
      %249 = vmatpush.bf16.msra.mxu0 0
      %250 = vmatpush.bf16.msra.mxu0 0
      %251 = vmatpush.bf16.msra.mxu0 0
      %252 = vmatpush.bf16.msra.mxu0 0
      %253 = vmatpush.bf16.msra.mxu0 0
      %254 = vmatpush.bf16.msra.mxu0 0
      %255 = vmatpush.bf16.msra.mxu0 %v233
      %256 = vmatpush.bf16.msra.mxu0 %v216
      %257 = vmatmul.bf16.gmra.mxu0 %v223
      %v258 = vpop.f32.mrf.mxu0
      %v259 = vadd.f32 0.0, %v258
      %v260 = vpop.f32.mrf.mxu0
      %v261 = vadd.f32 0.0, %v260
      %262 = vdwg.mxu0
      %v263 = vadd.f32 %v245, %v259
      %264 = vadd.xlane.f32.xlu0 %v263
      %v265 = vpop.xlane.xlu0 %264
      %v266 = vadd.f32 %v247, %v261
      %267 = vadd.xlane.f32.xlu0 %v266
      %v268 = vpop.xlane.xlu0 %267
      %v269 = vrcp.pop 256.0
      %v270 = vmul.f32 256.0, %v269
      %v271 = vsub.f32 1.0, %v270
      %v272 = vmul.f32 %v269, %v271
      %v273 = vadd.f32 %v269, %v272
      %vm274 = vweird.f32 %v269
      %v275 = vsel %vm274, %v269, %v273
      %v276 = vmul.f32 %v265, %v275
      %v277 = vmul.f32 %v268, %v275
      %v278 = vmul.f32 %v245, %v245
      %v279 = vmul.f32 %v259, %v259
      %v280 = vmul.f32 %v247, %v247
      %v281 = vmul.f32 %v261, %v261
      %v282 = vadd.f32 %v278, %v279
      %283 = vadd.xlane.f32.xlu0 %v282
      %v284 = vpop.xlane.xlu0 %283
      %v285 = vadd.f32 %v280, %v281
      %286 = vadd.xlane.f32.xlu0 %v285
      %v287 = vpop.xlane.xlu0 %286
      %v288 = vmul.f32 %v284, %v275
      %v289 = vmul.f32 %v287, %v275
      %v290 = vmul.f32 %v276, %v276
      %v291 = vmul.f32 %v277, %v277
      %v292 = vsub.f32 %v288, %v290
      %v293 = vsub.f32 %v289, %v291
      %v294 = vsub.f32 %v245, %v276
      %v295 = vsub.f32 %v259, %v276
      %v296 = vsub.f32 %v247, %v277
      %v297 = vsub.f32 %v261, %v277
      %v298 = vadd.f32 %v292, 1e-05
      %v299 = vadd.f32 %v293, 1e-05
      %v300 = vrsqrt.pop %v298
      %v301 = vmul.f32 %v300, %v298
      %v302 = vmul.f32 %v301, %v300
      %v303 = vmul.f32 0.5, %v302
      %v304 = vsub.f32 1.5, %v303
      %v305 = vmul.f32 %v300, %v304
      %vm306 = vweird.f32 %v298
      %vm307 = vweird.f32 %v300
      %vm308 = vmor %vm306, %vm307
      %v309 = vsel %vm308, %v300, %v305
      %v310 = vrsqrt.pop %v299
      %v311 = vmul.f32 %v310, %v299
      %v312 = vmul.f32 %v311, %v310
      %v313 = vmul.f32 0.5, %v312
      %v314 = vsub.f32 1.5, %v313
      %v315 = vmul.f32 %v310, %v314
      %vm316 = vweird.f32 %v299
      %vm317 = vweird.f32 %v310
      %vm318 = vmor %vm316, %vm317
      %v319 = vsel %vm318, %v310, %v315
      %v320 = vmul.f32 %v294, %v309
      %v321 = vmul.f32 %v295, %v309
      %v322 = vmul.f32 %v296, %v319
      %v323 = vmul.f32 %v297, %v319
      %v324 = vmax.f32 %v320, 0.0
      %v325 = vmax.f32 %v321, 0.0
      %v326 = vmax.f32 %v322, 0.0
      %v327 = vmax.f32 %v323, 0.0
      %328 = vst [vmem:[%s189] sm:$0xff] %v324
      %329 = vst [vmem:[%s189 + $0x8] sm:$0xff] %v325
      %330 = vst [vmem:[%s189 + $0x10] sm:$0xff] %v326
      %331 = vst [vmem:[%s189 + $0x18] sm:$0xff] %v327
      %s332 = smul.u32 2, %s18
      %p333 = scmp.lt.s32.totalorder %s17, 1
      %s334 = scalar_select %p333, %s17, 1
      %p335 = scmp.lt.s32.totalorder %s332, 1
      %s336 = scalar_select %p335, %s332, 1
      %s337 = smul.addr %s336, 2
      %s338 = smul.addr %s334, 4
      %s339 = sadd.s32 %s337, %s338
      %s340 = smul.addr %s339, 8
      %s341 = scalar_lea.vmem %s2, %s340
      // Predicated region
      $region29: #{mesh_encoder_forward.6} parent=27 // pred_check
        %p342 = pneg %p97
      $region30: #{mesh_encoder_forward.6} parent=27 // pred_check_branch
        %344 = sbr.rel (%p342) target = $region32
      $region31: #{mesh_encoder_forward.6} parent=27 // pred_region
        %s345 = smul.u32 2, %s18
      $region32: #{mesh_encoder_forward.6} parent=27 // pred_fallthru
        _
    $region28: #{mesh_encoder_forward.6} parent=5 // pred_fallthru
      _
    %p346 = scmp.le.s32.totalorder 2, %s8
    // Predicated region
    $region33: #{mesh_encoder_forward.6} parent=5 // pred_check
      %p347 = pneg %p346
    $region34: #{mesh_encoder_forward.6} parent=5 // pred_check_branch
      %349 = sbr.rel (%p347) target = $region36
    $region35: #{mesh_encoder_forward.6} parent=5 // pred_region
      %s350 = ssub.s32 %s8, 2
      // Predicated region
      $region37: #{mesh_encoder_forward.6} parent=35 // pred_check
        %p351 = pneg %p103
      $region38: #{mesh_encoder_forward.6} parent=35 // pred_check_branch
        %353 = sbr.rel (%p351) target = $region40
      $region39: #{mesh_encoder_forward.6} parent=35 // pred_region
        %s354 = smul.u32 2, %s20
        %p355 = scmp.lt.s32.totalorder %s19, 1
        %s356 = scalar_select %p355, %s19, 1
        %p357 = scmp.lt.s32.totalorder %s354, 1
        %s358 = scalar_select %p357, %s354, 1
        %s359 = smul.addr %s358, 2
        %s360 = smul.addr %s356, 4
        %s361 = sadd.s32 %s359, %s360
        %s362 = smul.addr %s361, 8
        %s363 = scalar_lea.vmem %s2, %s362
      $region40: #{mesh_encoder_forward.6} parent=35 // pred_fallthru
        _
    $region36: #{mesh_encoder_forward.6} parent=5 // pred_fallthru
      _
  $region6: #{mesh_encoder_forward.6} parent=0 // loop_footer
    %s12 = sadd.s32 1, %s8
  $region7: #{mesh_encoder_forward.6} parent=0 // loop_footer_branch
    %7 = sbr.rel target = $region3
  $region8: #{mesh_encoder_forward.6} parent=0 // loop_exit
    _

// kernel: mesh_encoder_forward.7
$region0: #{mesh_encoder_forward.7}
  #allocation0 [shape = 'u32[]', space=smem, size = 0x4, offset = 0x4, fixed_abs, tag = 'smem constant byte address 0x4 - core index']
  #allocation1 [shape = 'u32[72,128]{1,0:T(1,128)}', space=vmem, size = 0x9000, scoped, tag = 'internal scratch']
  %s0 = inlined_call_operand.vmem [shape: bf16[2,80,256], index: 0, kind: input, shape index: {}]
  %s1 = inlined_call_operand.vmem [shape: bf16[16,80], index: 1, kind: input, shape index: {}]
  %s2 = inlined_call_operand.vmem [shape: f32[2,16,256], index: 2, kind: input, shape index: {}]
  %s3 = inlined_call_operand.vmem [shape: f32[2,16,256], index: 3, kind: output, shape index: {}]
  %s4 = sld [smem:[#allocation0]]
  $region45: #{mesh_encoder_forward.7} parent=0
    _
  %s6 = ssub.s32 1, %s4
  %s7 = scalar_select 0, %s6, %s4
  loop: start=0, step=1, limit=4
  $region2: #{mesh_encoder_forward.7} parent=0 // loop_pre_header
    _
  $region3: #{mesh_encoder_forward.7} parent=0 // loop_header
    %s9 = sphi 0, %s13
    %p10 = scmp.ge.s32.totalorder %s9, 4
    %s16 = sphi 0, %s28
    %s17 = sphi 0, %s24
    %s18 = sphi 0, %s16
    %s19 = sphi 0, %s17
    %s20 = sphi 0, %s18
    %s21 = sphi 0, %s19
    %s31 = sphi 0, %s33
    %s34 = sphi 0, %s31
    %s35 = sphi 0, %s34
    %s51 = sphi 0, %s35
    %s57 = sphi 0, %s59
    %s60 = sphi 0, %s57
    %s61 = sphi 0, %s60
    %s77 = sphi 0, %s61
    %s85 = sphi 0, %s87
    %s88 = sphi 0, %s85
    %s89 = sphi 0, %s88
    %s105 = sphi 0, %s89
    %s113 = sphi 0, %s115
    %s116 = sphi 0, %s113
    %s117 = sphi 0, %s116
    %s133 = sphi 0, %s117
  $region4: #{mesh_encoder_forward.7} parent=0 // loop_header_branch
    %12 = sbr.rel (%p10) target = $region8
  $region5: #{mesh_encoder_forward.7} parent=0 // loop_body
    %s14 = ssub.s32 %s9, 1
    %s15 = ssub.s32 %s9, 2
    %s22 = sadd.s32 1, %s17
    %p23 = scmp.ge.s32.totalorder %s22, 1
    %s24 = scalar_select %p23, 0, %s22
    %s25 = sadd.s32 1, %s16
    %s26 = scalar_select %p23, %s25, %s16
    %p27 = scmp.ge.s32.totalorder %s26, 2
    %s28 = scalar_select %p27, 0, %s26
    %s29 = ssub.s32 %s16, %s28
    %p30 = scmp.eq.s32.totalorder %s29, 0
    %s32 = sadd.s32 %s31, 1
    %s33 = scalar_select %p30, %s31, %s32
    %p36 = pneg %p30
    %p37 = scmp.eq.s32.totalorder %s9, 1
    %p38 = por %p36, %p37
    %p39 = scmp.ne.s32.totalorder %s31, %s34
    %p40 = scmp.eq.s32.totalorder %s9, 0
    %p41 = por %p39, %p40
    %p42 = scmp.ne.s32.totalorder %s31, %s34
    %p43 = scmp.eq.s32.totalorder %s14, 1
    %p44 = por %p42, %p43
    %p45 = scmp.ne.s32.totalorder %s34, %s35
    %p46 = scmp.eq.s32.totalorder %s14, 0
    %p47 = por %p45, %p46
    %p48 = scmp.ne.s32.totalorder %s34, %s35
    %p49 = scmp.eq.s32.totalorder %s15, 1
    %p50 = por %p48, %p49
    %p52 = scmp.ne.s32.totalorder %s35, %s51
    %p53 = scmp.eq.s32.totalorder %s15, 0
    %p54 = por %p52, %p53
    %s55 = ssub.s32 %s17, %s24
    %p56 = scmp.eq.s32.totalorder %s55, 0
    %s58 = sadd.s32 %s57, 1
    %s59 = scalar_select %p56, %s57, %s58
    %p62 = pneg %p56
    %p63 = scmp.eq.s32.totalorder %s9, 1
    %p64 = por %p62, %p63
    %p65 = scmp.ne.s32.totalorder %s57, %s60
    %p66 = scmp.eq.s32.totalorder %s9, 0
    %p67 = por %p65, %p66
    %p68 = scmp.ne.s32.totalorder %s57, %s60
    %p69 = scmp.eq.s32.totalorder %s14, 1
    %p70 = por %p68, %p69
    %p71 = scmp.ne.s32.totalorder %s60, %s61
    %p72 = scmp.eq.s32.totalorder %s14, 0
    %p73 = por %p71, %p72
    %p74 = scmp.ne.s32.totalorder %s60, %s61
    %p75 = scmp.eq.s32.totalorder %s15, 1
    %p76 = por %p74, %p75
    %p78 = scmp.ne.s32.totalorder %s61, %s77
    %p79 = scmp.eq.s32.totalorder %s15, 0
    %p80 = por %p78, %p79
    %s81 = ssub.s32 %s16, %s28
    %s82 = ssub.s32 %s17, %s24
    %s83 = sor.u32 %s81, %s82
    %p84 = scmp.eq.s32.totalorder %s83, 0
    %s86 = sadd.s32 %s85, 1
    %s87 = scalar_select %p84, %s85, %s86
    %p90 = pneg %p84
    %p91 = scmp.eq.s32.totalorder %s9, 1
    %p92 = por %p90, %p91
    %p93 = scmp.ne.s32.totalorder %s85, %s88
    %p94 = scmp.eq.s32.totalorder %s9, 0
    %p95 = por %p93, %p94
    %p96 = scmp.ne.s32.totalorder %s85, %s88
    %p97 = scmp.eq.s32.totalorder %s14, 1
    %p98 = por %p96, %p97
    %p99 = scmp.ne.s32.totalorder %s88, %s89
    %p100 = scmp.eq.s32.totalorder %s14, 0
    %p101 = por %p99, %p100
    %p102 = scmp.ne.s32.totalorder %s88, %s89
    %p103 = scmp.eq.s32.totalorder %s15, 1
    %p104 = por %p102, %p103
    %p106 = scmp.ne.s32.totalorder %s89, %s105
    %p107 = scmp.eq.s32.totalorder %s15, 0
    %p108 = por %p106, %p107
    %s109 = ssub.s32 %s16, %s28
    %s110 = ssub.s32 %s17, %s24
    %s111 = sor.u32 %s109, %s110
    %p112 = scmp.eq.s32.totalorder %s111, 0
    %s114 = sadd.s32 %s113, 1
    %s115 = scalar_select %p112, %s113, %s114
    %p118 = pneg %p112
    %p119 = scmp.eq.s32.totalorder %s9, 1
    %p120 = por %p118, %p119
    %p121 = scmp.ne.s32.totalorder %s113, %s116
    %p122 = scmp.eq.s32.totalorder %s9, 0
    %p123 = por %p121, %p122
    %p124 = scmp.ne.s32.totalorder %s113, %s116
    %p125 = scmp.eq.s32.totalorder %s14, 1
    %p126 = por %p124, %p125
    %p127 = scmp.ne.s32.totalorder %s116, %s117
    %p128 = scmp.eq.s32.totalorder %s14, 0
    %p129 = por %p127, %p128
    %p130 = scmp.ne.s32.totalorder %s116, %s117
    %p131 = scmp.eq.s32.totalorder %s15, 1
    %p132 = por %p130, %p131
    %p134 = scmp.ne.s32.totalorder %s117, %s133
    %p135 = scmp.eq.s32.totalorder %s15, 0
    %p136 = por %p134, %p135
    %p137 = scmp.le.s32.totalorder 1, %s9
    %p138 = scmp.lt.s32.totalorder %s9, 3
    %p139 = pnand %p137, %p138
    %p140 = pneg %p139
    // Predicated region
    $region9: #{mesh_encoder_forward.7} parent=5 // pred_check
      _
    $region10: #{mesh_encoder_forward.7} parent=5 // pred_check_branch
      %142 = sbr.rel (%p139) target = $region12
    $region11: #{mesh_encoder_forward.7} parent=5 // pred_region
      %s143 = ssub.s32 %s9, 1
      // Predicated region
      $region13: #{mesh_encoder_forward.7} parent=11 // pred_check
        %p144 = pneg %p73
      $region14: #{mesh_encoder_forward.7} parent=11 // pred_check_branch
        %146 = sbr.rel (%p144) target = $region16
      $region15: #{mesh_encoder_forward.7} parent=11 // pred_region
        %s147 = smul.u32 2, %s19
        %p148 = scmp.lt.s32.totalorder %s147, 1
        %s149 = scalar_select %p148, %s147, 1
        %s150 = smul.addr %s149, 4
        %s151 = scalar_lea.vmem %s1, %s150
        %s152 = smul.u32 2, %s19
      $region16: #{mesh_encoder_forward.7} parent=11 // pred_fallthru
        _
    $region12: #{mesh_encoder_forward.7} parent=5 // pred_fallthru
      _
    %p153 = scmp.lt.s32.totalorder %s9, 2
    // Predicated region
    $region17: #{mesh_encoder_forward.7} parent=5 // pred_check
      %p154 = pneg %p153
    $region18: #{mesh_encoder_forward.7} parent=5 // pred_check_branch
      %156 = sbr.rel (%p154) target = $region20
    $region19: #{mesh_encoder_forward.7} parent=5 // pred_region
      // Predicated region
      $region21: #{mesh_encoder_forward.7} parent=19 // pred_check
        %p157 = pneg %p41
      $region22: #{mesh_encoder_forward.7} parent=19 // pred_check_branch
        %159 = sbr.rel (%p157) target = $region24
      $region23: #{mesh_encoder_forward.7} parent=19 // pred_region
        %p160 = scmp.lt.s32.totalorder %s16, 1
        %s161 = scalar_select %p160, %s16, 1
        %s162 = smul.addr %s161, 20
        %s163 = smul.addr %s162, 4
        %s164 = scalar_lea.vmem %s0, %s163
      $region24: #{mesh_encoder_forward.7} parent=19 // pred_fallthru
        _
      // Predicated region
      $region25: #{mesh_encoder_forward.7} parent=19 // pred_check
        %p165 = pneg %p95
      $region26: #{mesh_encoder_forward.7} parent=19 // pred_check_branch
        %167 = sbr.rel (%p165) target = $region28
      $region27: #{mesh_encoder_forward.7} parent=19 // pred_region
        %s168 = smul.u32 2, %s17
        %p169 = scmp.lt.s32.totalorder %s16, 1
        %s170 = scalar_select %p169, %s16, 1
        %p171 = scmp.lt.s32.totalorder %s168, 1
        %s172 = scalar_select %p171, %s168, 1
        %s173 = smul.addr %s172, 2
        %s174 = smul.addr %s170, 4
        %s175 = sadd.s32 %s173, %s174
        %s176 = smul.addr %s175, 8
        %s177 = scalar_lea.vmem %s2, %s176
        %s178 = smul.u32 2, %s17
      $region28: #{mesh_encoder_forward.7} parent=19 // pred_fallthru
        _
    $region20: #{mesh_encoder_forward.7} parent=5 // pred_fallthru
      _
    %p179 = scmp.le.s32.totalorder 1, %s9
    %p180 = scmp.lt.s32.totalorder %s9, 3
    %p181 = pnand %p179, %p180
    %p182 = pneg %p181
    // Predicated region
    $region29: #{mesh_encoder_forward.7} parent=5 // pred_check
      _
    $region30: #{mesh_encoder_forward.7} parent=5 // pred_check_branch
      %184 = sbr.rel (%p181) target = $region32
    $region31: #{mesh_encoder_forward.7} parent=5 // pred_region
      %s185 = ssub.s32 %s9, 1
      %p186 = scmp.lt.s32.totalorder %s18, 1
      %s187 = scalar_select %p186, %s18, 1
      %s188 = smul.addr %s187, 20
      %s189 = smul.addr %s188, 4
      %s190 = scalar_lea.vmem %s0, %s189
      %p191 = pneg %p47
      %p192 = pneg %p44
      %s193 = smul.u32 2, %s19
      %p194 = scmp.lt.s32.totalorder %s193, 1
      %s195 = scalar_select %p194, %s193, 1
      %s196 = smul.addr %s195, 4
      %s197 = scalar_lea.vmem %s1, %s196
      %p198 = pneg %p73
      %p199 = pneg %p70
      %s200 = smul.u32 2, %s19
      %p201 = scmp.lt.s32.totalorder %s18, 1
      %s202 = scalar_select %p201, %s18, 1
      %p203 = scmp.lt.s32.totalorder %s200, 1
      %s204 = scalar_select %p203, %s200, 1
      %s205 = smul.addr %s204, 2
      %s206 = smul.addr %s202, 4
      %s207 = sadd.s32 %s205, %s206
      %s208 = smul.addr %s207, 8
      %s209 = scalar_lea.vmem %s2, %s208
      %p210 = pneg %p101
      %p211 = pneg %p98
      %p212 = pneg %p129
      %p213 = pneg %p126
      %s214 = smul.u32 2, %s19
      %p215 = scmp.lt.s32.totalorder %s18, 1
      %s216 = scalar_select %p215, %s18, 1
      %p217 = scmp.lt.s32.totalorder %s214, 1
      %s218 = scalar_select %p217, %s214, 1
      %s219 = smul.addr %s218, 2
      %s220 = smul.addr %s216, 4
      %s221 = sadd.s32 %s219, %s220
      %s222 = smul.addr %s221, 8
      %s223 = scalar_lea.vmem %s3, %s222
      %p224 = scmp.lt.s32.totalorder %s18, 1
      %s225 = scalar_select %p224, %s18, 1
      %s226 = smul.addr %s225, 20
      %s227 = smul.addr %s226, 4
      %s228 = scalar_lea.vmem %s0, %s227
      %s229 = smul.u32 2, %s19
      %p230 = scmp.lt.s32.totalorder %s229, 1
      %s231 = scalar_select %p230, %s229, 1
      %s232 = smul.addr %s231, 4
      %s233 = scalar_lea.vmem %s1, %s232
      %s234 = smul.u32 2, %s19
      %s235 = smul.u32 2, %s19
      %p236 = scmp.lt.s32.totalorder %s18, 1
      %s237 = scalar_select %p236, %s18, 1
      %p238 = scmp.lt.s32.totalorder %s235, 1
      %s239 = scalar_select %p238, %s235, 1
      %s240 = smul.addr %s239, 2
      %s241 = smul.addr %s237, 4
      %s242 = sadd.s32 %s240, %s241
      %s243 = smul.addr %s242, 8
      %s244 = scalar_lea.vmem %s2, %s243
      %s245 = smul.u32 2, %s19
      %s246 = smul.u32 2, %s19
      %p247 = scmp.lt.s32.totalorder %s18, 1
      %s248 = scalar_select %p247, %s18, 1
      %p249 = scmp.lt.s32.totalorder %s246, 1
      %s250 = scalar_select %p249, %s246, 1
      %s251 = smul.addr %s250, 2
      %s252 = smul.addr %s248, 4
      %s253 = sadd.s32 %s251, %s252
      %s254 = smul.addr %s253, 8
      %s255 = scalar_lea.vmem %s3, %s254
      %s256 = smul.u32 2, %s19
      %v258 = vld [vmem:[%s233] sm:$0xf]
      %v259 = vld [vmem:[%s233 + $0x4] sm:$0xf]
      %v260 = vld [vmem:[%s228] sm:$0xff]
      %v261 = vld [vmem:[%s228 + $0x8] sm:$0xff]
      %v262 = vld [vmem:[%s228 + $0x10] sm:$0xff]
      %v263 = vld [vmem:[%s228 + $0x18] sm:$0xff]
      %v264 = vld [vmem:[%s228 + $0x20] sm:$0xff]
      %v265 = vld [vmem:[%s228 + $0x28] sm:$0xff]
      %v266 = vld [vmem:[%s228 + $0x30] sm:$0xff]
      %v267 = vld [vmem:[%s228 + $0x38] sm:$0xff]
      %v268 = vld [vmem:[%s228 + $0x40] sm:$0xff]
      %v269 = vld [vmem:[%s228 + $0x48] sm:$0xff]
      %v272 = vunpack.c.l.b16 %v258
      %v273 = vunpack.c.l.b16 %v259
      %v274 = vpack.c.b16 %v273, %v272
      %v285 = vunpack.c.l.b16 %v260
      %v286 = vunpack.c.h.b16 %v260
      %v287 = vunpack.c.l.b16 %v261
      %v288 = vunpack.c.h.b16 %v261
      %v289 = vunpack.c.l.b16 %v262
      %v290 = vunpack.c.h.b16 %v262
      %v291 = vunpack.c.l.b16 %v263
      %v292 = vunpack.c.h.b16 %v263
      %v293 = vunpack.c.l.b16 %v264
      %v294 = vunpack.c.h.b16 %v264
      %v295 = vunpack.c.l.b16 %v265
      %v296 = vunpack.c.h.b16 %v265
      %v297 = vunpack.c.l.b16 %v266
      %v298 = vunpack.c.h.b16 %v266
      %v299 = vunpack.c.l.b16 %v267
      %v300 = vunpack.c.h.b16 %v267
      %v301 = vunpack.c.l.b16 %v268
      %v302 = vunpack.c.h.b16 %v268
      %v303 = vunpack.c.l.b16 %v269
      %v304 = vunpack.c.h.b16 %v269
      %v305 = vpack.c.b16 %v287, %v285
      %v306 = vpack.c.b16 %v288, %v286
      %v307 = vpack.c.b16 %v291, %v289
      %v308 = vpack.c.b16 %v292, %v290
      %v309 = vpack.c.b16 %v295, %v293
      %v310 = vpack.c.b16 %v296, %v294
      %v311 = vpack.c.b16 %v299, %v297
      %v312 = vpack.c.b16 %v300, %v298
      %v313 = vpack.c.b16 %v303, %v301
      %v314 = vpack.c.b16 %v304, %v302
      %vm325 = vcmask 654336
      %v327 = vsel %vm325, %v274, 0
      %329 = vmatpush.bf16.msra.mxu0 0
      %330 = vmatpush.bf16.msra.mxu0 0
      %331 = vmatpush.bf16.msra.mxu0 0
      %332 = vmatpush.bf16.msra.mxu0 %v313
      %333 = vmatpush.bf16.msra.mxu0 %v311
      %334 = vmatpush.bf16.msra.mxu0 %v309
      %335 = vmatpush.bf16.msra.mxu0 %v307
      %336 = vmatpush.bf16.msra.mxu0 %v305
      %337 = vmatmul.bf16.gmra.mxu0 %v327
      %v338 = vpop.f32.mrf.mxu0
      %v339 = vadd.f32 0.0, %v338
      %v340 = vpop.f32.mrf.mxu0
      %v341 = vadd.f32 0.0, %v340
      %342 = vdwg.mxu0
      %343 = vmatpush.bf16.msra.mxu0 0
      %344 = vmatpush.bf16.msra.mxu0 0
      %345 = vmatpush.bf16.msra.mxu0 0
      %346 = vmatpush.bf16.msra.mxu0 %v314
      %347 = vmatpush.bf16.msra.mxu0 %v312
      %348 = vmatpush.bf16.msra.mxu0 %v310
      %349 = vmatpush.bf16.msra.mxu0 %v308
      %350 = vmatpush.bf16.msra.mxu0 %v306
      %351 = vmatmul.bf16.gmra.mxu0 %v327
      %v352 = vpop.f32.mrf.mxu0
      %v353 = vadd.f32 0.0, %v352
      %v354 = vpop.f32.mrf.mxu0
      %v355 = vadd.f32 0.0, %v354
      %356 = vdwg.mxu0
      %v357 = vadd.f32 %v339, %v353
      %358 = vadd.xlane.f32.xlu0 %v357
      %v359 = vpop.xlane.xlu0 %358
      %v360 = vadd.f32 %v341, %v355
      %361 = vadd.xlane.f32.xlu0 %v360
      %v362 = vpop.xlane.xlu0 %361
      %v363 = vrcp.pop 256.0
      %v364 = vmul.f32 256.0, %v363
      %v365 = vsub.f32 1.0, %v364
      %v366 = vmul.f32 %v363, %v365
      %v367 = vadd.f32 %v363, %v366
      %vm368 = vweird.f32 %v363
      %v369 = vsel %vm368, %v363, %v367
      %v370 = vmul.f32 %v359, %v369
      %v371 = vmul.f32 %v362, %v369
      %v372 = vmul.f32 %v339, %v339
      %v373 = vmul.f32 %v353, %v353
      %v374 = vmul.f32 %v341, %v341
      %v375 = vmul.f32 %v355, %v355
      %v376 = vadd.f32 %v372, %v373
      %377 = vadd.xlane.f32.xlu0 %v376
      %v378 = vpop.xlane.xlu0 %377
      %v379 = vadd.f32 %v374, %v375
      %380 = vadd.xlane.f32.xlu0 %v379
      %v381 = vpop.xlane.xlu0 %380
      %v382 = vmul.f32 %v378, %v369
      %v383 = vmul.f32 %v381, %v369
      %v384 = vmul.f32 %v370, %v370
      %v385 = vmul.f32 %v371, %v371
      %v386 = vsub.f32 %v382, %v384
      %v387 = vsub.f32 %v383, %v385
      %v388 = vsub.f32 %v339, %v370
      %v389 = vsub.f32 %v353, %v370
      %v390 = vsub.f32 %v341, %v371
      %v391 = vsub.f32 %v355, %v371
      %v392 = vadd.f32 %v386, 1e-05
      %v393 = vadd.f32 %v387, 1e-05
      %v394 = vrsqrt.pop %v392
      %v395 = vmul.f32 %v394, %v392
      %v396 = vmul.f32 %v395, %v394
      %v397 = vmul.f32 0.5, %v396
      %v398 = vsub.f32 1.5, %v397
      %v399 = vmul.f32 %v394, %v398
      %vm400 = vweird.f32 %v392
      %vm401 = vweird.f32 %v394
      %vm402 = vmor %vm400, %vm401
      %v403 = vsel %vm402, %v394, %v399
      %v404 = vrsqrt.pop %v393
      %v405 = vmul.f32 %v404, %v393
      %v406 = vmul.f32 %v405, %v404
      %v407 = vmul.f32 0.5, %v406
      %v408 = vsub.f32 1.5, %v407
      %v409 = vmul.f32 %v404, %v408
      %vm410 = vweird.f32 %v393
      %vm411 = vweird.f32 %v404
      %vm412 = vmor %vm410, %vm411
      %v413 = vsel %vm412, %v404, %v409
      %v414 = vmul.f32 %v388, %v403
      %v415 = vmul.f32 %v389, %v403
      %v416 = vmul.f32 %v390, %v413
      %v417 = vmul.f32 %v391, %v413
      %v418 = vld [vmem:[%s244] sm:$0xff]
      %v419 = vld [vmem:[%s244 + $0x8] sm:$0xff]
      %v420 = vld [vmem:[%s244 + $0x10] sm:$0xff]
      %v421 = vld [vmem:[%s244 + $0x18] sm:$0xff]
      %v422 = vadd.f32 %v414, %v418
      %v423 = vadd.f32 %v415, %v419
      %v424 = vadd.f32 %v416, %v420
      %v425 = vadd.f32 %v417, %v421
      %v426 = vmax.f32 %v422, 0.0
      %v427 = vmax.f32 %v423, 0.0
      %v428 = vmax.f32 %v424, 0.0
      %v429 = vmax.f32 %v425, 0.0
      %430 = vst [vmem:[%s255] sm:$0xff] %v426
      %431 = vst [vmem:[%s255 + $0x8] sm:$0xff] %v427
      %432 = vst [vmem:[%s255 + $0x10] sm:$0xff] %v428
      %433 = vst [vmem:[%s255 + $0x18] sm:$0xff] %v429
      %s434 = smul.u32 2, %s19
      %p435 = scmp.lt.s32.totalorder %s18, 1
      %s436 = scalar_select %p435, %s18, 1
      %p437 = scmp.lt.s32.totalorder %s434, 1
      %s438 = scalar_select %p437, %s434, 1
      %s439 = smul.addr %s438, 2
      %s440 = smul.addr %s436, 4
      %s441 = sadd.s32 %s439, %s440
      %s442 = smul.addr %s441, 8
      %s443 = scalar_lea.vmem %s3, %s442
      // Predicated region
      $region33: #{mesh_encoder_forward.7} parent=31 // pred_check
        %p444 = pneg %p126
      $region34: #{mesh_encoder_forward.7} parent=31 // pred_check_branch
        %446 = sbr.rel (%p444) target = $region36
      $region35: #{mesh_encoder_forward.7} parent=31 // pred_region
        %s447 = smul.u32 2, %s19
      $region36: #{mesh_encoder_forward.7} parent=31 // pred_fallthru
        _
    $region32: #{mesh_encoder_forward.7} parent=5 // pred_fallthru
      _
    %p448 = scmp.le.s32.totalorder 2, %s9
    // Predicated region
    $region37: #{mesh_encoder_forward.7} parent=5 // pred_check
      %p449 = pneg %p448
    $region38: #{mesh_encoder_forward.7} parent=5 // pred_check_branch
      %451 = sbr.rel (%p449) target = $region40
    $region39: #{mesh_encoder_forward.7} parent=5 // pred_region
      %s452 = ssub.s32 %s9, 2
      // Predicated region
      $region41: #{mesh_encoder_forward.7} parent=39 // pred_check
        %p453 = pneg %p132
      $region42: #{mesh_encoder_forward.7} parent=39 // pred_check_branch
        %455 = sbr.rel (%p453) target = $region44
      $region43: #{mesh_encoder_forward.7} parent=39 // pred_region
        %s456 = smul.u32 2, %s21
        %p457 = scmp.lt.s32.totalorder %s20, 1
        %s458 = scalar_select %p457, %s20, 1
        %p459 = scmp.lt.s32.totalorder %s456, 1
        %s460 = scalar_select %p459, %s456, 1
        %s461 = smul.addr %s460, 2
        %s462 = smul.addr %s458, 4
        %s463 = sadd.s32 %s461, %s462
        %s464 = smul.addr %s463, 8
        %s465 = scalar_lea.vmem %s3, %s464
      $region44: #{mesh_encoder_forward.7} parent=39 // pred_fallthru
        _
    $region40: #{mesh_encoder_forward.7} parent=5 // pred_fallthru
      _
  $region6: #{mesh_encoder_forward.7} parent=0 // loop_footer
    %s13 = sadd.s32 1, %s9
  $region7: #{mesh_encoder_forward.7} parent=0 // loop_footer_branch
    %8 = sbr.rel target = $region3
  $region8: #{mesh_encoder_forward.7} parent=0 // loop_exit
    _

// kernel: mesh_encoder_forward.8
$region0: #{mesh_encoder_forward.8}
  #allocation0 [shape = 'u32[]', space=smem, size = 0x4, offset = 0x4, fixed_abs, tag = 'smem constant byte address 0x4 - core index']
  #allocation1 [shape = 'u32[72,128]{1,0:T(1,128)}', space=vmem, size = 0x9000, scoped, tag = 'internal scratch']
  %s0 = inlined_call_operand.vmem [shape: bf16[2,80,128], index: 0, kind: input, shape index: {}]
  %s1 = inlined_call_operand.vmem [shape: bf16[32,80], index: 1, kind: input, shape index: {}]
  %s2 = inlined_call_operand.vmem [shape: f32[2,32,128], index: 2, kind: output, shape index: {}]
  %s3 = sld [smem:[#allocation0]]
  $region41: #{mesh_encoder_forward.8} parent=0
    _
  %s5 = ssub.s32 1, %s3
  %s6 = scalar_select 0, %s5, %s3
  loop: start=0, step=1, limit=6
  $region2: #{mesh_encoder_forward.8} parent=0 // loop_pre_header
    _
  $region3: #{mesh_encoder_forward.8} parent=0 // loop_header
    %s8 = sphi 0, %s12
    %p9 = scmp.ge.s32.totalorder %s8, 6
    %s15 = sphi 0, %s27
    %s16 = sphi 0, %s23
    %s17 = sphi 0, %s15
    %s18 = sphi 0, %s16
    %s19 = sphi 0, %s17
    %s20 = sphi 0, %s18
    %s30 = sphi 0, %s32
    %s33 = sphi 0, %s30
    %s34 = sphi 0, %s33
    %s50 = sphi 0, %s34
    %s56 = sphi 0, %s58
    %s59 = sphi 0, %s56
    %s60 = sphi 0, %s59
    %s76 = sphi 0, %s60
    %s84 = sphi 0, %s86
    %s87 = sphi 0, %s84
    %s88 = sphi 0, %s87
    %s104 = sphi 0, %s88
  $region4: #{mesh_encoder_forward.8} parent=0 // loop_header_branch
    %11 = sbr.rel (%p9) target = $region8
  $region5: #{mesh_encoder_forward.8} parent=0 // loop_body
    %s13 = ssub.s32 %s8, 1
    %s14 = ssub.s32 %s8, 2
    %s21 = sadd.s32 1, %s16
    %p22 = scmp.ge.s32.totalorder %s21, 2
    %s23 = scalar_select %p22, 0, %s21
    %s24 = sadd.s32 1, %s15
    %s25 = scalar_select %p22, %s24, %s15
    %p26 = scmp.ge.s32.totalorder %s25, 2
    %s27 = scalar_select %p26, 0, %s25
    %s28 = ssub.s32 %s15, %s27
    %p29 = scmp.eq.s32.totalorder %s28, 0
    %s31 = sadd.s32 %s30, 1
    %s32 = scalar_select %p29, %s30, %s31
    %p35 = pneg %p29
    %p36 = scmp.eq.s32.totalorder %s8, 3
    %p37 = por %p35, %p36
    %p38 = scmp.ne.s32.totalorder %s30, %s33
    %p39 = scmp.eq.s32.totalorder %s8, 0
    %p40 = por %p38, %p39
    %p41 = scmp.ne.s32.totalorder %s30, %s33
    %p42 = scmp.eq.s32.totalorder %s13, 3
    %p43 = por %p41, %p42
    %p44 = scmp.ne.s32.totalorder %s33, %s34
    %p45 = scmp.eq.s32.totalorder %s13, 0
    %p46 = por %p44, %p45
    %p47 = scmp.ne.s32.totalorder %s33, %s34
    %p48 = scmp.eq.s32.totalorder %s14, 3
    %p49 = por %p47, %p48
    %p51 = scmp.ne.s32.totalorder %s34, %s50
    %p52 = scmp.eq.s32.totalorder %s14, 0
    %p53 = por %p51, %p52
    %s54 = ssub.s32 %s16, %s23
    %p55 = scmp.eq.s32.totalorder %s54, 0
    %s57 = sadd.s32 %s56, 1
    %s58 = scalar_select %p55, %s56, %s57
    %p61 = pneg %p55
    %p62 = scmp.eq.s32.totalorder %s8, 3
    %p63 = por %p61, %p62
    %p64 = scmp.ne.s32.totalorder %s56, %s59
    %p65 = scmp.eq.s32.totalorder %s8, 0
    %p66 = por %p64, %p65
    %p67 = scmp.ne.s32.totalorder %s56, %s59
    %p68 = scmp.eq.s32.totalorder %s13, 3
    %p69 = por %p67, %p68
    %p70 = scmp.ne.s32.totalorder %s59, %s60
    %p71 = scmp.eq.s32.totalorder %s13, 0
    %p72 = por %p70, %p71
    %p73 = scmp.ne.s32.totalorder %s59, %s60
    %p74 = scmp.eq.s32.totalorder %s14, 3
    %p75 = por %p73, %p74
    %p77 = scmp.ne.s32.totalorder %s60, %s76
    %p78 = scmp.eq.s32.totalorder %s14, 0
    %p79 = por %p77, %p78
    %s80 = ssub.s32 %s15, %s27
    %s81 = ssub.s32 %s16, %s23
    %s82 = sor.u32 %s80, %s81
    %p83 = scmp.eq.s32.totalorder %s82, 0
    %s85 = sadd.s32 %s84, 1
    %s86 = scalar_select %p83, %s84, %s85
    %p89 = pneg %p83
    %p90 = scmp.eq.s32.totalorder %s8, 3
    %p91 = por %p89, %p90
    %p92 = scmp.ne.s32.totalorder %s84, %s87
    %p93 = scmp.eq.s32.totalorder %s8, 0
    %p94 = por %p92, %p93
    %p95 = scmp.ne.s32.totalorder %s84, %s87
    %p96 = scmp.eq.s32.totalorder %s13, 3
    %p97 = por %p95, %p96
    %p98 = scmp.ne.s32.totalorder %s87, %s88
    %p99 = scmp.eq.s32.totalorder %s13, 0
    %p100 = por %p98, %p99
    %p101 = scmp.ne.s32.totalorder %s87, %s88
    %p102 = scmp.eq.s32.totalorder %s14, 3
    %p103 = por %p101, %p102
    %p105 = scmp.ne.s32.totalorder %s88, %s104
    %p106 = scmp.eq.s32.totalorder %s14, 0
    %p107 = por %p105, %p106
    %p108 = scmp.le.s32.totalorder 1, %s8
    %p109 = scmp.lt.s32.totalorder %s8, 5
    %p110 = pnand %p108, %p109
    %p111 = pneg %p110
    // Predicated region
    $region9: #{mesh_encoder_forward.8} parent=5 // pred_check
      _
    $region10: #{mesh_encoder_forward.8} parent=5 // pred_check_branch
      %113 = sbr.rel (%p110) target = $region12
    $region11: #{mesh_encoder_forward.8} parent=5 // pred_region
      %s114 = ssub.s32 %s8, 1
    $region12: #{mesh_encoder_forward.8} parent=5 // pred_fallthru
      _
    %p115 = scmp.lt.s32.totalorder %s8, 4
    // Predicated region
    $region13: #{mesh_encoder_forward.8} parent=5 // pred_check
      %p116 = pneg %p115
    $region14: #{mesh_encoder_forward.8} parent=5 // pred_check_branch
      %118 = sbr.rel (%p116) target = $region16
    $region15: #{mesh_encoder_forward.8} parent=5 // pred_region
      // Predicated region
      $region17: #{mesh_encoder_forward.8} parent=15 // pred_check
        %p119 = pneg %p40
      $region18: #{mesh_encoder_forward.8} parent=15 // pred_check_branch
        %121 = sbr.rel (%p119) target = $region20
      $region19: #{mesh_encoder_forward.8} parent=15 // pred_region
        %p122 = scmp.lt.s32.totalorder %s15, 1
        %s123 = scalar_select %p122, %s15, 1
        %s124 = smul.addr %s123, 10
        %s125 = smul.addr %s124, 4
        %s126 = scalar_lea.vmem %s0, %s125
      $region20: #{mesh_encoder_forward.8} parent=15 // pred_fallthru
        _
      // Predicated region
      $region21: #{mesh_encoder_forward.8} parent=15 // pred_check
        %p127 = pneg %p66
      $region22: #{mesh_encoder_forward.8} parent=15 // pred_check_branch
        %129 = sbr.rel (%p127) target = $region24
      $region23: #{mesh_encoder_forward.8} parent=15 // pred_region
        %s130 = smul.u32 2, %s16
        %p131 = scmp.lt.s32.totalorder %s130, 3
        %s132 = scalar_select %p131, %s130, 3
        %s133 = smul.addr %s132, 4
        %s134 = scalar_lea.vmem %s1, %s133
        %s135 = smul.u32 2, %s16
      $region24: #{mesh_encoder_forward.8} parent=15 // pred_fallthru
        _
    $region16: #{mesh_encoder_forward.8} parent=5 // pred_fallthru
      _
    %p136 = scmp.le.s32.totalorder 1, %s8
    %p137 = scmp.lt.s32.totalorder %s8, 5
    %p138 = pnand %p136, %p137
    %p139 = pneg %p138
    // Predicated region
    $region25: #{mesh_encoder_forward.8} parent=5 // pred_check
      _
    $region26: #{mesh_encoder_forward.8} parent=5 // pred_check_branch
      %141 = sbr.rel (%p138) target = $region28
    $region27: #{mesh_encoder_forward.8} parent=5 // pred_region
      %s142 = ssub.s32 %s8, 1
      %p143 = scmp.lt.s32.totalorder %s17, 1
      %s144 = scalar_select %p143, %s17, 1
      %s145 = smul.addr %s144, 10
      %s146 = smul.addr %s145, 4
      %s147 = scalar_lea.vmem %s0, %s146
      %p148 = pneg %p46
      %p149 = pneg %p43
      %s150 = smul.u32 2, %s18
      %p151 = scmp.lt.s32.totalorder %s150, 3
      %s152 = scalar_select %p151, %s150, 3
      %s153 = smul.addr %s152, 4
      %s154 = scalar_lea.vmem %s1, %s153
      %p155 = pneg %p72
      %p156 = pneg %p69
      %p157 = pneg %p100
      %p158 = pneg %p97
      %s159 = smul.u32 2, %s18
      %p160 = scmp.lt.s32.totalorder %s17, 1
      %s161 = scalar_select %p160, %s17, 1
      %p162 = scmp.lt.s32.totalorder %s159, 3
      %s163 = scalar_select %p162, %s159, 3
      %s164 = smul.addr %s161, 4
      %s165 = sadd.s32 %s163, %s164
      %s166 = smul.addr %s165, 8
      %s167 = scalar_lea.vmem %s2, %s166
      %p168 = scmp.lt.s32.totalorder %s17, 1
      %s169 = scalar_select %p168, %s17, 1
      %s170 = smul.addr %s169, 10
      %s171 = smul.addr %s170, 4
      %s172 = scalar_lea.vmem %s0, %s171
      %s173 = smul.u32 2, %s18
      %p174 = scmp.lt.s32.totalorder %s173, 3
      %s175 = scalar_select %p174, %s173, 3
      %s176 = smul.addr %s175, 4
      %s177 = scalar_lea.vmem %s1, %s176
      %s178 = smul.u32 2, %s18
      %s179 = smul.u32 2, %s18
      %p180 = scmp.lt.s32.totalorder %s17, 1
      %s181 = scalar_select %p180, %s17, 1
      %p182 = scmp.lt.s32.totalorder %s179, 3
      %s183 = scalar_select %p182, %s179, 3
      %s184 = smul.addr %s181, 4
      %s185 = sadd.s32 %s183, %s184
      %s186 = smul.addr %s185, 8
      %s187 = scalar_lea.vmem %s2, %s186
      %s188 = smul.u32 2, %s18
      %v190 = vld [vmem:[%s177] sm:$0xf]
      %v191 = vld [vmem:[%s177 + $0x4] sm:$0xf]
      %v192 = vld [vmem:[%s172] sm:$0xf]
      %v193 = vld [vmem:[%s172 + $0x4] sm:$0xf]
      %v194 = vld [vmem:[%s172 + $0x8] sm:$0xf]
      %v195 = vld [vmem:[%s172 + $0xc] sm:$0xf]
      %v196 = vld [vmem:[%s172 + $0x10] sm:$0xf]
      %v197 = vld [vmem:[%s172 + $0x14] sm:$0xf]
      %v198 = vld [vmem:[%s172 + $0x18] sm:$0xf]
      %v199 = vld [vmem:[%s172 + $0x1c] sm:$0xf]
      %v200 = vld [vmem:[%s172 + $0x20] sm:$0xf]
      %v201 = vld [vmem:[%s172 + $0x24] sm:$0xf]
      %v204 = vunpack.c.l.b16 %v190
      %v205 = vunpack.c.l.b16 %v191
      %v206 = vpack.c.b16 %v205, %v204
      %v217 = vunpack.c.l.b16 %v192
      %v218 = vunpack.c.l.b16 %v193
      %v219 = vunpack.c.l.b16 %v194
      %v220 = vunpack.c.l.b16 %v195
      %v221 = vunpack.c.l.b16 %v196
      %v222 = vunpack.c.l.b16 %v197
      %v223 = vunpack.c.l.b16 %v198
      %v224 = vunpack.c.l.b16 %v199
      %v225 = vunpack.c.l.b16 %v200
      %v226 = vunpack.c.l.b16 %v201
      %v227 = vpack.c.b16 %v218, %v217
      %v228 = vpack.c.b16 %v220, %v219
      %v229 = vpack.c.b16 %v222, %v221
      %v230 = vpack.c.b16 %v224, %v223
      %v231 = vpack.c.b16 %v226, %v225
      %vm237 = vcmask 654336
      %v239 = vsel %vm237, %v206, 0
      %241 = vmatpush.bf16.msra.mxu0 0
      %242 = vmatpush.bf16.msra.mxu0 0
      %243 = vmatpush.bf16.msra.mxu0 0
      %244 = vmatpush.bf16.msra.mxu0 %v231
      %245 = vmatpush.bf16.msra.mxu0 %v230
      %246 = vmatpush.bf16.msra.mxu0 %v229
      %247 = vmatpush.bf16.msra.mxu0 %v228
      %248 = vmatpush.bf16.msra.mxu0 %v227
      %249 = vmatmul.bf16.gmra.mxu0 %v239
      %v250 = vpop.f32.mrf.mxu0
      %v251 = vadd.f32 0.0, %v250
      %v252 = vpop.f32.mrf.mxu0
      %v253 = vadd.f32 0.0, %v252
      %254 = vdwg.mxu0
      %255 = vadd.xlane.f32.xlu0 %v251
      %v256 = vpop.xlane.xlu0 %255
      %257 = vadd.xlane.f32.xlu0 %v253
      %v258 = vpop.xlane.xlu0 %257
      %v259 = vrcp.pop 128.0
      %v260 = vmul.f32 128.0, %v259
      %v261 = vsub.f32 1.0, %v260
      %v262 = vmul.f32 %v259, %v261
      %v263 = vadd.f32 %v259, %v262
      %vm264 = vweird.f32 %v259
      %v265 = vsel %vm264, %v259, %v263
      %v266 = vmul.f32 %v256, %v265
      %v267 = vmul.f32 %v258, %v265
      %v268 = vmul.f32 %v251, %v251
      %v269 = vmul.f32 %v253, %v253
      %270 = vadd.xlane.f32.xlu0 %v268
      %v271 = vpop.xlane.xlu0 %270
      %272 = vadd.xlane.f32.xlu0 %v269
      %v273 = vpop.xlane.xlu0 %272
      %v274 = vmul.f32 %v271, %v265
      %v275 = vmul.f32 %v273, %v265
      %v276 = vmul.f32 %v266, %v266
      %v277 = vmul.f32 %v267, %v267
      %v278 = vsub.f32 %v274, %v276
      %v279 = vsub.f32 %v275, %v277
      %v280 = vsub.f32 %v251, %v266
      %v281 = vsub.f32 %v253, %v267
      %v282 = vadd.f32 %v278, 1e-05
      %v283 = vadd.f32 %v279, 1e-05
      %v284 = vrsqrt.pop %v282
      %v285 = vmul.f32 %v284, %v282
      %v286 = vmul.f32 %v285, %v284
      %v287 = vmul.f32 0.5, %v286
      %v288 = vsub.f32 1.5, %v287
      %v289 = vmul.f32 %v284, %v288
      %vm290 = vweird.f32 %v282
      %vm291 = vweird.f32 %v284
      %vm292 = vmor %vm290, %vm291
      %v293 = vsel %vm292, %v284, %v289
      %v294 = vrsqrt.pop %v283
      %v295 = vmul.f32 %v294, %v283
      %v296 = vmul.f32 %v295, %v294
      %v297 = vmul.f32 0.5, %v296
      %v298 = vsub.f32 1.5, %v297
      %v299 = vmul.f32 %v294, %v298
      %vm300 = vweird.f32 %v283
      %vm301 = vweird.f32 %v294
      %vm302 = vmor %vm300, %vm301
      %v303 = vsel %vm302, %v294, %v299
      %v304 = vmul.f32 %v280, %v293
      %v305 = vmul.f32 %v281, %v303
      %v306 = vmax.f32 %v304, 0.0
      %v307 = vmax.f32 %v305, 0.0
      %308 = vst [vmem:[%s187] sm:$0xff] %v306
      %309 = vst [vmem:[%s187 + $0x8] sm:$0xff] %v307
      %s310 = smul.u32 2, %s18
      %p311 = scmp.lt.s32.totalorder %s17, 1
      %s312 = scalar_select %p311, %s17, 1
      %p313 = scmp.lt.s32.totalorder %s310, 3
      %s314 = scalar_select %p313, %s310, 3
      %s315 = smul.addr %s312, 4
      %s316 = sadd.s32 %s314, %s315
      %s317 = smul.addr %s316, 8
      %s318 = scalar_lea.vmem %s2, %s317
      // Predicated region
      $region29: #{mesh_encoder_forward.8} parent=27 // pred_check
        %p319 = pneg %p97
      $region30: #{mesh_encoder_forward.8} parent=27 // pred_check_branch
        %321 = sbr.rel (%p319) target = $region32
      $region31: #{mesh_encoder_forward.8} parent=27 // pred_region
        %s322 = smul.u32 2, %s18
      $region32: #{mesh_encoder_forward.8} parent=27 // pred_fallthru
        _
    $region28: #{mesh_encoder_forward.8} parent=5 // pred_fallthru
      _
    %p323 = scmp.le.s32.totalorder 2, %s8
    // Predicated region
    $region33: #{mesh_encoder_forward.8} parent=5 // pred_check
      %p324 = pneg %p323
    $region34: #{mesh_encoder_forward.8} parent=5 // pred_check_branch
      %326 = sbr.rel (%p324) target = $region36
    $region35: #{mesh_encoder_forward.8} parent=5 // pred_region
      %s327 = ssub.s32 %s8, 2
      // Predicated region
      $region37: #{mesh_encoder_forward.8} parent=35 // pred_check
        %p328 = pneg %p103
      $region38: #{mesh_encoder_forward.8} parent=35 // pred_check_branch
        %330 = sbr.rel (%p328) target = $region40
      $region39: #{mesh_encoder_forward.8} parent=35 // pred_region
        %s331 = smul.u32 2, %s20
        %p332 = scmp.lt.s32.totalorder %s19, 1
        %s333 = scalar_select %p332, %s19, 1
        %p334 = scmp.lt.s32.totalorder %s331, 3
        %s335 = scalar_select %p334, %s331, 3
        %s336 = smul.addr %s333, 4
        %s337 = sadd.s32 %s335, %s336
        %s338 = smul.addr %s337, 8
        %s339 = scalar_lea.vmem %s2, %s338
      $region40: #{mesh_encoder_forward.8} parent=35 // pred_fallthru
        _
    $region36: #{mesh_encoder_forward.8} parent=5 // pred_fallthru
      _
  $region6: #{mesh_encoder_forward.8} parent=0 // loop_footer
    %s12 = sadd.s32 1, %s8
  $region7: #{mesh_encoder_forward.8} parent=0 // loop_footer_branch
    %7 = sbr.rel target = $region3
  $region8: #{mesh_encoder_forward.8} parent=0 // loop_exit
    _

// kernel: mesh_encoder_forward.9
$region0: #{mesh_encoder_forward.9}
  #allocation0 [shape = 'u32[]', space=smem, size = 0x4, offset = 0x4, fixed_abs, tag = 'smem constant byte address 0x4 - core index']
  #allocation1 [shape = 'u32[72,128]{1,0:T(1,128)}', space=vmem, size = 0x9000, scoped, tag = 'internal scratch']
  %s0 = inlined_call_operand.vmem [shape: bf16[2,160,128], index: 0, kind: input, shape index: {}]
  %s1 = inlined_call_operand.vmem [shape: bf16[32,160], index: 1, kind: input, shape index: {}]
  %s2 = inlined_call_operand.vmem [shape: f32[2,32,128], index: 2, kind: input, shape index: {}]
  %s3 = inlined_call_operand.vmem [shape: f32[2,32,128], index: 3, kind: output, shape index: {}]
  %s4 = sld [smem:[#allocation0]]
  $region45: #{mesh_encoder_forward.9} parent=0
    _
  %s6 = ssub.s32 1, %s4
  %s7 = scalar_select 0, %s6, %s4
  loop: start=0, step=1, limit=6
  $region2: #{mesh_encoder_forward.9} parent=0 // loop_pre_header
    _
  $region3: #{mesh_encoder_forward.9} parent=0 // loop_header
    %s9 = sphi 0, %s13
    %p10 = scmp.ge.s32.totalorder %s9, 6
    %s16 = sphi 0, %s28
    %s17 = sphi 0, %s24
    %s18 = sphi 0, %s16
    %s19 = sphi 0, %s17
    %s20 = sphi 0, %s18
    %s21 = sphi 0, %s19
    %s31 = sphi 0, %s33
    %s34 = sphi 0, %s31
    %s35 = sphi 0, %s34
    %s51 = sphi 0, %s35
    %s57 = sphi 0, %s59
    %s60 = sphi 0, %s57
    %s61 = sphi 0, %s60
    %s77 = sphi 0, %s61
    %s85 = sphi 0, %s87
    %s88 = sphi 0, %s85
    %s89 = sphi 0, %s88
    %s105 = sphi 0, %s89
    %s113 = sphi 0, %s115
    %s116 = sphi 0, %s113
    %s117 = sphi 0, %s116
    %s133 = sphi 0, %s117
  $region4: #{mesh_encoder_forward.9} parent=0 // loop_header_branch
    %12 = sbr.rel (%p10) target = $region8
  $region5: #{mesh_encoder_forward.9} parent=0 // loop_body
    %s14 = ssub.s32 %s9, 1
    %s15 = ssub.s32 %s9, 2
    %s22 = sadd.s32 1, %s17
    %p23 = scmp.ge.s32.totalorder %s22, 2
    %s24 = scalar_select %p23, 0, %s22
    %s25 = sadd.s32 1, %s16
    %s26 = scalar_select %p23, %s25, %s16
    %p27 = scmp.ge.s32.totalorder %s26, 2
    %s28 = scalar_select %p27, 0, %s26
    %s29 = ssub.s32 %s16, %s28
    %p30 = scmp.eq.s32.totalorder %s29, 0
    %s32 = sadd.s32 %s31, 1
    %s33 = scalar_select %p30, %s31, %s32
    %p36 = pneg %p30
    %p37 = scmp.eq.s32.totalorder %s9, 3
    %p38 = por %p36, %p37
    %p39 = scmp.ne.s32.totalorder %s31, %s34
    %p40 = scmp.eq.s32.totalorder %s9, 0
    %p41 = por %p39, %p40
    %p42 = scmp.ne.s32.totalorder %s31, %s34
    %p43 = scmp.eq.s32.totalorder %s14, 3
    %p44 = por %p42, %p43
    %p45 = scmp.ne.s32.totalorder %s34, %s35
    %p46 = scmp.eq.s32.totalorder %s14, 0
    %p47 = por %p45, %p46
    %p48 = scmp.ne.s32.totalorder %s34, %s35
    %p49 = scmp.eq.s32.totalorder %s15, 3
    %p50 = por %p48, %p49
    %p52 = scmp.ne.s32.totalorder %s35, %s51
    %p53 = scmp.eq.s32.totalorder %s15, 0
    %p54 = por %p52, %p53
    %s55 = ssub.s32 %s17, %s24
    %p56 = scmp.eq.s32.totalorder %s55, 0
    %s58 = sadd.s32 %s57, 1
    %s59 = scalar_select %p56, %s57, %s58
    %p62 = pneg %p56
    %p63 = scmp.eq.s32.totalorder %s9, 3
    %p64 = por %p62, %p63
    %p65 = scmp.ne.s32.totalorder %s57, %s60
    %p66 = scmp.eq.s32.totalorder %s9, 0
    %p67 = por %p65, %p66
    %p68 = scmp.ne.s32.totalorder %s57, %s60
    %p69 = scmp.eq.s32.totalorder %s14, 3
    %p70 = por %p68, %p69
    %p71 = scmp.ne.s32.totalorder %s60, %s61
    %p72 = scmp.eq.s32.totalorder %s14, 0
    %p73 = por %p71, %p72
    %p74 = scmp.ne.s32.totalorder %s60, %s61
    %p75 = scmp.eq.s32.totalorder %s15, 3
    %p76 = por %p74, %p75
    %p78 = scmp.ne.s32.totalorder %s61, %s77
    %p79 = scmp.eq.s32.totalorder %s15, 0
    %p80 = por %p78, %p79
    %s81 = ssub.s32 %s16, %s28
    %s82 = ssub.s32 %s17, %s24
    %s83 = sor.u32 %s81, %s82
    %p84 = scmp.eq.s32.totalorder %s83, 0
    %s86 = sadd.s32 %s85, 1
    %s87 = scalar_select %p84, %s85, %s86
    %p90 = pneg %p84
    %p91 = scmp.eq.s32.totalorder %s9, 3
    %p92 = por %p90, %p91
    %p93 = scmp.ne.s32.totalorder %s85, %s88
    %p94 = scmp.eq.s32.totalorder %s9, 0
    %p95 = por %p93, %p94
    %p96 = scmp.ne.s32.totalorder %s85, %s88
    %p97 = scmp.eq.s32.totalorder %s14, 3
    %p98 = por %p96, %p97
    %p99 = scmp.ne.s32.totalorder %s88, %s89
    %p100 = scmp.eq.s32.totalorder %s14, 0
    %p101 = por %p99, %p100
    %p102 = scmp.ne.s32.totalorder %s88, %s89
    %p103 = scmp.eq.s32.totalorder %s15, 3
    %p104 = por %p102, %p103
    %p106 = scmp.ne.s32.totalorder %s89, %s105
    %p107 = scmp.eq.s32.totalorder %s15, 0
    %p108 = por %p106, %p107
    %s109 = ssub.s32 %s16, %s28
    %s110 = ssub.s32 %s17, %s24
    %s111 = sor.u32 %s109, %s110
    %p112 = scmp.eq.s32.totalorder %s111, 0
    %s114 = sadd.s32 %s113, 1
    %s115 = scalar_select %p112, %s113, %s114
    %p118 = pneg %p112
    %p119 = scmp.eq.s32.totalorder %s9, 3
    %p120 = por %p118, %p119
    %p121 = scmp.ne.s32.totalorder %s113, %s116
    %p122 = scmp.eq.s32.totalorder %s9, 0
    %p123 = por %p121, %p122
    %p124 = scmp.ne.s32.totalorder %s113, %s116
    %p125 = scmp.eq.s32.totalorder %s14, 3
    %p126 = por %p124, %p125
    %p127 = scmp.ne.s32.totalorder %s116, %s117
    %p128 = scmp.eq.s32.totalorder %s14, 0
    %p129 = por %p127, %p128
    %p130 = scmp.ne.s32.totalorder %s116, %s117
    %p131 = scmp.eq.s32.totalorder %s15, 3
    %p132 = por %p130, %p131
    %p134 = scmp.ne.s32.totalorder %s117, %s133
    %p135 = scmp.eq.s32.totalorder %s15, 0
    %p136 = por %p134, %p135
    %p137 = scmp.le.s32.totalorder 1, %s9
    %p138 = scmp.lt.s32.totalorder %s9, 5
    %p139 = pnand %p137, %p138
    %p140 = pneg %p139
    // Predicated region
    $region9: #{mesh_encoder_forward.9} parent=5 // pred_check
      _
    $region10: #{mesh_encoder_forward.9} parent=5 // pred_check_branch
      %142 = sbr.rel (%p139) target = $region12
    $region11: #{mesh_encoder_forward.9} parent=5 // pred_region
      %s143 = ssub.s32 %s9, 1
    $region12: #{mesh_encoder_forward.9} parent=5 // pred_fallthru
      _
    %p144 = scmp.lt.s32.totalorder %s9, 4
    // Predicated region
    $region13: #{mesh_encoder_forward.9} parent=5 // pred_check
      %p145 = pneg %p144
    $region14: #{mesh_encoder_forward.9} parent=5 // pred_check_branch
      %147 = sbr.rel (%p145) target = $region16
    $region15: #{mesh_encoder_forward.9} parent=5 // pred_region
      // Predicated region
      $region17: #{mesh_encoder_forward.9} parent=15 // pred_check
        %p148 = pneg %p41
      $region18: #{mesh_encoder_forward.9} parent=15 // pred_check_branch
        %150 = sbr.rel (%p148) target = $region20
      $region19: #{mesh_encoder_forward.9} parent=15 // pred_region
        %p151 = scmp.lt.s32.totalorder %s16, 1
        %s152 = scalar_select %p151, %s16, 1
        %s153 = smul.addr %s152, 20
        %s154 = smul.addr %s153, 4
        %s155 = scalar_lea.vmem %s0, %s154
      $region20: #{mesh_encoder_forward.9} parent=15 // pred_fallthru
        _
      // Predicated region
      $region21: #{mesh_encoder_forward.9} parent=15 // pred_check
        %p156 = pneg %p67
      $region22: #{mesh_encoder_forward.9} parent=15 // pred_check_branch
        %158 = sbr.rel (%p156) target = $region24
      $region23: #{mesh_encoder_forward.9} parent=15 // pred_region
        %s159 = smul.u32 2, %s17
        %p160 = scmp.lt.s32.totalorder %s159, 3
        %s161 = scalar_select %p160, %s159, 3
        %s162 = smul.addr %s161, 2
        %s163 = smul.addr %s162, 4
        %s164 = scalar_lea.vmem %s1, %s163
        %s165 = smul.u32 2, %s17
      $region24: #{mesh_encoder_forward.9} parent=15 // pred_fallthru
        _
      // Predicated region
      $region25: #{mesh_encoder_forward.9} parent=15 // pred_check
        %p166 = pneg %p95
      $region26: #{mesh_encoder_forward.9} parent=15 // pred_check_branch
        %168 = sbr.rel (%p166) target = $region28
      $region27: #{mesh_encoder_forward.9} parent=15 // pred_region
        %s169 = smul.u32 2, %s17
        %p170 = scmp.lt.s32.totalorder %s16, 1
        %s171 = scalar_select %p170, %s16, 1
        %p172 = scmp.lt.s32.totalorder %s169, 3
        %s173 = scalar_select %p172, %s169, 3
        %s174 = smul.addr %s171, 4
        %s175 = sadd.s32 %s173, %s174
        %s176 = smul.addr %s175, 8
        %s177 = scalar_lea.vmem %s2, %s176
        %s178 = smul.u32 2, %s17
      $region28: #{mesh_encoder_forward.9} parent=15 // pred_fallthru
        _
    $region16: #{mesh_encoder_forward.9} parent=5 // pred_fallthru
      _
    %p179 = scmp.le.s32.totalorder 1, %s9
    %p180 = scmp.lt.s32.totalorder %s9, 5
    %p181 = pnand %p179, %p180
    %p182 = pneg %p181
    // Predicated region
    $region29: #{mesh_encoder_forward.9} parent=5 // pred_check
      _
    $region30: #{mesh_encoder_forward.9} parent=5 // pred_check_branch
      %184 = sbr.rel (%p181) target = $region32
    $region31: #{mesh_encoder_forward.9} parent=5 // pred_region
      %s185 = ssub.s32 %s9, 1
      %p186 = scmp.lt.s32.totalorder %s18, 1
      %s187 = scalar_select %p186, %s18, 1
      %s188 = smul.addr %s187, 20
      %s189 = smul.addr %s188, 4
      %s190 = scalar_lea.vmem %s0, %s189
      %p191 = pneg %p47
      %p192 = pneg %p44
      %s193 = smul.u32 2, %s19
      %p194 = scmp.lt.s32.totalorder %s193, 3
      %s195 = scalar_select %p194, %s193, 3
      %s196 = smul.addr %s195, 2
      %s197 = smul.addr %s196, 4
      %s198 = scalar_lea.vmem %s1, %s197
      %p199 = pneg %p73
      %p200 = pneg %p70
      %s201 = smul.u32 2, %s19
      %p202 = scmp.lt.s32.totalorder %s18, 1
      %s203 = scalar_select %p202, %s18, 1
      %p204 = scmp.lt.s32.totalorder %s201, 3
      %s205 = scalar_select %p204, %s201, 3
      %s206 = smul.addr %s203, 4
      %s207 = sadd.s32 %s205, %s206
      %s208 = smul.addr %s207, 8
      %s209 = scalar_lea.vmem %s2, %s208
      %p210 = pneg %p101
      %p211 = pneg %p98
      %p212 = pneg %p129
      %p213 = pneg %p126
      %s214 = smul.u32 2, %s19
      %p215 = scmp.lt.s32.totalorder %s18, 1
      %s216 = scalar_select %p215, %s18, 1
      %p217 = scmp.lt.s32.totalorder %s214, 3
      %s218 = scalar_select %p217, %s214, 3
      %s219 = smul.addr %s216, 4
      %s220 = sadd.s32 %s218, %s219
      %s221 = smul.addr %s220, 8
      %s222 = scalar_lea.vmem %s3, %s221
      %p223 = scmp.lt.s32.totalorder %s18, 1
      %s224 = scalar_select %p223, %s18, 1
      %s225 = smul.addr %s224, 20
      %s226 = smul.addr %s225, 4
      %s227 = scalar_lea.vmem %s0, %s226
      %s228 = smul.u32 2, %s19
      %p229 = scmp.lt.s32.totalorder %s228, 3
      %s230 = scalar_select %p229, %s228, 3
      %s231 = smul.addr %s230, 2
      %s232 = smul.addr %s231, 4
      %s233 = scalar_lea.vmem %s1, %s232
      %s234 = smul.u32 2, %s19
      %s235 = smul.u32 2, %s19
      %p236 = scmp.lt.s32.totalorder %s18, 1
      %s237 = scalar_select %p236, %s18, 1
      %p238 = scmp.lt.s32.totalorder %s235, 3
      %s239 = scalar_select %p238, %s235, 3
      %s240 = smul.addr %s237, 4
      %s241 = sadd.s32 %s239, %s240
      %s242 = smul.addr %s241, 8
      %s243 = scalar_lea.vmem %s2, %s242
      %s244 = smul.u32 2, %s19
      %s245 = smul.u32 2, %s19
      %p246 = scmp.lt.s32.totalorder %s18, 1
      %s247 = scalar_select %p246, %s18, 1
      %p248 = scmp.lt.s32.totalorder %s245, 3
      %s249 = scalar_select %p248, %s245, 3
      %s250 = smul.addr %s247, 4
      %s251 = sadd.s32 %s249, %s250
      %s252 = smul.addr %s251, 8
      %s253 = scalar_lea.vmem %s3, %s252
      %s254 = smul.u32 2, %s19
      %v256 = vld [vmem:[%s233] sm:$0xff]
      %v257 = vld [vmem:[%s233 + $0x8] sm:$0xff]
      %v258 = vld [vmem:[%s227] sm:$0xf]
      %v259 = vld [vmem:[%s227 + $0x4] sm:$0xf]
      %v260 = vld [vmem:[%s227 + $0x8] sm:$0xf]
      %v261 = vld [vmem:[%s227 + $0xc] sm:$0xf]
      %v262 = vld [vmem:[%s227 + $0x10] sm:$0xf]
      %v263 = vld [vmem:[%s227 + $0x14] sm:$0xf]
      %v264 = vld [vmem:[%s227 + $0x18] sm:$0xf]
      %v265 = vld [vmem:[%s227 + $0x1c] sm:$0xf]
      %v266 = vld [vmem:[%s227 + $0x20] sm:$0xf]
      %v267 = vld [vmem:[%s227 + $0x24] sm:$0xf]
      %v268 = vld [vmem:[%s227 + $0x28] sm:$0xf]
      %v269 = vld [vmem:[%s227 + $0x2c] sm:$0xf]
      %v270 = vld [vmem:[%s227 + $0x30] sm:$0xf]
      %v271 = vld [vmem:[%s227 + $0x34] sm:$0xf]
      %v272 = vld [vmem:[%s227 + $0x38] sm:$0xf]
      %v273 = vld [vmem:[%s227 + $0x3c] sm:$0xf]
      %v274 = vld [vmem:[%s227 + $0x40] sm:$0xf]
      %v275 = vld [vmem:[%s227 + $0x44] sm:$0xf]
      %v276 = vld [vmem:[%s227 + $0x48] sm:$0xf]
      %v277 = vld [vmem:[%s227 + $0x4c] sm:$0xf]
      %v280 = vunpack.c.l.b16 %v256
      %v281 = vunpack.c.h.b16 %v256
      %v282 = vunpack.c.l.b16 %v257
      %v283 = vunpack.c.h.b16 %v257
      %v284 = vpack.c.b16 %v282, %v280
      %v285 = vpack.c.b16 %v283, %v281
      %v307 = vunpack.c.l.b16 %v258
      %v308 = vunpack.c.l.b16 %v259
      %v309 = vunpack.c.l.b16 %v260
      %v310 = vunpack.c.l.b16 %v261
      %v311 = vunpack.c.l.b16 %v262
      %v312 = vunpack.c.l.b16 %v263
      %v313 = vunpack.c.l.b16 %v264
      %v314 = vunpack.c.l.b16 %v265
      %v315 = vunpack.c.l.b16 %v266
      %v316 = vunpack.c.l.b16 %v267
      %v317 = vunpack.c.l.b16 %v268
      %v318 = vunpack.c.l.b16 %v269
      %v319 = vunpack.c.l.b16 %v270
      %v320 = vunpack.c.l.b16 %v271
      %v321 = vunpack.c.l.b16 %v272
      %v322 = vunpack.c.l.b16 %v273
      %v323 = vunpack.c.l.b16 %v274
      %v324 = vunpack.c.l.b16 %v275
      %v325 = vunpack.c.l.b16 %v276
      %v326 = vunpack.c.l.b16 %v277
      %v327 = vpack.c.b16 %v308, %v307
      %v328 = vpack.c.b16 %v310, %v309
      %v329 = vpack.c.b16 %v312, %v311
      %v330 = vpack.c.b16 %v314, %v313
      %v331 = vpack.c.b16 %v316, %v315
      %v332 = vpack.c.b16 %v318, %v317
      %v333 = vpack.c.b16 %v320, %v319
      %v334 = vpack.c.b16 %v322, %v321
      %v335 = vpack.c.b16 %v324, %v323
      %v336 = vpack.c.b16 %v326, %v325
      %vm347 = vcmask 261120
      %v349 = vsel %vm347, %v285, 0
      %351 = vmatpush.bf16.msra.mxu0 %v334
      %352 = vmatpush.bf16.msra.mxu0 %v333
      %353 = vmatpush.bf16.msra.mxu0 %v332
      %354 = vmatpush.bf16.msra.mxu0 %v331
      %355 = vmatpush.bf16.msra.mxu0 %v330
      %356 = vmatpush.bf16.msra.mxu0 %v329
      %357 = vmatpush.bf16.msra.mxu0 %v328
      %358 = vmatpush.bf16.msra.mxu0 %v327
      %359 = vmatmul.bf16.gmra.mxu0 %v284
      %v360 = vpop.f32.mrf.mxu0
      %v361 = vadd.f32 0.0, %v360
      %v362 = vpop.f32.mrf.mxu0
      %v363 = vadd.f32 0.0, %v362
      %364 = vdwg.mxu0
      %365 = vmatpush.bf16.msra.mxu0 0
      %366 = vmatpush.bf16.msra.mxu0 0
      %367 = vmatpush.bf16.msra.mxu0 0
      %368 = vmatpush.bf16.msra.mxu0 0
      %369 = vmatpush.bf16.msra.mxu0 0
      %370 = vmatpush.bf16.msra.mxu0 0
      %371 = vmatpush.bf16.msra.mxu0 %v336
      %372 = vmatpush.bf16.msra.mxu0 %v335
      %373 = vmatmul.bf16.gmra.mxu0 %v349
      %v374 = vpop.f32.mrf.mxu0
      %v375 = vadd.f32 %v361, %v374
      %v376 = vpop.f32.mrf.mxu0
      %v377 = vadd.f32 %v363, %v376
      %378 = vdwg.mxu0
      %379 = vadd.xlane.f32.xlu0 %v375
      %v380 = vpop.xlane.xlu0 %379
      %381 = vadd.xlane.f32.xlu0 %v377
      %v382 = vpop.xlane.xlu0 %381
      %v383 = vrcp.pop 128.0
      %v384 = vmul.f32 128.0, %v383
      %v385 = vsub.f32 1.0, %v384
      %v386 = vmul.f32 %v383, %v385
      %v387 = vadd.f32 %v383, %v386
      %vm388 = vweird.f32 %v383
      %v389 = vsel %vm388, %v383, %v387
      %v390 = vmul.f32 %v380, %v389
      %v391 = vmul.f32 %v382, %v389
      %v392 = vmul.f32 %v375, %v375
      %v393 = vmul.f32 %v377, %v377
      %394 = vadd.xlane.f32.xlu0 %v392
      %v395 = vpop.xlane.xlu0 %394
      %396 = vadd.xlane.f32.xlu0 %v393
      %v397 = vpop.xlane.xlu0 %396
      %v398 = vmul.f32 %v395, %v389
      %v399 = vmul.f32 %v397, %v389
      %v400 = vmul.f32 %v390, %v390
      %v401 = vmul.f32 %v391, %v391
      %v402 = vsub.f32 %v398, %v400
      %v403 = vsub.f32 %v399, %v401
      %v404 = vsub.f32 %v375, %v390
      %v405 = vsub.f32 %v377, %v391
      %v406 = vadd.f32 %v402, 1e-05
      %v407 = vadd.f32 %v403, 1e-05
      %v408 = vrsqrt.pop %v406
      %v409 = vmul.f32 %v408, %v406
      %v410 = vmul.f32 %v409, %v408
      %v411 = vmul.f32 0.5, %v410
      %v412 = vsub.f32 1.5, %v411
      %v413 = vmul.f32 %v408, %v412
      %vm414 = vweird.f32 %v406
      %vm415 = vweird.f32 %v408
      %vm416 = vmor %vm414, %vm415
      %v417 = vsel %vm416, %v408, %v413
      %v418 = vrsqrt.pop %v407
      %v419 = vmul.f32 %v418, %v407
      %v420 = vmul.f32 %v419, %v418
      %v421 = vmul.f32 0.5, %v420
      %v422 = vsub.f32 1.5, %v421
      %v423 = vmul.f32 %v418, %v422
      %vm424 = vweird.f32 %v407
      %vm425 = vweird.f32 %v418
      %vm426 = vmor %vm424, %vm425
      %v427 = vsel %vm426, %v418, %v423
      %v428 = vmul.f32 %v404, %v417
      %v429 = vmul.f32 %v405, %v427
      %v430 = vld [vmem:[%s243] sm:$0xff]
      %v431 = vld [vmem:[%s243 + $0x8] sm:$0xff]
      %v432 = vadd.f32 %v428, %v430
      %v433 = vadd.f32 %v429, %v431
      %v434 = vmax.f32 %v432, 0.0
      %v435 = vmax.f32 %v433, 0.0
      %436 = vst [vmem:[%s253] sm:$0xff] %v434
      %437 = vst [vmem:[%s253 + $0x8] sm:$0xff] %v435
      %s438 = smul.u32 2, %s19
      %p439 = scmp.lt.s32.totalorder %s18, 1
      %s440 = scalar_select %p439, %s18, 1
      %p441 = scmp.lt.s32.totalorder %s438, 3
      %s442 = scalar_select %p441, %s438, 3
      %s443 = smul.addr %s440, 4
      %s444 = sadd.s32 %s442, %s443
      %s445 = smul.addr %s444, 8
      %s446 = scalar_lea.vmem %s3, %s445
      // Predicated region
      $region33: #{mesh_encoder_forward.9} parent=31 // pred_check
        %p447 = pneg %p126
      $region34: #{mesh_encoder_forward.9} parent=31 // pred_check_branch
        %449 = sbr.rel (%p447) target = $region36
      $region35: #{mesh_encoder_forward.9} parent=31 // pred_region
        %s450 = smul.u32 2, %s19
      $region36: #{mesh_encoder_forward.9} parent=31 // pred_fallthru
        _
    $region32: #{mesh_encoder_forward.9} parent=5 // pred_fallthru
      _
    %p451 = scmp.le.s32.totalorder 2, %s9
    // Predicated region
    $region37: #{mesh_encoder_forward.9} parent=5 // pred_check
      %p452 = pneg %p451
    $region38: #{mesh_encoder_forward.9} parent=5 // pred_check_branch
      %454 = sbr.rel (%p452) target = $region40
    $region39: #{mesh_encoder_forward.9} parent=5 // pred_region
      %s455 = ssub.s32 %s9, 2
      // Predicated region
      $region41: #{mesh_encoder_forward.9} parent=39 // pred_check
        %p456 = pneg %p132
      $region42: #{mesh_encoder_forward.9} parent=39 // pred_check_branch
        %458 = sbr.rel (%p456) target = $region44
      $region43: #{mesh_encoder_forward.9} parent=39 // pred_region
        %s459 = smul.u32 2, %s21
        %p460 = scmp.lt.s32.totalorder %s20, 1
        %s461 = scalar_select %p460, %s20, 1
        %p462 = scmp.lt.s32.totalorder %s459, 3
        %s463 = scalar_select %p462, %s459, 3
        %s464 = smul.addr %s461, 4
        %s465 = sadd.s32 %s463, %s464
        %s466 = smul.addr %s465, 8
        %s467 = scalar_lea.vmem %s3, %s466
      $region44: #{mesh_encoder_forward.9} parent=39 // pred_fallthru
        _
    $region40: #{mesh_encoder_forward.9} parent=5 // pred_fallthru
      _
  $region6: #{mesh_encoder_forward.9} parent=0 // loop_footer
    %s13 = sadd.s32 1, %s9
  $region7: #{mesh_encoder_forward.9} parent=0 // loop_footer_branch
    %8 = sbr.rel target = $region3
  $region8: #{mesh_encoder_forward.9} parent=0 // loop_exit
    _

// kernel: mesh_encoder_forward.11
$region0: #{mesh_encoder_forward.11}
  #allocation0 [shape = 'u32[]', space=smem, size = 0x4, offset = 0x4, fixed_abs, tag = 'smem constant byte address 0x4 - core index']
  #allocation1 [shape = 'u32[72,128]{1,0:T(1,128)}', space=vmem, size = 0x9000, scoped, tag = 'internal scratch']
  %s0 = inlined_call_operand.vmem [shape: f32[2,64], index: 0, kind: input, shape index: {}]
  %s1 = inlined_call_operand.vmem [shape: f32[64,32], index: 1, kind: input, shape index: {}]
  %s2 = inlined_call_operand.vmem [shape: f32[1,32], index: 2, kind: input, shape index: {}]
  %s3 = inlined_call_operand.hbm [shape: f32[2,32], index: 3, kind: output, shape index: {}]
  %s4 = sld [smem:[#allocation0]]
  $region22: #{mesh_encoder_forward.11} parent=0
    _
  %s6 = ssub.s32 1, %s4
  %s7 = scalar_select 0, %s6, %s4
  $region1: #{mesh_encoder_forward.11} parent=0
    #allocation2 [shape = 'u8[1024]{0}', space=vmem, size = 0x400, scoped, tag = 'output window, operand 0, single buffered']
    #allocation3 [shape = 's32[1]{0}', space=sflag, size = 0x4, scoped, tag = 'scoped memory for mesh_encoder_forward.11']
    %8 = vsyncpa [#allocation3], 0
    // Predicated region
    $region2: #{mesh_encoder_forward.11} parent=1 // pred_check
      _
    $region3: #{mesh_encoder_forward.11} parent=1 // pred_check_branch
      %10 = sbr.rel (0) target = $region5
    $region4: #{mesh_encoder_forward.11} parent=1 // pred_region
      _
    $region5: #{mesh_encoder_forward.11} parent=1 // pred_fallthru
      _
    // Predicated region
    $region6: #{mesh_encoder_forward.11} parent=1 // pred_check
      _
    $region7: #{mesh_encoder_forward.11} parent=1 // pred_check_branch
      %12 = sbr.rel (0) target = $region9
    $region8: #{mesh_encoder_forward.11} parent=1 // pred_region
      _
    $region9: #{mesh_encoder_forward.11} parent=1 // pred_fallthru
      _
    // Predicated region
    $region10: #{mesh_encoder_forward.11} parent=1 // pred_check
      _
    $region11: #{mesh_encoder_forward.11} parent=1 // pred_check_branch
      %14 = sbr.rel (0) target = $region13
    $region12: #{mesh_encoder_forward.11} parent=1 // pred_region
      _
    $region13: #{mesh_encoder_forward.11} parent=1 // pred_fallthru
      _
    %v15 = vld [vmem:[%s0] sm:$0x3]
    %v16 = vld [vmem:[%s1] sm:$0xff]
    %v17 = vld [vmem:[%s1 + $0x8] sm:$0xff]
    %v18 = vld [vmem:[%s1 + $0x10] sm:$0xff]
    %v19 = vld [vmem:[%s1 + $0x18] sm:$0xff]
    %v20 = vld [vmem:[%s1 + $0x20] sm:$0xff]
    %v21 = vld [vmem:[%s1 + $0x28] sm:$0xff]
    %v22 = vld [vmem:[%s1 + $0x30] sm:$0xff]
    %v23 = vld [vmem:[%s1 + $0x38] sm:$0xff]
    %v24 = vld [vmem:[%s2] sm:$0x1]
    %v26 = vperm.slane %v24, 0
    %vm28 = vcmask 523264
    %v30 = vsel %vm28, %v15, 0
    %32 = vmatpush.msra.mxu0 0.0
    %33 = vmatpush.msra.mxu0 0.0
    %34 = vmatpush.msra.mxu0 0.0
    %35 = vmatpush.msra.mxu0 0.0
    %36 = vmatpush.msra.mxu0 0.0
    %37 = vmatpush.msra.mxu0 0.0
    %38 = vmatpush.msra.mxu0 0.0
    %39 = vmatpush.msra.mxu0 0.0
    %40 = vmatpush.msra.mxu0 %v23
    %41 = vmatpush.msra.mxu0 %v22
    %42 = vmatpush.msra.mxu0 %v21
    %43 = vmatpush.msra.mxu0 %v20
    %44 = vmatpush.msra.mxu0 %v19
    %45 = vmatpush.msra.mxu0 %v18
    %46 = vmatpush.msra.mxu0 %v17
    %47 = vmatpush.msra.mxu0 %v16
    %48 = vmatmul.f32.gmra.mxu0 %v30
    %v49 = vpop.f32.mrf.mxu0
    %v50 = vadd.f32 %v26, %v49
    %51 = vdwg.mxu0
    %vm52 = vcmask 254976
    %v53 = vsel %vm52, %v50, 0.0
    %54 = vadd.xlane.f32.xlu0 %v53
    %v55 = vpop.xlane.xlu0 %54
    %v56 = vrcp.pop 32.0
    %v57 = vmul.f32 32.0, %v56
    %v58 = vsub.f32 1.0, %v57
    %v59 = vmul.f32 %v56, %v58
    %v60 = vadd.f32 %v56, %v59
    %vm61 = vweird.f32 %v56
    %v62 = vsel %vm61, %v56, %v60
    %v63 = vmul.f32 %v55, %v62
    %v64 = vmul.f32 %v50, %v50
    %v65 = vsel %vm52, %v64, 0.0
    %66 = vadd.xlane.f32.xlu0 %v65
    %v67 = vpop.xlane.xlu0 %66
    %v68 = vmul.f32 %v67, %v62
    %v69 = vmul.f32 %v63, %v63
    %v70 = vsub.f32 %v68, %v69
    %v71 = vsub.f32 %v50, %v63
    %v72 = vadd.f32 %v70, 1e-05
    %v73 = vrsqrt.pop %v72
    %v74 = vmul.f32 %v73, %v72
    %v75 = vmul.f32 %v74, %v73
    %v76 = vmul.f32 0.5, %v75
    %v77 = vsub.f32 1.5, %v76
    %v78 = vmul.f32 %v73, %v77
    %vm79 = vweird.f32 %v72
    %vm80 = vweird.f32 %v73
    %vm81 = vmor %vm79, %vm80
    %v82 = vsel %vm81, %v73, %v78
    %v83 = vmul.f32 %v71, %v82
    %84 = vst.msk [vmem:[#allocation2] sm:$0x3] %vm52, %v83
    // Predicated region
    $region14: #{mesh_encoder_forward.11} parent=1 // pred_check
      _
    $region15: #{mesh_encoder_forward.11} parent=1 // pred_check_branch
      %86 = sbr.rel (0) target = $region17
    $region16: #{mesh_encoder_forward.11} parent=1 // pred_region
      %88 = vsyncadd [#allocation3], 0
      %s90 = sshll.u32 [#allocation2], 4
      %s91 = int_to_ptr.vmem [resolvable:$true] %s90
      %s92 = sshll.u32 %s3, 4
      %s93 = int_to_ptr.hbm [resolvable:$true] %s92
      %95 = dma.vmem_to_hbm [thread:$0]  %s91, 32, %s93, [#allocation3]
    $region17: #{mesh_encoder_forward.11} parent=1 // pred_fallthru
      _
    // Predicated region
    $region18: #{mesh_encoder_forward.11} parent=1 // pred_check
      _
    $region19: #{mesh_encoder_forward.11} parent=1 // pred_check_branch
      %97 = sbr.rel (0) target = $region21
    $region20: #{mesh_encoder_forward.11} parent=1 // pred_region
      %99 = dma.done [#allocation3], 32
    $region21: #{mesh_encoder_forward.11} parent=1 // pred_fallthru
      _
    %100 = vsyncpa [#allocation3], 1

// kernel: mesh_encoder_forward.10
$region0: #{mesh_encoder_forward.10}
  #allocation0 [shape = 'u32[]', space=smem, size = 0x4, offset = 0x4, fixed_abs, tag = 'smem constant byte address 0x4 - core index']
  #allocation1 [shape = 'u32[72,128]{1,0:T(1,128)}', space=vmem, size = 0x9000, scoped, tag = 'internal scratch']
  %s0 = inlined_call_operand.vmem [shape: f32[2,4096], index: 0, kind: input, shape index: {}]
  %s1 = inlined_call_operand.vmem [shape: f32[4096,64], index: 1, kind: input, shape index: {}]
  %s2 = inlined_call_operand.vmem [shape: f32[1,64], index: 2, kind: input, shape index: {}]
  %s3 = inlined_call_operand.vmem [shape: f32[2,64], index: 3, kind: output, shape index: {}]
  %s4 = sld [smem:[#allocation0]]
  $region22: #{mesh_encoder_forward.10} parent=0
    _
  %s6 = ssub.s32 1, %s4
  %s7 = scalar_select 0, %s6, %s4
  // Predicated region
  $region2: #{mesh_encoder_forward.10} parent=0 // pred_check
    _
  $region3: #{mesh_encoder_forward.10} parent=0 // pred_check_branch
    %9 = sbr.rel (0) target = $region5
  $region4: #{mesh_encoder_forward.10} parent=0 // pred_region
    _
  $region5: #{mesh_encoder_forward.10} parent=0 // pred_fallthru
    _
  // Predicated region
  $region6: #{mesh_encoder_forward.10} parent=0 // pred_check
    _
  $region7: #{mesh_encoder_forward.10} parent=0 // pred_check_branch
    %11 = sbr.rel (0) target = $region9
  $region8: #{mesh_encoder_forward.10} parent=0 // pred_region
    _
  $region9: #{mesh_encoder_forward.10} parent=0 // pred_fallthru
    _
  // Predicated region
  $region10: #{mesh_encoder_forward.10} parent=0 // pred_check
    _
  $region11: #{mesh_encoder_forward.10} parent=0 // pred_check_branch
    %13 = sbr.rel (0) target = $region13
  $region12: #{mesh_encoder_forward.10} parent=0 // pred_region
    _
  $region13: #{mesh_encoder_forward.10} parent=0 // pred_fallthru
    _
  %v14 = vld [vmem:[%s0] sm:$0xff]
  %v15 = vld [vmem:[%s0 + $0x8] sm:$0xff]
  %v16 = vld [vmem:[%s0 + $0x10] sm:$0xff]
  %v17 = vld [vmem:[%s0 + $0x18] sm:$0xff]
  %v18 = vld [vmem:[%s0 + $0x20] sm:$0xff]
  %v19 = vld [vmem:[%s0 + $0x28] sm:$0xff]
  %v20 = vld [vmem:[%s0 + $0x30] sm:$0xff]
  %v21 = vld [vmem:[%s0 + $0x38] sm:$0xff]
  %v22 = vld [vmem:[%s1] sm:$0xff]
  %v23 = vld [vmem:[%s1 + $0x8] sm:$0xff]
  %v24 = vld [vmem:[%s1 + $0x10] sm:$0xff]
  %v25 = vld [vmem:[%s1 + $0x18] sm:$0xff]
  %v26 = vld [vmem:[%s1 + $0x20] sm:$0xff]
  %v27 = vld [vmem:[%s1 + $0x28] sm:$0xff]
  %v28 = vld [vmem:[%s1 + $0x30] sm:$0xff]
  %v29 = vld [vmem:[%s1 + $0x38] sm:$0xff]
  %v30 = vld [vmem:[%s1 + $0x40] sm:$0xff]
  %v31 = vld [vmem:[%s1 + $0x48] sm:$0xff]
  %v32 = vld [vmem:[%s1 + $0x50] sm:$0xff]
  %v33 = vld [vmem:[%s1 + $0x58] sm:$0xff]
  %v34 = vld [vmem:[%s1 + $0x60] sm:$0xff]
  %v35 = vld [vmem:[%s1 + $0x68] sm:$0xff]
  %v36 = vld [vmem:[%s1 + $0x70] sm:$0xff]
  %v37 = vld [vmem:[%s1 + $0x78] sm:$0xff]
  %v38 = vld [vmem:[%s1 + $0x80] sm:$0xff]
  %v39 = vld [vmem:[%s1 + $0x88] sm:$0xff]
  %v40 = vld [vmem:[%s1 + $0x90] sm:$0xff]
  %v41 = vld [vmem:[%s1 + $0x98] sm:$0xff]
  %v42 = vld [vmem:[%s1 + $0xa0] sm:$0xff]
  %v43 = vld [vmem:[%s1 + $0xa8] sm:$0xff]
  %v44 = vld [vmem:[%s1 + $0xb0] sm:$0xff]
  %v45 = vld [vmem:[%s1 + $0xb8] sm:$0xff]
  %v46 = vld [vmem:[%s1 + $0xc0] sm:$0xff]
  %v47 = vld [vmem:[%s1 + $0xc8] sm:$0xff]
  %v48 = vld [vmem:[%s1 + $0xd0] sm:$0xff]
  %v49 = vld [vmem:[%s1 + $0xd8] sm:$0xff]
  %v50 = vld [vmem:[%s1 + $0xe0] sm:$0xff]
  %v51 = vld [vmem:[%s1 + $0xe8] sm:$0xff]
  %v52 = vld [vmem:[%s1 + $0xf0] sm:$0xff]
  %v53 = vld [vmem:[%s1 + $0xf8] sm:$0xff]
  %v54 = vld [vmem:[%s1 + $0x100] sm:$0xff]
  %v55 = vld [vmem:[%s1 + $0x108] sm:$0xff]
  %v56 = vld [vmem:[%s1 + $0x110] sm:$0xff]
  %v57 = vld [vmem:[%s1 + $0x118] sm:$0xff]
  %v58 = vld [vmem:[%s1 + $0x120] sm:$0xff]
  %v59 = vld [vmem:[%s1 + $0x128] sm:$0xff]
  %v60 = vld [vmem:[%s1 + $0x130] sm:$0xff]
  %v61 = vld [vmem:[%s1 + $0x138] sm:$0xff]
  %v62 = vld [vmem:[%s1 + $0x140] sm:$0xff]
  %v63 = vld [vmem:[%s1 + $0x148] sm:$0xff]
  %v64 = vld [vmem:[%s1 + $0x150] sm:$0xff]
  %v65 = vld [vmem:[%s1 + $0x158] sm:$0xff]
  %v66 = vld [vmem:[%s1 + $0x160] sm:$0xff]
  %v67 = vld [vmem:[%s1 + $0x168] sm:$0xff]
  %v68 = vld [vmem:[%s1 + $0x170] sm:$0xff]
  %v69 = vld [vmem:[%s1 + $0x178] sm:$0xff]
  %v70 = vld [vmem:[%s1 + $0x180] sm:$0xff]
  %v71 = vld [vmem:[%s1 + $0x188] sm:$0xff]
  %v72 = vld [vmem:[%s1 + $0x190] sm:$0xff]
  %v73 = vld [vmem:[%s1 + $0x198] sm:$0xff]
  %v74 = vld [vmem:[%s1 + $0x1a0] sm:$0xff]
  %v75 = vld [vmem:[%s1 + $0x1a8] sm:$0xff]
  %v76 = vld [vmem:[%s1 + $0x1b0] sm:$0xff]
  %v77 = vld [vmem:[%s1 + $0x1b8] sm:$0xff]
  %v78 = vld [vmem:[%s1 + $0x1c0] sm:$0xff]
  %v79 = vld [vmem:[%s1 + $0x1c8] sm:$0xff]
  %v80 = vld [vmem:[%s1 + $0x1d0] sm:$0xff]
  %v81 = vld [vmem:[%s1 + $0x1d8] sm:$0xff]
  %v82 = vld [vmem:[%s1 + $0x1e0] sm:$0xff]
  %v83 = vld [vmem:[%s1 + $0x1e8] sm:$0xff]
  %v84 = vld [vmem:[%s1 + $0x1f0] sm:$0xff]
  %v85 = vld [vmem:[%s1 + $0x1f8] sm:$0xff]
  %v86 = vld [vmem:[%s1 + $0x200] sm:$0xff]
  %v87 = vld [vmem:[%s1 + $0x208] sm:$0xff]
  %v88 = vld [vmem:[%s1 + $0x210] sm:$0xff]
  %v89 = vld [vmem:[%s1 + $0x218] sm:$0xff]
  %v90 = vld [vmem:[%s1 + $0x220] sm:$0xff]
  %v91 = vld [vmem:[%s1 + $0x228] sm:$0xff]
  %v92 = vld [vmem:[%s1 + $0x230] sm:$0xff]
  %v93 = vld [vmem:[%s1 + $0x238] sm:$0xff]
  %v94 = vld [vmem:[%s1 + $0x240] sm:$0xff]
  %v95 = vld [vmem:[%s1 + $0x248] sm:$0xff]
  %v96 = vld [vmem:[%s1 + $0x250] sm:$0xff]
  %v97 = vld [vmem:[%s1 + $0x258] sm:$0xff]
  %v98 = vld [vmem:[%s1 + $0x260] sm:$0xff]
  %v99 = vld [vmem:[%s1 + $0x268] sm:$0xff]
  %v100 = vld [vmem:[%s1 + $0x270] sm:$0xff]
  %v101 = vld [vmem:[%s1 + $0x278] sm:$0xff]
  %v102 = vld [vmem:[%s1 + $0x280] sm:$0xff]
  %v103 = vld [vmem:[%s1 + $0x288] sm:$0xff]
  %v104 = vld [vmem:[%s1 + $0x290] sm:$0xff]
  %v105 = vld [vmem:[%s1 + $0x298] sm:$0xff]
  %v106 = vld [vmem:[%s1 + $0x2a0] sm:$0xff]
  %v107 = vld [vmem:[%s1 + $0x2a8] sm:$0xff]
  %v108 = vld [vmem:[%s1 + $0x2b0] sm:$0xff]
  %v109 = vld [vmem:[%s1 + $0x2b8] sm:$0xff]
  %v110 = vld [vmem:[%s1 + $0x2c0] sm:$0xff]
  %v111 = vld [vmem:[%s1 + $0x2c8] sm:$0xff]
  %v112 = vld [vmem:[%s1 + $0x2d0] sm:$0xff]
  %v113 = vld [vmem:[%s1 + $0x2d8] sm:$0xff]
  %v114 = vld [vmem:[%s1 + $0x2e0] sm:$0xff]
  %v115 = vld [vmem:[%s1 + $0x2e8] sm:$0xff]
  %v116 = vld [vmem:[%s1 + $0x2f0] sm:$0xff]
  %v117 = vld [vmem:[%s1 + $0x2f8] sm:$0xff]
  %v118 = vld [vmem:[%s1 + $0x300] sm:$0xff]
  %v119 = vld [vmem:[%s1 + $0x308] sm:$0xff]
  %v120 = vld [vmem:[%s1 + $0x310] sm:$0xff]
  %v121 = vld [vmem:[%s1 + $0x318] sm:$0xff]
  %v122 = vld [vmem:[%s1 + $0x320] sm:$0xff]
  %v123 = vld [vmem:[%s1 + $0x328] sm:$0xff]
  %v124 = vld [vmem:[%s1 + $0x330] sm:$0xff]
  %v125 = vld [vmem:[%s1 + $0x338] sm:$0xff]
  %v126 = vld [vmem:[%s1 + $0x340] sm:$0xff]
  %v127 = vld [vmem:[%s1 + $0x348] sm:$0xff]
  %v128 = vld [vmem:[%s1 + $0x350] sm:$0xff]
  %v129 = vld [vmem:[%s1 + $0x358] sm:$0xff]
  %v130 = vld [vmem:[%s1 + $0x360] sm:$0xff]
  %v131 = vld [vmem:[%s1 + $0x368] sm:$0xff]
  %v132 = vld [vmem:[%s1 + $0x370] sm:$0xff]
  %v133 = vld [vmem:[%s1 + $0x378] sm:$0xff]
  %v134 = vld [vmem:[%s1 + $0x380] sm:$0xff]
  %v135 = vld [vmem:[%s1 + $0x388] sm:$0xff]
  %v136 = vld [vmem:[%s1 + $0x390] sm:$0xff]
  %v137 = vld [vmem:[%s1 + $0x398] sm:$0xff]
  %v138 = vld [vmem:[%s1 + $0x3a0] sm:$0xff]
  %v139 = vld [vmem:[%s1 + $0x3a8] sm:$0xff]
  %v140 = vld [vmem:[%s1 + $0x3b0] sm:$0xff]
  %v141 = vld [vmem:[%s1 + $0x3b8] sm:$0xff]
  %v142 = vld [vmem:[%s1 + $0x3c0] sm:$0xff]
  %v143 = vld [vmem:[%s1 + $0x3c8] sm:$0xff]
  %v144 = vld [vmem:[%s1 + $0x3d0] sm:$0xff]
  %v145 = vld [vmem:[%s1 + $0x3d8] sm:$0xff]
  %v146 = vld [vmem:[%s1 + $0x3e0] sm:$0xff]
  %v147 = vld [vmem:[%s1 + $0x3e8] sm:$0xff]
  %v148 = vld [vmem:[%s1 + $0x3f0] sm:$0xff]
  %v149 = vld [vmem:[%s1 + $0x3f8] sm:$0xff]
  %v150 = vld [vmem:[%s1 + $0x400] sm:$0xff]
  %v151 = vld [vmem:[%s1 + $0x408] sm:$0xff]
  %v152 = vld [vmem:[%s1 + $0x410] sm:$0xff]
  %v153 = vld [vmem:[%s1 + $0x418] sm:$0xff]
  %v154 = vld [vmem:[%s1 + $0x420] sm:$0xff]
  %v155 = vld [vmem:[%s1 + $0x428] sm:$0xff]
  %v156 = vld [vmem:[%s1 + $0x430] sm:$0xff]
  %v157 = vld [vmem:[%s1 + $0x438] sm:$0xff]
  %v158 = vld [vmem:[%s1 + $0x440] sm:$0xff]
  %v159 = vld [vmem:[%s1 + $0x448] sm:$0xff]
  %v160 = vld [vmem:[%s1 + $0x450] sm:$0xff]
  %v161 = vld [vmem:[%s1 + $0x458] sm:$0xff]
  %v162 = vld [vmem:[%s1 + $0x460] sm:$0xff]
  %v163 = vld [vmem:[%s1 + $0x468] sm:$0xff]
  %v164 = vld [vmem:[%s1 + $0x470] sm:$0xff]
  %v165 = vld [vmem:[%s1 + $0x478] sm:$0xff]
  %v166 = vld [vmem:[%s1 + $0x480] sm:$0xff]
  %v167 = vld [vmem:[%s1 + $0x488] sm:$0xff]
  %v168 = vld [vmem:[%s1 + $0x490] sm:$0xff]
  %v169 = vld [vmem:[%s1 + $0x498] sm:$0xff]
  %v170 = vld [vmem:[%s1 + $0x4a0] sm:$0xff]
  %v171 = vld [vmem:[%s1 + $0x4a8] sm:$0xff]
  %v172 = vld [vmem:[%s1 + $0x4b0] sm:$0xff]
  %v173 = vld [vmem:[%s1 + $0x4b8] sm:$0xff]
  %v174 = vld [vmem:[%s1 + $0x4c0] sm:$0xff]
  %v175 = vld [vmem:[%s1 + $0x4c8] sm:$0xff]
  %v176 = vld [vmem:[%s1 + $0x4d0] sm:$0xff]
  %v177 = vld [vmem:[%s1 + $0x4d8] sm:$0xff]
  %v178 = vld [vmem:[%s1 + $0x4e0] sm:$0xff]
  %v179 = vld [vmem:[%s1 + $0x4e8] sm:$0xff]
  %v180 = vld [vmem:[%s1 + $0x4f0] sm:$0xff]
  %v181 = vld [vmem:[%s1 + $0x4f8] sm:$0xff]
  %v182 = vld [vmem:[%s1 + $0x500] sm:$0xff]
  %v183 = vld [vmem:[%s1 + $0x508] sm:$0xff]
  %v184 = vld [vmem:[%s1 + $0x510] sm:$0xff]
  %v185 = vld [vmem:[%s1 + $0x518] sm:$0xff]
  %v186 = vld [vmem:[%s1 + $0x520] sm:$0xff]
  %v187 = vld [vmem:[%s1 + $0x528] sm:$0xff]
  %v188 = vld [vmem:[%s1 + $0x530] sm:$0xff]
  %v189 = vld [vmem:[%s1 + $0x538] sm:$0xff]
  %v190 = vld [vmem:[%s1 + $0x540] sm:$0xff]
  %v191 = vld [vmem:[%s1 + $0x548] sm:$0xff]
  %v192 = vld [vmem:[%s1 + $0x550] sm:$0xff]
  %v193 = vld [vmem:[%s1 + $0x558] sm:$0xff]
  %v194 = vld [vmem:[%s1 + $0x560] sm:$0xff]
  %v195 = vld [vmem:[%s1 + $0x568] sm:$0xff]
  %v196 = vld [vmem:[%s1 + $0x570] sm:$0xff]
  %v197 = vld [vmem:[%s1 + $0x578] sm:$0xff]
  %v198 = vld [vmem:[%s1 + $0x580] sm:$0xff]
  %v199 = vld [vmem:[%s1 + $0x588] sm:$0xff]
  %v200 = vld [vmem:[%s1 + $0x590] sm:$0xff]
  %v201 = vld [vmem:[%s1 + $0x598] sm:$0xff]
  %v202 = vld [vmem:[%s1 + $0x5a0] sm:$0xff]
  %v203 = vld [vmem:[%s1 + $0x5a8] sm:$0xff]
  %v204 = vld [vmem:[%s1 + $0x5b0] sm:$0xff]
  %v205 = vld [vmem:[%s1 + $0x5b8] sm:$0xff]
  %v206 = vld [vmem:[%s1 + $0x5c0] sm:$0xff]
  %v207 = vld [vmem:[%s1 + $0x5c8] sm:$0xff]
  %v208 = vld [vmem:[%s1 + $0x5d0] sm:$0xff]
  %v209 = vld [vmem:[%s1 + $0x5d8] sm:$0xff]
  %v210 = vld [vmem:[%s1 + $0x5e0] sm:$0xff]
  %v211 = vld [vmem:[%s1 + $0x5e8] sm:$0xff]
  %v212 = vld [vmem:[%s1 + $0x5f0] sm:$0xff]
  %v213 = vld [vmem:[%s1 + $0x5f8] sm:$0xff]
  %v214 = vld [vmem:[%s1 + $0x600] sm:$0xff]
  %v215 = vld [vmem:[%s1 + $0x608] sm:$0xff]
  %v216 = vld [vmem:[%s1 + $0x610] sm:$0xff]
  %v217 = vld [vmem:[%s1 + $0x618] sm:$0xff]
  %v218 = vld [vmem:[%s1 + $0x620] sm:$0xff]
  %v219 = vld [vmem:[%s1 + $0x628] sm:$0xff]
  %v220 = vld [vmem:[%s1 + $0x630] sm:$0xff]
  %v221 = vld [vmem:[%s1 + $0x638] sm:$0xff]
  %v222 = vld [vmem:[%s1 + $0x640] sm:$0xff]
  %v223 = vld [vmem:[%s1 + $0x648] sm:$0xff]
  %v224 = vld [vmem:[%s1 + $0x650] sm:$0xff]
  %v225 = vld [vmem:[%s1 + $0x658] sm:$0xff]
  %v226 = vld [vmem:[%s1 + $0x660] sm:$0xff]
  %v227 = vld [vmem:[%s1 + $0x668] sm:$0xff]
  %v228 = vld [vmem:[%s1 + $0x670] sm:$0xff]
  %v229 = vld [vmem:[%s1 + $0x678] sm:$0xff]
  %v230 = vld [vmem:[%s1 + $0x680] sm:$0xff]
  %v231 = vld [vmem:[%s1 + $0x688] sm:$0xff]
  %v232 = vld [vmem:[%s1 + $0x690] sm:$0xff]
  %v233 = vld [vmem:[%s1 + $0x698] sm:$0xff]
  %v234 = vld [vmem:[%s1 + $0x6a0] sm:$0xff]
  %v235 = vld [vmem:[%s1 + $0x6a8] sm:$0xff]
  %v236 = vld [vmem:[%s1 + $0x6b0] sm:$0xff]
  %v237 = vld [vmem:[%s1 + $0x6b8] sm:$0xff]
  %v238 = vld [vmem:[%s1 + $0x6c0] sm:$0xff]
  %v239 = vld [vmem:[%s1 + $0x6c8] sm:$0xff]
  %v240 = vld [vmem:[%s1 + $0x6d0] sm:$0xff]
  %v241 = vld [vmem:[%s1 + $0x6d8] sm:$0xff]
  %v242 = vld [vmem:[%s1 + $0x6e0] sm:$0xff]
  %v243 = vld [vmem:[%s1 + $0x6e8] sm:$0xff]
  %v244 = vld [vmem:[%s1 + $0x6f0] sm:$0xff]
  %v245 = vld [vmem:[%s1 + $0x6f8] sm:$0xff]
  %v246 = vld [vmem:[%s1 + $0x700] sm:$0xff]
  %v247 = vld [vmem:[%s1 + $0x708] sm:$0xff]
  %v248 = vld [vmem:[%s1 + $0x710] sm:$0xff]
  %v249 = vld [vmem:[%s1 + $0x718] sm:$0xff]
  %v250 = vld [vmem:[%s1 + $0x720] sm:$0xff]
  %v251 = vld [vmem:[%s1 + $0x728] sm:$0xff]
  %v252 = vld [vmem:[%s1 + $0x730] sm:$0xff]
  %v253 = vld [vmem:[%s1 + $0x738] sm:$0xff]
  %v254 = vld [vmem:[%s1 + $0x740] sm:$0xff]
  %v255 = vld [vmem:[%s1 + $0x748] sm:$0xff]
  %v256 = vld [vmem:[%s1 + $0x750] sm:$0xff]
  %v257 = vld [vmem:[%s1 + $0x758] sm:$0xff]
  %v258 = vld [vmem:[%s1 + $0x760] sm:$0xff]
  %v259 = vld [vmem:[%s1 + $0x768] sm:$0xff]
  %v260 = vld [vmem:[%s1 + $0x770] sm:$0xff]
  %v261 = vld [vmem:[%s1 + $0x778] sm:$0xff]
  %v262 = vld [vmem:[%s1 + $0x780] sm:$0xff]
  %v263 = vld [vmem:[%s1 + $0x788] sm:$0xff]
  %v264 = vld [vmem:[%s1 + $0x790] sm:$0xff]
  %v265 = vld [vmem:[%s1 + $0x798] sm:$0xff]
  %v266 = vld [vmem:[%s1 + $0x7a0] sm:$0xff]
  %v267 = vld [vmem:[%s1 + $0x7a8] sm:$0xff]
  %v268 = vld [vmem:[%s1 + $0x7b0] sm:$0xff]
  %v269 = vld [vmem:[%s1 + $0x7b8] sm:$0xff]
  %v270 = vld [vmem:[%s1 + $0x7c0] sm:$0xff]
  %v271 = vld [vmem:[%s1 + $0x7c8] sm:$0xff]
  %v272 = vld [vmem:[%s1 + $0x7d0] sm:$0xff]
  %v273 = vld [vmem:[%s1 + $0x7d8] sm:$0xff]
  %v274 = vld [vmem:[%s1 + $0x7e0] sm:$0xff]
  %v275 = vld [vmem:[%s1 + $0x7e8] sm:$0xff]
  %v276 = vld [vmem:[%s1 + $0x7f0] sm:$0xff]
  %v277 = vld [vmem:[%s1 + $0x7f8] sm:$0xff]
  %v278 = vld [vmem:[%s1 + $0x800] sm:$0xff]
  %v279 = vld [vmem:[%s1 + $0x808] sm:$0xff]
  %v280 = vld [vmem:[%s1 + $0x810] sm:$0xff]
  %v281 = vld [vmem:[%s1 + $0x818] sm:$0xff]
  %v282 = vld [vmem:[%s1 + $0x820] sm:$0xff]
  %v283 = vld [vmem:[%s1 + $0x828] sm:$0xff]
  %v284 = vld [vmem:[%s1 + $0x830] sm:$0xff]
  %v285 = vld [vmem:[%s1 + $0x838] sm:$0xff]
  %v286 = vld [vmem:[%s1 + $0x840] sm:$0xff]
  %v287 = vld [vmem:[%s1 + $0x848] sm:$0xff]
  %v288 = vld [vmem:[%s1 + $0x850] sm:$0xff]
  %v289 = vld [vmem:[%s1 + $0x858] sm:$0xff]
  %v290 = vld [vmem:[%s1 + $0x860] sm:$0xff]
  %v291 = vld [vmem:[%s1 + $0x868] sm:$0xff]
  %v292 = vld [vmem:[%s1 + $0x870] sm:$0xff]
  %v293 = vld [vmem:[%s1 + $0x878] sm:$0xff]
  %v294 = vld [vmem:[%s1 + $0x880] sm:$0xff]
  %v295 = vld [vmem:[%s1 + $0x888] sm:$0xff]
  %v296 = vld [vmem:[%s1 + $0x890] sm:$0xff]
  %v297 = vld [vmem:[%s1 + $0x898] sm:$0xff]
  %v298 = vld [vmem:[%s1 + $0x8a0] sm:$0xff]
  %v299 = vld [vmem:[%s1 + $0x8a8] sm:$0xff]
  %v300 = vld [vmem:[%s1 + $0x8b0] sm:$0xff]
  %v301 = vld [vmem:[%s1 + $0x8b8] sm:$0xff]
  %v302 = vld [vmem:[%s1 + $0x8c0] sm:$0xff]
  %v303 = vld [vmem:[%s1 + $0x8c8] sm:$0xff]
  %v304 = vld [vmem:[%s1 + $0x8d0] sm:$0xff]
  %v305 = vld [vmem:[%s1 + $0x8d8] sm:$0xff]
  %v306 = vld [vmem:[%s1 + $0x8e0] sm:$0xff]
  %v307 = vld [vmem:[%s1 + $0x8e8] sm:$0xff]
  %v308 = vld [vmem:[%s1 + $0x8f0] sm:$0xff]
  %v309 = vld [vmem:[%s1 + $0x8f8] sm:$0xff]
  %v310 = vld [vmem:[%s1 + $0x900] sm:$0xff]
  %v311 = vld [vmem:[%s1 + $0x908] sm:$0xff]
  %v312 = vld [vmem:[%s1 + $0x910] sm:$0xff]
  %v313 = vld [vmem:[%s1 + $0x918] sm:$0xff]
  %v314 = vld [vmem:[%s1 + $0x920] sm:$0xff]
  %v315 = vld [vmem:[%s1 + $0x928] sm:$0xff]
  %v316 = vld [vmem:[%s1 + $0x930] sm:$0xff]
  %v317 = vld [vmem:[%s1 + $0x938] sm:$0xff]
  %v318 = vld [vmem:[%s1 + $0x940] sm:$0xff]
  %v319 = vld [vmem:[%s1 + $0x948] sm:$0xff]
  %v320 = vld [vmem:[%s1 + $0x950] sm:$0xff]
  %v321 = vld [vmem:[%s1 + $0x958] sm:$0xff]
  %v322 = vld [vmem:[%s1 + $0x960] sm:$0xff]
  %v323 = vld [vmem:[%s1 + $0x968] sm:$0xff]
  %v324 = vld [vmem:[%s1 + $0x970] sm:$0xff]
  %v325 = vld [vmem:[%s1 + $0x978] sm:$0xff]
  %v326 = vld [vmem:[%s1 + $0x980] sm:$0xff]
  %v327 = vld [vmem:[%s1 + $0x988] sm:$0xff]
  %v328 = vld [vmem:[%s1 + $0x990] sm:$0xff]
  %v329 = vld [vmem:[%s1 + $0x998] sm:$0xff]
  %v330 = vld [vmem:[%s1 + $0x9a0] sm:$0xff]
  %v331 = vld [vmem:[%s1 + $0x9a8] sm:$0xff]
  %v332 = vld [vmem:[%s1 + $0x9b0] sm:$0xff]
  %v333 = vld [vmem:[%s1 + $0x9b8] sm:$0xff]
  %v334 = vld [vmem:[%s1 + $0x9c0] sm:$0xff]
  %v335 = vld [vmem:[%s1 + $0x9c8] sm:$0xff]
  %v336 = vld [vmem:[%s1 + $0x9d0] sm:$0xff]
  %v337 = vld [vmem:[%s1 + $0x9d8] sm:$0xff]
  %v338 = vld [vmem:[%s1 + $0x9e0] sm:$0xff]
  %v339 = vld [vmem:[%s1 + $0x9e8] sm:$0xff]
  %v340 = vld [vmem:[%s1 + $0x9f0] sm:$0xff]
  %v341 = vld [vmem:[%s1 + $0x9f8] sm:$0xff]
  %v342 = vld [vmem:[%s1 + $0xa00] sm:$0xff]
  %v343 = vld [vmem:[%s1 + $0xa08] sm:$0xff]
  %v344 = vld [vmem:[%s1 + $0xa10] sm:$0xff]
  %v345 = vld [vmem:[%s1 + $0xa18] sm:$0xff]
  %v346 = vld [vmem:[%s1 + $0xa20] sm:$0xff]
  %v347 = vld [vmem:[%s1 + $0xa28] sm:$0xff]
  %v348 = vld [vmem:[%s1 + $0xa30] sm:$0xff]
  %v349 = vld [vmem:[%s1 + $0xa38] sm:$0xff]
  %v350 = vld [vmem:[%s1 + $0xa40] sm:$0xff]
  %v351 = vld [vmem:[%s1 + $0xa48] sm:$0xff]
  %v352 = vld [vmem:[%s1 + $0xa50] sm:$0xff]
  %v353 = vld [vmem:[%s1 + $0xa58] sm:$0xff]
  %v354 = vld [vmem:[%s1 + $0xa60] sm:$0xff]
  %v355 = vld [vmem:[%s1 + $0xa68] sm:$0xff]
  %v356 = vld [vmem:[%s1 + $0xa70] sm:$0xff]
  %v357 = vld [vmem:[%s1 + $0xa78] sm:$0xff]
  %v358 = vld [vmem:[%s1 + $0xa80] sm:$0xff]
  %v359 = vld [vmem:[%s1 + $0xa88] sm:$0xff]
  %v360 = vld [vmem:[%s1 + $0xa90] sm:$0xff]
  %v361 = vld [vmem:[%s1 + $0xa98] sm:$0xff]
  %v362 = vld [vmem:[%s1 + $0xaa0] sm:$0xff]
  %v363 = vld [vmem:[%s1 + $0xaa8] sm:$0xff]
  %v364 = vld [vmem:[%s1 + $0xab0] sm:$0xff]
  %v365 = vld [vmem:[%s1 + $0xab8] sm:$0xff]
  %v366 = vld [vmem:[%s1 + $0xac0] sm:$0xff]
  %v367 = vld [vmem:[%s1 + $0xac8] sm:$0xff]
  %v368 = vld [vmem:[%s1 + $0xad0] sm:$0xff]
  %v369 = vld [vmem:[%s1 + $0xad8] sm:$0xff]
  %v370 = vld [vmem:[%s1 + $0xae0] sm:$0xff]
  %v371 = vld [vmem:[%s1 + $0xae8] sm:$0xff]
  %v372 = vld [vmem:[%s1 + $0xaf0] sm:$0xff]
  %v373 = vld [vmem:[%s1 + $0xaf8] sm:$0xff]
  %v374 = vld [vmem:[%s1 + $0xb00] sm:$0xff]
  %v375 = vld [vmem:[%s1 + $0xb08] sm:$0xff]
  %v376 = vld [vmem:[%s1 + $0xb10] sm:$0xff]
  %v377 = vld [vmem:[%s1 + $0xb18] sm:$0xff]
  %v378 = vld [vmem:[%s1 + $0xb20] sm:$0xff]
  %v379 = vld [vmem:[%s1 + $0xb28] sm:$0xff]
  %v380 = vld [vmem:[%s1 + $0xb30] sm:$0xff]
  %v381 = vld [vmem:[%s1 + $0xb38] sm:$0xff]
  %v382 = vld [vmem:[%s1 + $0xb40] sm:$0xff]
  %v383 = vld [vmem:[%s1 + $0xb48] sm:$0xff]
  %v384 = vld [vmem:[%s1 + $0xb50] sm:$0xff]
  %v385 = vld [vmem:[%s1 + $0xb58] sm:$0xff]
  %v386 = vld [vmem:[%s1 + $0xb60] sm:$0xff]
  %v387 = vld [vmem:[%s1 + $0xb68] sm:$0xff]
  %v388 = vld [vmem:[%s1 + $0xb70] sm:$0xff]
  %v389 = vld [vmem:[%s1 + $0xb78] sm:$0xff]
  %v390 = vld [vmem:[%s1 + $0xb80] sm:$0xff]
  %v391 = vld [vmem:[%s1 + $0xb88] sm:$0xff]
  %v392 = vld [vmem:[%s1 + $0xb90] sm:$0xff]
  %v393 = vld [vmem:[%s1 + $0xb98] sm:$0xff]
  %v394 = vld [vmem:[%s1 + $0xba0] sm:$0xff]
  %v395 = vld [vmem:[%s1 + $0xba8] sm:$0xff]
  %v396 = vld [vmem:[%s1 + $0xbb0] sm:$0xff]
  %v397 = vld [vmem:[%s1 + $0xbb8] sm:$0xff]
  %v398 = vld [vmem:[%s1 + $0xbc0] sm:$0xff]
  %v399 = vld [vmem:[%s1 + $0xbc8] sm:$0xff]
  %v400 = vld [vmem:[%s1 + $0xbd0] sm:$0xff]
  %v401 = vld [vmem:[%s1 + $0xbd8] sm:$0xff]
  %v402 = vld [vmem:[%s1 + $0xbe0] sm:$0xff]
  %v403 = vld [vmem:[%s1 + $0xbe8] sm:$0xff]
  %v404 = vld [vmem:[%s1 + $0xbf0] sm:$0xff]
  %v405 = vld [vmem:[%s1 + $0xbf8] sm:$0xff]
  %v406 = vld [vmem:[%s1 + $0xc00] sm:$0xff]
  %v407 = vld [vmem:[%s1 + $0xc08] sm:$0xff]
  %v408 = vld [vmem:[%s1 + $0xc10] sm:$0xff]
  %v409 = vld [vmem:[%s1 + $0xc18] sm:$0xff]
  %v410 = vld [vmem:[%s1 + $0xc20] sm:$0xff]
  %v411 = vld [vmem:[%s1 + $0xc28] sm:$0xff]
  %v412 = vld [vmem:[%s1 + $0xc30] sm:$0xff]
  %v413 = vld [vmem:[%s1 + $0xc38] sm:$0xff]
  %v414 = vld [vmem:[%s1 + $0xc40] sm:$0xff]
  %v415 = vld [vmem:[%s1 + $0xc48] sm:$0xff]
  %v416 = vld [vmem:[%s1 + $0xc50] sm:$0xff]
  %v417 = vld [vmem:[%s1 + $0xc58] sm:$0xff]
  %v418 = vld [vmem:[%s1 + $0xc60] sm:$0xff]
  %v419 = vld [vmem:[%s1 + $0xc68] sm:$0xff]
  %v420 = vld [vmem:[%s1 + $0xc70] sm:$0xff]
  %v421 = vld [vmem:[%s1 + $0xc78] sm:$0xff]
  %v422 = vld [vmem:[%s1 + $0xc80] sm:$0xff]
  %v423 = vld [vmem:[%s1 + $0xc88] sm:$0xff]
  %v424 = vld [vmem:[%s1 + $0xc90] sm:$0xff]
  %v425 = vld [vmem:[%s1 + $0xc98] sm:$0xff]
  %v426 = vld [vmem:[%s1 + $0xca0] sm:$0xff]
  %v427 = vld [vmem:[%s1 + $0xca8] sm:$0xff]
  %v428 = vld [vmem:[%s1 + $0xcb0] sm:$0xff]
  %v429 = vld [vmem:[%s1 + $0xcb8] sm:$0xff]
  %v430 = vld [vmem:[%s1 + $0xcc0] sm:$0xff]
  %v431 = vld [vmem:[%s1 + $0xcc8] sm:$0xff]
  %v432 = vld [vmem:[%s1 + $0xcd0] sm:$0xff]
  %v433 = vld [vmem:[%s1 + $0xcd8] sm:$0xff]
  %v434 = vld [vmem:[%s1 + $0xce0] sm:$0xff]
  %v435 = vld [vmem:[%s1 + $0xce8] sm:$0xff]
  %v436 = vld [vmem:[%s1 + $0xcf0] sm:$0xff]
  %v437 = vld [vmem:[%s1 + $0xcf8] sm:$0xff]
  %v438 = vld [vmem:[%s1 + $0xd00] sm:$0xff]
  %v439 = vld [vmem:[%s1 + $0xd08] sm:$0xff]
  %v440 = vld [vmem:[%s1 + $0xd10] sm:$0xff]
  %v441 = vld [vmem:[%s1 + $0xd18] sm:$0xff]
  %v442 = vld [vmem:[%s1 + $0xd20] sm:$0xff]
  %v443 = vld [vmem:[%s1 + $0xd28] sm:$0xff]
  %v444 = vld [vmem:[%s1 + $0xd30] sm:$0xff]
  %v445 = vld [vmem:[%s1 + $0xd38] sm:$0xff]
  %v446 = vld [vmem:[%s1 + $0xd40] sm:$0xff]
  %v447 = vld [vmem:[%s1 + $0xd48] sm:$0xff]
  %v448 = vld [vmem:[%s1 + $0xd50] sm:$0xff]
  %v449 = vld [vmem:[%s1 + $0xd58] sm:$0xff]
  %v450 = vld [vmem:[%s1 + $0xd60] sm:$0xff]
  %v451 = vld [vmem:[%s1 + $0xd68] sm:$0xff]
  %v452 = vld [vmem:[%s1 + $0xd70] sm:$0xff]
  %v453 = vld [vmem:[%s1 + $0xd78] sm:$0xff]
  %v454 = vld [vmem:[%s1 + $0xd80] sm:$0xff]
  %v455 = vld [vmem:[%s1 + $0xd88] sm:$0xff]
  %v456 = vld [vmem:[%s1 + $0xd90] sm:$0xff]
  %v457 = vld [vmem:[%s1 + $0xd98] sm:$0xff]
  %v458 = vld [vmem:[%s1 + $0xda0] sm:$0xff]
  %v459 = vld [vmem:[%s1 + $0xda8] sm:$0xff]
  %v460 = vld [vmem:[%s1 + $0xdb0] sm:$0xff]
  %v461 = vld [vmem:[%s1 + $0xdb8] sm:$0xff]
  %v462 = vld [vmem:[%s1 + $0xdc0] sm:$0xff]
  %v463 = vld [vmem:[%s1 + $0xdc8] sm:$0xff]
  %v464 = vld [vmem:[%s1 + $0xdd0] sm:$0xff]
  %v465 = vld [vmem:[%s1 + $0xdd8] sm:$0xff]
  %v466 = vld [vmem:[%s1 + $0xde0] sm:$0xff]
  %v467 = vld [vmem:[%s1 + $0xde8] sm:$0xff]
  %v468 = vld [vmem:[%s1 + $0xdf0] sm:$0xff]
  %v469 = vld [vmem:[%s1 + $0xdf8] sm:$0xff]
  %v470 = vld [vmem:[%s1 + $0xe00] sm:$0xff]
  %v471 = vld [vmem:[%s1 + $0xe08] sm:$0xff]
  %v472 = vld [vmem:[%s1 + $0xe10] sm:$0xff]
  %v473 = vld [vmem:[%s1 + $0xe18] sm:$0xff]
  %v474 = vld [vmem:[%s1 + $0xe20] sm:$0xff]
  %v475 = vld [vmem:[%s1 + $0xe28] sm:$0xff]
  %v476 = vld [vmem:[%s1 + $0xe30] sm:$0xff]
  %v477 = vld [vmem:[%s1 + $0xe38] sm:$0xff]
  %v478 = vld [vmem:[%s1 + $0xe40] sm:$0xff]
  %v479 = vld [vmem:[%s1 + $0xe48] sm:$0xff]
  %v480 = vld [vmem:[%s1 + $0xe50] sm:$0xff]
  %v481 = vld [vmem:[%s1 + $0xe58] sm:$0xff]
  %v482 = vld [vmem:[%s1 + $0xe60] sm:$0xff]
  %v483 = vld [vmem:[%s1 + $0xe68] sm:$0xff]
  %v484 = vld [vmem:[%s1 + $0xe70] sm:$0xff]
  %v485 = vld [vmem:[%s1 + $0xe78] sm:$0xff]
  %v486 = vld [vmem:[%s1 + $0xe80] sm:$0xff]
  %v487 = vld [vmem:[%s1 + $0xe88] sm:$0xff]
  %v488 = vld [vmem:[%s1 + $0xe90] sm:$0xff]
  %v489 = vld [vmem:[%s1 + $0xe98] sm:$0xff]
  %v490 = vld [vmem:[%s1 + $0xea0] sm:$0xff]
  %v491 = vld [vmem:[%s1 + $0xea8] sm:$0xff]
  %v492 = vld [vmem:[%s1 + $0xeb0] sm:$0xff]
  %v493 = vld [vmem:[%s1 + $0xeb8] sm:$0xff]
  %v494 = vld [vmem:[%s1 + $0xec0] sm:$0xff]
  %v495 = vld [vmem:[%s1 + $0xec8] sm:$0xff]
  %v496 = vld [vmem:[%s1 + $0xed0] sm:$0xff]
  %v497 = vld [vmem:[%s1 + $0xed8] sm:$0xff]
  %v498 = vld [vmem:[%s1 + $0xee0] sm:$0xff]
  %v499 = vld [vmem:[%s1 + $0xee8] sm:$0xff]
  %v500 = vld [vmem:[%s1 + $0xef0] sm:$0xff]
  %v501 = vld [vmem:[%s1 + $0xef8] sm:$0xff]
  %v502 = vld [vmem:[%s1 + $0xf00] sm:$0xff]
  %v503 = vld [vmem:[%s1 + $0xf08] sm:$0xff]
  %v504 = vld [vmem:[%s1 + $0xf10] sm:$0xff]
  %v505 = vld [vmem:[%s1 + $0xf18] sm:$0xff]
  %v506 = vld [vmem:[%s1 + $0xf20] sm:$0xff]
  %v507 = vld [vmem:[%s1 + $0xf28] sm:$0xff]
  %v508 = vld [vmem:[%s1 + $0xf30] sm:$0xff]
  %v509 = vld [vmem:[%s1 + $0xf38] sm:$0xff]
  %v510 = vld [vmem:[%s1 + $0xf40] sm:$0xff]
  %v511 = vld [vmem:[%s1 + $0xf48] sm:$0xff]
  %v512 = vld [vmem:[%s1 + $0xf50] sm:$0xff]
  %v513 = vld [vmem:[%s1 + $0xf58] sm:$0xff]
  %v514 = vld [vmem:[%s1 + $0xf60] sm:$0xff]
  %v515 = vld [vmem:[%s1 + $0xf68] sm:$0xff]
  %v516 = vld [vmem:[%s1 + $0xf70] sm:$0xff]
  %v517 = vld [vmem:[%s1 + $0xf78] sm:$0xff]
  %v518 = vld [vmem:[%s1 + $0xf80] sm:$0xff]
  %v519 = vld [vmem:[%s1 + $0xf88] sm:$0xff]
  %v520 = vld [vmem:[%s1 + $0xf90] sm:$0xff]
  %v521 = vld [vmem:[%s1 + $0xf98] sm:$0xff]
  %v522 = vld [vmem:[%s1 + $0xfa0] sm:$0xff]
  %v523 = vld [vmem:[%s1 + $0xfa8] sm:$0xff]
  %v524 = vld [vmem:[%s1 + $0xfb0] sm:$0xff]
  %v525 = vld [vmem:[%s1 + $0xfb8] sm:$0xff]
  %v526 = vld [vmem:[%s1 + $0xfc0] sm:$0xff]
  %v527 = vld [vmem:[%s1 + $0xfc8] sm:$0xff]
  %v528 = vld [vmem:[%s1 + $0xfd0] sm:$0xff]
  %v529 = vld [vmem:[%s1 + $0xfd8] sm:$0xff]
  %v530 = vld [vmem:[%s1 + $0xfe0] sm:$0xff]
  %v531 = vld [vmem:[%s1 + $0xfe8] sm:$0xff]
  %v532 = vld [vmem:[%s1 + $0xff0] sm:$0xff]
  %v533 = vld [vmem:[%s1 + $0xff8] sm:$0xff]
  %v534 = vld [vmem:[%s2] sm:$0x1]
  %v536 = vperm.slane %v534, 0
  %546 = vst [vmem:[#allocation1] ss:$4 sm:$0xff] %v14
  %s547 = scalar_lea.vmem [#allocation1], 32
  %548 = vst [vmem:[%s547] ss:$4 sm:$0xff] %v15
  %v549 = vld.sshfl [vmem:[#allocation1] sm:$0xff pattern:$0x73625140]
  %v550 = vld.sshfl [vmem:[#allocation1 + $0x8] sm:$0xff pattern:$0x73625140]
  %v551 = vld.sshfl [vmem:[#allocation1 + $0x10] sm:$0xff pattern:$0x73625140]
  %v552 = vld.sshfl [vmem:[#allocation1 + $0x18] sm:$0xff pattern:$0x73625140]
  %v553 = vld.sshfl [vmem:[#allocation1 + $0x20] sm:$0xff pattern:$0x73625140]
  %v554 = vld.sshfl [vmem:[#allocation1 + $0x28] sm:$0xff pattern:$0x73625140]
  %v555 = vld.sshfl [vmem:[#allocation1 + $0x30] sm:$0xff pattern:$0x73625140]
  %v556 = vld.sshfl [vmem:[#allocation1 + $0x38] sm:$0xff pattern:$0x73625140]
  %557 = vst [vmem:[#allocation1] ss:$4 sm:$0xff] %v16
  %558 = vst [vmem:[%s547] ss:$4 sm:$0xff] %v17
  %v559 = vld.sshfl [vmem:[#allocation1] sm:$0xff pattern:$0x73625140]
  %v560 = vld.sshfl [vmem:[#allocation1 + $0x8] sm:$0xff pattern:$0x73625140]
  %v561 = vld.sshfl [vmem:[#allocation1 + $0x10] sm:$0xff pattern:$0x73625140]
  %v562 = vld.sshfl [vmem:[#allocation1 + $0x18] sm:$0xff pattern:$0x73625140]
  %v563 = vld.sshfl [vmem:[#allocation1 + $0x20] sm:$0xff pattern:$0x73625140]
  %v564 = vld.sshfl [vmem:[#allocation1 + $0x28] sm:$0xff pattern:$0x73625140]
  %v565 = vld.sshfl [vmem:[#allocation1 + $0x30] sm:$0xff pattern:$0x73625140]
  %v566 = vld.sshfl [vmem:[#allocation1 + $0x38] sm:$0xff pattern:$0x73625140]
  %567 = vst [vmem:[#allocation1] ss:$4 sm:$0xff] %v18
  %568 = vst [vmem:[%s547] ss:$4 sm:$0xff] %v19
  %v569 = vld.sshfl [vmem:[#allocation1] sm:$0xff pattern:$0x73625140]
  %v570 = vld.sshfl [vmem:[#allocation1 + $0x8] sm:$0xff pattern:$0x73625140]
  %v571 = vld.sshfl [vmem:[#allocation1 + $0x10] sm:$0xff pattern:$0x73625140]
  %v572 = vld.sshfl [vmem:[#allocation1 + $0x18] sm:$0xff pattern:$0x73625140]
  %v573 = vld.sshfl [vmem:[#allocation1 + $0x20] sm:$0xff pattern:$0x73625140]
  %v574 = vld.sshfl [vmem:[#allocation1 + $0x28] sm:$0xff pattern:$0x73625140]
  %v575 = vld.sshfl [vmem:[#allocation1 + $0x30] sm:$0xff pattern:$0x73625140]
  %v576 = vld.sshfl [vmem:[#allocation1 + $0x38] sm:$0xff pattern:$0x73625140]
  %577 = vst [vmem:[#allocation1] ss:$4 sm:$0xff] %v20
  %578 = vst [vmem:[%s547] ss:$4 sm:$0xff] %v21
  %v579 = vld.sshfl [vmem:[#allocation1] sm:$0xff pattern:$0x73625140]
  %v580 = vld.sshfl [vmem:[#allocation1 + $0x8] sm:$0xff pattern:$0x73625140]
  %v581 = vld.sshfl [vmem:[#allocation1 + $0x10] sm:$0xff pattern:$0x73625140]
  %v582 = vld.sshfl [vmem:[#allocation1 + $0x18] sm:$0xff pattern:$0x73625140]
  %v583 = vld.sshfl [vmem:[#allocation1 + $0x20] sm:$0xff pattern:$0x73625140]
  %v584 = vld.sshfl [vmem:[#allocation1 + $0x28] sm:$0xff pattern:$0x73625140]
  %v585 = vld.sshfl [vmem:[#allocation1 + $0x30] sm:$0xff pattern:$0x73625140]
  %v586 = vld.sshfl [vmem:[#allocation1 + $0x38] sm:$0xff pattern:$0x73625140]
  %619 = vmatpush.msra.mxu0 %v37
  %620 = vmatpush.msra.mxu0 %v36
  %621 = vmatpush.msra.mxu0 %v35
  %622 = vmatpush.msra.mxu0 %v34
  %623 = vmatpush.msra.mxu0 %v33
  %624 = vmatpush.msra.mxu0 %v32
  %625 = vmatpush.msra.mxu0 %v31
  %626 = vmatpush.msra.mxu0 %v30
  %627 = vmatpush.msra.mxu0 %v29
  %628 = vmatpush.msra.mxu0 %v28
  %629 = vmatpush.msra.mxu0 %v27
  %630 = vmatpush.msra.mxu0 %v26
  %631 = vmatpush.msra.mxu0 %v25
  %632 = vmatpush.msra.mxu0 %v24
  %633 = vmatpush.msra.mxu0 %v23
  %634 = vmatpush.msra.mxu0 %v22
  %635 = vmatmul.f32.gmra.mxu0 %v549
  %v636 = vpop.f32.mrf.mxu0
  %v637 = vadd.f32 %v536, %v636
  %638 = vdwg.mxu0
  %639 = vmatpush.msra.mxu0 %v53
  %640 = vmatpush.msra.mxu0 %v52
  %641 = vmatpush.msra.mxu0 %v51
  %642 = vmatpush.msra.mxu0 %v50
  %643 = vmatpush.msra.mxu0 %v49
  %644 = vmatpush.msra.mxu0 %v48
  %645 = vmatpush.msra.mxu0 %v47
  %646 = vmatpush.msra.mxu0 %v46
  %647 = vmatpush.msra.mxu0 %v45
  %648 = vmatpush.msra.mxu0 %v44
  %649 = vmatpush.msra.mxu0 %v43
  %650 = vmatpush.msra.mxu0 %v42
  %651 = vmatpush.msra.mxu0 %v41
  %652 = vmatpush.msra.mxu0 %v40
  %653 = vmatpush.msra.mxu0 %v39
  %654 = vmatpush.msra.mxu0 %v38
  %655 = vmatmul.f32.gmra.mxu0 %v550
  %v656 = vpop.f32.mrf.mxu0
  %v657 = vadd.f32 %v637, %v656
  %658 = vdwg.mxu0
  %659 = vmatpush.msra.mxu0 %v69
  %660 = vmatpush.msra.mxu0 %v68
  %661 = vmatpush.msra.mxu0 %v67
  %662 = vmatpush.msra.mxu0 %v66
  %663 = vmatpush.msra.mxu0 %v65
  %664 = vmatpush.msra.mxu0 %v64
  %665 = vmatpush.msra.mxu0 %v63
  %666 = vmatpush.msra.mxu0 %v62
  %667 = vmatpush.msra.mxu0 %v61
  %668 = vmatpush.msra.mxu0 %v60
  %669 = vmatpush.msra.mxu0 %v59
  %670 = vmatpush.msra.mxu0 %v58
  %671 = vmatpush.msra.mxu0 %v57
  %672 = vmatpush.msra.mxu0 %v56
  %673 = vmatpush.msra.mxu0 %v55
  %674 = vmatpush.msra.mxu0 %v54
  %675 = vmatmul.f32.gmra.mxu0 %v551
  %v676 = vpop.f32.mrf.mxu0
  %v677 = vadd.f32 %v657, %v676
  %678 = vdwg.mxu0
  %679 = vmatpush.msra.mxu0 %v85
  %680 = vmatpush.msra.mxu0 %v84
  %681 = vmatpush.msra.mxu0 %v83
  %682 = vmatpush.msra.mxu0 %v82
  %683 = vmatpush.msra.mxu0 %v81
  %684 = vmatpush.msra.mxu0 %v80
  %685 = vmatpush.msra.mxu0 %v79
  %686 = vmatpush.msra.mxu0 %v78
  %687 = vmatpush.msra.mxu0 %v77
  %688 = vmatpush.msra.mxu0 %v76
  %689 = vmatpush.msra.mxu0 %v75
  %690 = vmatpush.msra.mxu0 %v74
  %691 = vmatpush.msra.mxu0 %v73
  %692 = vmatpush.msra.mxu0 %v72
  %693 = vmatpush.msra.mxu0 %v71
  %694 = vmatpush.msra.mxu0 %v70
  %695 = vmatmul.f32.gmra.mxu0 %v552
  %v696 = vpop.f32.mrf.mxu0
  %v697 = vadd.f32 %v677, %v696
  %698 = vdwg.mxu0
  %699 = vmatpush.msra.mxu0 %v101
  %700 = vmatpush.msra.mxu0 %v100
  %701 = vmatpush.msra.mxu0 %v99
  %702 = vmatpush.msra.mxu0 %v98
  %703 = vmatpush.msra.mxu0 %v97
  %704 = vmatpush.msra.mxu0 %v96
  %705 = vmatpush.msra.mxu0 %v95
  %706 = vmatpush.msra.mxu0 %v94
  %707 = vmatpush.msra.mxu0 %v93
  %708 = vmatpush.msra.mxu0 %v92
  %709 = vmatpush.msra.mxu0 %v91
  %710 = vmatpush.msra.mxu0 %v90
  %711 = vmatpush.msra.mxu0 %v89
  %712 = vmatpush.msra.mxu0 %v88
  %713 = vmatpush.msra.mxu0 %v87
  %714 = vmatpush.msra.mxu0 %v86
  %715 = vmatmul.f32.gmra.mxu0 %v553
  %v716 = vpop.f32.mrf.mxu0
  %v717 = vadd.f32 %v697, %v716
  %718 = vdwg.mxu0
  %719 = vmatpush.msra.mxu0 %v117
  %720 = vmatpush.msra.mxu0 %v116
  %721 = vmatpush.msra.mxu0 %v115
  %722 = vmatpush.msra.mxu0 %v114
  %723 = vmatpush.msra.mxu0 %v113
  %724 = vmatpush.msra.mxu0 %v112
  %725 = vmatpush.msra.mxu0 %v111
  %726 = vmatpush.msra.mxu0 %v110
  %727 = vmatpush.msra.mxu0 %v109
  %728 = vmatpush.msra.mxu0 %v108
  %729 = vmatpush.msra.mxu0 %v107
  %730 = vmatpush.msra.mxu0 %v106
  %731 = vmatpush.msra.mxu0 %v105
  %732 = vmatpush.msra.mxu0 %v104
  %733 = vmatpush.msra.mxu0 %v103
  %734 = vmatpush.msra.mxu0 %v102
  %735 = vmatmul.f32.gmra.mxu0 %v554
  %v736 = vpop.f32.mrf.mxu0
  %v737 = vadd.f32 %v717, %v736
  %738 = vdwg.mxu0
  %739 = vmatpush.msra.mxu0 %v133
  %740 = vmatpush.msra.mxu0 %v132
  %741 = vmatpush.msra.mxu0 %v131
  %742 = vmatpush.msra.mxu0 %v130
  %743 = vmatpush.msra.mxu0 %v129
  %744 = vmatpush.msra.mxu0 %v128
  %745 = vmatpush.msra.mxu0 %v127
  %746 = vmatpush.msra.mxu0 %v126
  %747 = vmatpush.msra.mxu0 %v125
  %748 = vmatpush.msra.mxu0 %v124
  %749 = vmatpush.msra.mxu0 %v123
  %750 = vmatpush.msra.mxu0 %v122
  %751 = vmatpush.msra.mxu0 %v121
  %752 = vmatpush.msra.mxu0 %v120
  %753 = vmatpush.msra.mxu0 %v119
  %754 = vmatpush.msra.mxu0 %v118
  %755 = vmatmul.f32.gmra.mxu0 %v555
  %v756 = vpop.f32.mrf.mxu0
  %v757 = vadd.f32 %v737, %v756
  %758 = vdwg.mxu0
  %759 = vmatpush.msra.mxu0 %v149
  %760 = vmatpush.msra.mxu0 %v148
  %761 = vmatpush.msra.mxu0 %v147
  %762 = vmatpush.msra.mxu0 %v146
  %763 = vmatpush.msra.mxu0 %v145
  %764 = vmatpush.msra.mxu0 %v144
  %765 = vmatpush.msra.mxu0 %v143
  %766 = vmatpush.msra.mxu0 %v142
  %767 = vmatpush.msra.mxu0 %v141
  %768 = vmatpush.msra.mxu0 %v140
  %769 = vmatpush.msra.mxu0 %v139
  %770 = vmatpush.msra.mxu0 %v138
  %771 = vmatpush.msra.mxu0 %v137
  %772 = vmatpush.msra.mxu0 %v136
  %773 = vmatpush.msra.mxu0 %v135
  %774 = vmatpush.msra.mxu0 %v134
  %775 = vmatmul.f32.gmra.mxu0 %v556
  %v776 = vpop.f32.mrf.mxu0
  %v777 = vadd.f32 %v757, %v776
  %778 = vdwg.mxu0
  %779 = vmatpush.msra.mxu0 %v165
  %780 = vmatpush.msra.mxu0 %v164
  %781 = vmatpush.msra.mxu0 %v163
  %782 = vmatpush.msra.mxu0 %v162
  %783 = vmatpush.msra.mxu0 %v161
  %784 = vmatpush.msra.mxu0 %v160
  %785 = vmatpush.msra.mxu0 %v159
  %786 = vmatpush.msra.mxu0 %v158
  %787 = vmatpush.msra.mxu0 %v157
  %788 = vmatpush.msra.mxu0 %v156
  %789 = vmatpush.msra.mxu0 %v155
  %790 = vmatpush.msra.mxu0 %v154
  %791 = vmatpush.msra.mxu0 %v153
  %792 = vmatpush.msra.mxu0 %v152
  %793 = vmatpush.msra.mxu0 %v151
  %794 = vmatpush.msra.mxu0 %v150
  %795 = vmatmul.f32.gmra.mxu0 %v559
  %v796 = vpop.f32.mrf.mxu0
  %v797 = vadd.f32 %v777, %v796
  %798 = vdwg.mxu0
  %799 = vmatpush.msra.mxu0 %v181
  %800 = vmatpush.msra.mxu0 %v180
  %801 = vmatpush.msra.mxu0 %v179
  %802 = vmatpush.msra.mxu0 %v178
  %803 = vmatpush.msra.mxu0 %v177
  %804 = vmatpush.msra.mxu0 %v176
  %805 = vmatpush.msra.mxu0 %v175
  %806 = vmatpush.msra.mxu0 %v174
  %807 = vmatpush.msra.mxu0 %v173
  %808 = vmatpush.msra.mxu0 %v172
  %809 = vmatpush.msra.mxu0 %v171
  %810 = vmatpush.msra.mxu0 %v170
  %811 = vmatpush.msra.mxu0 %v169
  %812 = vmatpush.msra.mxu0 %v168
  %813 = vmatpush.msra.mxu0 %v167
  %814 = vmatpush.msra.mxu0 %v166
  %815 = vmatmul.f32.gmra.mxu0 %v560
  %v816 = vpop.f32.mrf.mxu0
  %v817 = vadd.f32 %v797, %v816
  %818 = vdwg.mxu0
  %819 = vmatpush.msra.mxu0 %v197
  %820 = vmatpush.msra.mxu0 %v196
  %821 = vmatpush.msra.mxu0 %v195
  %822 = vmatpush.msra.mxu0 %v194
  %823 = vmatpush.msra.mxu0 %v193
  %824 = vmatpush.msra.mxu0 %v192
  %825 = vmatpush.msra.mxu0 %v191
  %826 = vmatpush.msra.mxu0 %v190
  %827 = vmatpush.msra.mxu0 %v189
  %828 = vmatpush.msra.mxu0 %v188
  %829 = vmatpush.msra.mxu0 %v187
  %830 = vmatpush.msra.mxu0 %v186
  %831 = vmatpush.msra.mxu0 %v185
  %832 = vmatpush.msra.mxu0 %v184
  %833 = vmatpush.msra.mxu0 %v183
  %834 = vmatpush.msra.mxu0 %v182
  %835 = vmatmul.f32.gmra.mxu0 %v561
  %v836 = vpop.f32.mrf.mxu0
  %v837 = vadd.f32 %v817, %v836
  %838 = vdwg.mxu0
  %839 = vmatpush.msra.mxu0 %v213
  %840 = vmatpush.msra.mxu0 %v212
  %841 = vmatpush.msra.mxu0 %v211
  %842 = vmatpush.msra.mxu0 %v210
  %843 = vmatpush.msra.mxu0 %v209
  %844 = vmatpush.msra.mxu0 %v208
  %845 = vmatpush.msra.mxu0 %v207
  %846 = vmatpush.msra.mxu0 %v206
  %847 = vmatpush.msra.mxu0 %v205
  %848 = vmatpush.msra.mxu0 %v204
  %849 = vmatpush.msra.mxu0 %v203
  %850 = vmatpush.msra.mxu0 %v202
  %851 = vmatpush.msra.mxu0 %v201
  %852 = vmatpush.msra.mxu0 %v200
  %853 = vmatpush.msra.mxu0 %v199
  %854 = vmatpush.msra.mxu0 %v198
  %855 = vmatmul.f32.gmra.mxu0 %v562
  %v856 = vpop.f32.mrf.mxu0
  %v857 = vadd.f32 %v837, %v856
  %858 = vdwg.mxu0
  %859 = vmatpush.msra.mxu0 %v229
  %860 = vmatpush.msra.mxu0 %v228
  %861 = vmatpush.msra.mxu0 %v227
  %862 = vmatpush.msra.mxu0 %v226
  %863 = vmatpush.msra.mxu0 %v225
  %864 = vmatpush.msra.mxu0 %v224
  %865 = vmatpush.msra.mxu0 %v223
  %866 = vmatpush.msra.mxu0 %v222
  %867 = vmatpush.msra.mxu0 %v221
  %868 = vmatpush.msra.mxu0 %v220
  %869 = vmatpush.msra.mxu0 %v219
  %870 = vmatpush.msra.mxu0 %v218
  %871 = vmatpush.msra.mxu0 %v217
  %872 = vmatpush.msra.mxu0 %v216
  %873 = vmatpush.msra.mxu0 %v215
  %874 = vmatpush.msra.mxu0 %v214
  %875 = vmatmul.f32.gmra.mxu0 %v563
  %v876 = vpop.f32.mrf.mxu0
  %v877 = vadd.f32 %v857, %v876
  %878 = vdwg.mxu0
  %879 = vmatpush.msra.mxu0 %v245
  %880 = vmatpush.msra.mxu0 %v244
  %881 = vmatpush.msra.mxu0 %v243
  %882 = vmatpush.msra.mxu0 %v242
  %883 = vmatpush.msra.mxu0 %v241
  %884 = vmatpush.msra.mxu0 %v240
  %885 = vmatpush.msra.mxu0 %v239
  %886 = vmatpush.msra.mxu0 %v238
  %887 = vmatpush.msra.mxu0 %v237
  %888 = vmatpush.msra.mxu0 %v236
  %889 = vmatpush.msra.mxu0 %v235
  %890 = vmatpush.msra.mxu0 %v234
  %891 = vmatpush.msra.mxu0 %v233
  %892 = vmatpush.msra.mxu0 %v232
  %893 = vmatpush.msra.mxu0 %v231
  %894 = vmatpush.msra.mxu0 %v230
  %895 = vmatmul.f32.gmra.mxu0 %v564
  %v896 = vpop.f32.mrf.mxu0
  %v897 = vadd.f32 %v877, %v896
  %898 = vdwg.mxu0
  %899 = vmatpush.msra.mxu0 %v261
  %900 = vmatpush.msra.mxu0 %v260
  %901 = vmatpush.msra.mxu0 %v259
  %902 = vmatpush.msra.mxu0 %v258
  %903 = vmatpush.msra.mxu0 %v257
  %904 = vmatpush.msra.mxu0 %v256
  %905 = vmatpush.msra.mxu0 %v255
  %906 = vmatpush.msra.mxu0 %v254
  %907 = vmatpush.msra.mxu0 %v253
  %908 = vmatpush.msra.mxu0 %v252
  %909 = vmatpush.msra.mxu0 %v251
  %910 = vmatpush.msra.mxu0 %v250
  %911 = vmatpush.msra.mxu0 %v249
  %912 = vmatpush.msra.mxu0 %v248
  %913 = vmatpush.msra.mxu0 %v247
  %914 = vmatpush.msra.mxu0 %v246
  %915 = vmatmul.f32.gmra.mxu0 %v565
  %v916 = vpop.f32.mrf.mxu0
  %v917 = vadd.f32 %v897, %v916
  %918 = vdwg.mxu0
  %919 = vmatpush.msra.mxu0 %v277
  %920 = vmatpush.msra.mxu0 %v276
  %921 = vmatpush.msra.mxu0 %v275
  %922 = vmatpush.msra.mxu0 %v274
  %923 = vmatpush.msra.mxu0 %v273
  %924 = vmatpush.msra.mxu0 %v272
  %925 = vmatpush.msra.mxu0 %v271
  %926 = vmatpush.msra.mxu0 %v270
  %927 = vmatpush.msra.mxu0 %v269
  %928 = vmatpush.msra.mxu0 %v268
  %929 = vmatpush.msra.mxu0 %v267
  %930 = vmatpush.msra.mxu0 %v266
  %931 = vmatpush.msra.mxu0 %v265
  %932 = vmatpush.msra.mxu0 %v264
  %933 = vmatpush.msra.mxu0 %v263
  %934 = vmatpush.msra.mxu0 %v262
  %935 = vmatmul.f32.gmra.mxu0 %v566
  %v936 = vpop.f32.mrf.mxu0
  %v937 = vadd.f32 %v917, %v936
  %938 = vdwg.mxu0
  %939 = vmatpush.msra.mxu0 %v293
  %940 = vmatpush.msra.mxu0 %v292
  %941 = vmatpush.msra.mxu0 %v291
  %942 = vmatpush.msra.mxu0 %v290
  %943 = vmatpush.msra.mxu0 %v289
  %944 = vmatpush.msra.mxu0 %v288
  %945 = vmatpush.msra.mxu0 %v287
  %946 = vmatpush.msra.mxu0 %v286
  %947 = vmatpush.msra.mxu0 %v285
  %948 = vmatpush.msra.mxu0 %v284
  %949 = vmatpush.msra.mxu0 %v283
  %950 = vmatpush.msra.mxu0 %v282
  %951 = vmatpush.msra.mxu0 %v281
  %952 = vmatpush.msra.mxu0 %v280
  %953 = vmatpush.msra.mxu0 %v279
  %954 = vmatpush.msra.mxu0 %v278
  %955 = vmatmul.f32.gmra.mxu0 %v569
  %v956 = vpop.f32.mrf.mxu0
  %v957 = vadd.f32 %v937, %v956
  %958 = vdwg.mxu0
  %959 = vmatpush.msra.mxu0 %v309
  %960 = vmatpush.msra.mxu0 %v308
  %961 = vmatpush.msra.mxu0 %v307
  %962 = vmatpush.msra.mxu0 %v306
  %963 = vmatpush.msra.mxu0 %v305
  %964 = vmatpush.msra.mxu0 %v304
  %965 = vmatpush.msra.mxu0 %v303
  %966 = vmatpush.msra.mxu0 %v302
  %967 = vmatpush.msra.mxu0 %v301
  %968 = vmatpush.msra.mxu0 %v300
  %969 = vmatpush.msra.mxu0 %v299
  %970 = vmatpush.msra.mxu0 %v298
  %971 = vmatpush.msra.mxu0 %v297
  %972 = vmatpush.msra.mxu0 %v296
  %973 = vmatpush.msra.mxu0 %v295
  %974 = vmatpush.msra.mxu0 %v294
  %975 = vmatmul.f32.gmra.mxu0 %v570
  %v976 = vpop.f32.mrf.mxu0
  %v977 = vadd.f32 %v957, %v976
  %978 = vdwg.mxu0
  %979 = vmatpush.msra.mxu0 %v325
  %980 = vmatpush.msra.mxu0 %v324
  %981 = vmatpush.msra.mxu0 %v323
  %982 = vmatpush.msra.mxu0 %v322
  %983 = vmatpush.msra.mxu0 %v321
  %984 = vmatpush.msra.mxu0 %v320
  %985 = vmatpush.msra.mxu0 %v319
  %986 = vmatpush.msra.mxu0 %v318
  %987 = vmatpush.msra.mxu0 %v317
  %988 = vmatpush.msra.mxu0 %v316
  %989 = vmatpush.msra.mxu0 %v315
  %990 = vmatpush.msra.mxu0 %v314
  %991 = vmatpush.msra.mxu0 %v313
  %992 = vmatpush.msra.mxu0 %v312
  %993 = vmatpush.msra.mxu0 %v311
  %994 = vmatpush.msra.mxu0 %v310
  %995 = vmatmul.f32.gmra.mxu0 %v571
  %v996 = vpop.f32.mrf.mxu0
  %v997 = vadd.f32 %v977, %v996
  %998 = vdwg.mxu0
  %999 = vmatpush.msra.mxu0 %v341
  %1000 = vmatpush.msra.mxu0 %v340
  %1001 = vmatpush.msra.mxu0 %v339
  %1002 = vmatpush.msra.mxu0 %v338
  %1003 = vmatpush.msra.mxu0 %v337
  %1004 = vmatpush.msra.mxu0 %v336
  %1005 = vmatpush.msra.mxu0 %v335
  %1006 = vmatpush.msra.mxu0 %v334
  %1007 = vmatpush.msra.mxu0 %v333
  %1008 = vmatpush.msra.mxu0 %v332
  %1009 = vmatpush.msra.mxu0 %v331
  %1010 = vmatpush.msra.mxu0 %v330
  %1011 = vmatpush.msra.mxu0 %v329
  %1012 = vmatpush.msra.mxu0 %v328
  %1013 = vmatpush.msra.mxu0 %v327
  %1014 = vmatpush.msra.mxu0 %v326
  %1015 = vmatmul.f32.gmra.mxu0 %v572
  %v1016 = vpop.f32.mrf.mxu0
  %v1017 = vadd.f32 %v997, %v1016
  %1018 = vdwg.mxu0
  %1019 = vmatpush.msra.mxu0 %v357
  %1020 = vmatpush.msra.mxu0 %v356
  %1021 = vmatpush.msra.mxu0 %v355
  %1022 = vmatpush.msra.mxu0 %v354
  %1023 = vmatpush.msra.mxu0 %v353
  %1024 = vmatpush.msra.mxu0 %v352
  %1025 = vmatpush.msra.mxu0 %v351
  %1026 = vmatpush.msra.mxu0 %v350
  %1027 = vmatpush.msra.mxu0 %v349
  %1028 = vmatpush.msra.mxu0 %v348
  %1029 = vmatpush.msra.mxu0 %v347
  %1030 = vmatpush.msra.mxu0 %v346
  %1031 = vmatpush.msra.mxu0 %v345
  %1032 = vmatpush.msra.mxu0 %v344
  %1033 = vmatpush.msra.mxu0 %v343
  %1034 = vmatpush.msra.mxu0 %v342
  %1035 = vmatmul.f32.gmra.mxu0 %v573
  %v1036 = vpop.f32.mrf.mxu0
  %v1037 = vadd.f32 %v1017, %v1036
  %1038 = vdwg.mxu0
  %1039 = vmatpush.msra.mxu0 %v373
  %1040 = vmatpush.msra.mxu0 %v372
  %1041 = vmatpush.msra.mxu0 %v371
  %1042 = vmatpush.msra.mxu0 %v370
  %1043 = vmatpush.msra.mxu0 %v369
  %1044 = vmatpush.msra.mxu0 %v368
  %1045 = vmatpush.msra.mxu0 %v367
  %1046 = vmatpush.msra.mxu0 %v366
  %1047 = vmatpush.msra.mxu0 %v365
  %1048 = vmatpush.msra.mxu0 %v364
  %1049 = vmatpush.msra.mxu0 %v363
  %1050 = vmatpush.msra.mxu0 %v362
  %1051 = vmatpush.msra.mxu0 %v361
  %1052 = vmatpush.msra.mxu0 %v360
  %1053 = vmatpush.msra.mxu0 %v359
  %1054 = vmatpush.msra.mxu0 %v358
  %1055 = vmatmul.f32.gmra.mxu0 %v574
  %v1056 = vpop.f32.mrf.mxu0
  %v1057 = vadd.f32 %v1037, %v1056
  %1058 = vdwg.mxu0
  %1059 = vmatpush.msra.mxu0 %v389
  %1060 = vmatpush.msra.mxu0 %v388
  %1061 = vmatpush.msra.mxu0 %v387
  %1062 = vmatpush.msra.mxu0 %v386
  %1063 = vmatpush.msra.mxu0 %v385
  %1064 = vmatpush.msra.mxu0 %v384
  %1065 = vmatpush.msra.mxu0 %v383
  %1066 = vmatpush.msra.mxu0 %v382
  %1067 = vmatpush.msra.mxu0 %v381
  %1068 = vmatpush.msra.mxu0 %v380
  %1069 = vmatpush.msra.mxu0 %v379
  %1070 = vmatpush.msra.mxu0 %v378
  %1071 = vmatpush.msra.mxu0 %v377
  %1072 = vmatpush.msra.mxu0 %v376
  %1073 = vmatpush.msra.mxu0 %v375
  %1074 = vmatpush.msra.mxu0 %v374
  %1075 = vmatmul.f32.gmra.mxu0 %v575
  %v1076 = vpop.f32.mrf.mxu0
  %v1077 = vadd.f32 %v1057, %v1076
  %1078 = vdwg.mxu0
  %1079 = vmatpush.msra.mxu0 %v405
  %1080 = vmatpush.msra.mxu0 %v404
  %1081 = vmatpush.msra.mxu0 %v403
  %1082 = vmatpush.msra.mxu0 %v402
  %1083 = vmatpush.msra.mxu0 %v401
  %1084 = vmatpush.msra.mxu0 %v400
  %1085 = vmatpush.msra.mxu0 %v399
  %1086 = vmatpush.msra.mxu0 %v398
  %1087 = vmatpush.msra.mxu0 %v397
  %1088 = vmatpush.msra.mxu0 %v396
  %1089 = vmatpush.msra.mxu0 %v395
  %1090 = vmatpush.msra.mxu0 %v394
  %1091 = vmatpush.msra.mxu0 %v393
  %1092 = vmatpush.msra.mxu0 %v392
  %1093 = vmatpush.msra.mxu0 %v391
  %1094 = vmatpush.msra.mxu0 %v390
  %1095 = vmatmul.f32.gmra.mxu0 %v576
  %v1096 = vpop.f32.mrf.mxu0
  %v1097 = vadd.f32 %v1077, %v1096
  %1098 = vdwg.mxu0
  %1099 = vmatpush.msra.mxu0 %v421
  %1100 = vmatpush.msra.mxu0 %v420
  %1101 = vmatpush.msra.mxu0 %v419
  %1102 = vmatpush.msra.mxu0 %v418
  %1103 = vmatpush.msra.mxu0 %v417
  %1104 = vmatpush.msra.mxu0 %v416
  %1105 = vmatpush.msra.mxu0 %v415
  %1106 = vmatpush.msra.mxu0 %v414
  %1107 = vmatpush.msra.mxu0 %v413
  %1108 = vmatpush.msra.mxu0 %v412
  %1109 = vmatpush.msra.mxu0 %v411
  %1110 = vmatpush.msra.mxu0 %v410
  %1111 = vmatpush.msra.mxu0 %v409
  %1112 = vmatpush.msra.mxu0 %v408
  %1113 = vmatpush.msra.mxu0 %v407
  %1114 = vmatpush.msra.mxu0 %v406
  %1115 = vmatmul.f32.gmra.mxu0 %v579
  %v1116 = vpop.f32.mrf.mxu0
  %v1117 = vadd.f32 %v1097, %v1116
  %1118 = vdwg.mxu0
  %1119 = vmatpush.msra.mxu0 %v437
  %1120 = vmatpush.msra.mxu0 %v436
  %1121 = vmatpush.msra.mxu0 %v435
  %1122 = vmatpush.msra.mxu0 %v434
  %1123 = vmatpush.msra.mxu0 %v433
  %1124 = vmatpush.msra.mxu0 %v432
  %1125 = vmatpush.msra.mxu0 %v431
  %1126 = vmatpush.msra.mxu0 %v430
  %1127 = vmatpush.msra.mxu0 %v429
  %1128 = vmatpush.msra.mxu0 %v428
  %1129 = vmatpush.msra.mxu0 %v427
  %1130 = vmatpush.msra.mxu0 %v426
  %1131 = vmatpush.msra.mxu0 %v425
  %1132 = vmatpush.msra.mxu0 %v424
  %1133 = vmatpush.msra.mxu0 %v423
  %1134 = vmatpush.msra.mxu0 %v422
  %1135 = vmatmul.f32.gmra.mxu0 %v580
  %v1136 = vpop.f32.mrf.mxu0
  %v1137 = vadd.f32 %v1117, %v1136
  %1138 = vdwg.mxu0
  %1139 = vmatpush.msra.mxu0 %v453
  %1140 = vmatpush.msra.mxu0 %v452
  %1141 = vmatpush.msra.mxu0 %v451
  %1142 = vmatpush.msra.mxu0 %v450
  %1143 = vmatpush.msra.mxu0 %v449
  %1144 = vmatpush.msra.mxu0 %v448
  %1145 = vmatpush.msra.mxu0 %v447
  %1146 = vmatpush.msra.mxu0 %v446
  %1147 = vmatpush.msra.mxu0 %v445
  %1148 = vmatpush.msra.mxu0 %v444
  %1149 = vmatpush.msra.mxu0 %v443
  %1150 = vmatpush.msra.mxu0 %v442
  %1151 = vmatpush.msra.mxu0 %v441
  %1152 = vmatpush.msra.mxu0 %v440
  %1153 = vmatpush.msra.mxu0 %v439
  %1154 = vmatpush.msra.mxu0 %v438
  %1155 = vmatmul.f32.gmra.mxu0 %v581
  %v1156 = vpop.f32.mrf.mxu0
  %v1157 = vadd.f32 %v1137, %v1156
  %1158 = vdwg.mxu0
  %1159 = vmatpush.msra.mxu0 %v469
  %1160 = vmatpush.msra.mxu0 %v468
  %1161 = vmatpush.msra.mxu0 %v467
  %1162 = vmatpush.msra.mxu0 %v466
  %1163 = vmatpush.msra.mxu0 %v465
  %1164 = vmatpush.msra.mxu0 %v464
  %1165 = vmatpush.msra.mxu0 %v463
  %1166 = vmatpush.msra.mxu0 %v462
  %1167 = vmatpush.msra.mxu0 %v461
  %1168 = vmatpush.msra.mxu0 %v460
  %1169 = vmatpush.msra.mxu0 %v459
  %1170 = vmatpush.msra.mxu0 %v458
  %1171 = vmatpush.msra.mxu0 %v457
  %1172 = vmatpush.msra.mxu0 %v456
  %1173 = vmatpush.msra.mxu0 %v455
  %1174 = vmatpush.msra.mxu0 %v454
  %1175 = vmatmul.f32.gmra.mxu0 %v582
  %v1176 = vpop.f32.mrf.mxu0
  %v1177 = vadd.f32 %v1157, %v1176
  %1178 = vdwg.mxu0
  %1179 = vmatpush.msra.mxu0 %v485
  %1180 = vmatpush.msra.mxu0 %v484
  %1181 = vmatpush.msra.mxu0 %v483
  %1182 = vmatpush.msra.mxu0 %v482
  %1183 = vmatpush.msra.mxu0 %v481
  %1184 = vmatpush.msra.mxu0 %v480
  %1185 = vmatpush.msra.mxu0 %v479
  %1186 = vmatpush.msra.mxu0 %v478
  %1187 = vmatpush.msra.mxu0 %v477
  %1188 = vmatpush.msra.mxu0 %v476
  %1189 = vmatpush.msra.mxu0 %v475
  %1190 = vmatpush.msra.mxu0 %v474
  %1191 = vmatpush.msra.mxu0 %v473
  %1192 = vmatpush.msra.mxu0 %v472
  %1193 = vmatpush.msra.mxu0 %v471
  %1194 = vmatpush.msra.mxu0 %v470
  %1195 = vmatmul.f32.gmra.mxu0 %v583
  %v1196 = vpop.f32.mrf.mxu0
  %v1197 = vadd.f32 %v1177, %v1196
  %1198 = vdwg.mxu0
  %1199 = vmatpush.msra.mxu0 %v501
  %1200 = vmatpush.msra.mxu0 %v500
  %1201 = vmatpush.msra.mxu0 %v499
  %1202 = vmatpush.msra.mxu0 %v498
  %1203 = vmatpush.msra.mxu0 %v497
  %1204 = vmatpush.msra.mxu0 %v496
  %1205 = vmatpush.msra.mxu0 %v495
  %1206 = vmatpush.msra.mxu0 %v494
  %1207 = vmatpush.msra.mxu0 %v493
  %1208 = vmatpush.msra.mxu0 %v492
  %1209 = vmatpush.msra.mxu0 %v491
  %1210 = vmatpush.msra.mxu0 %v490
  %1211 = vmatpush.msra.mxu0 %v489
  %1212 = vmatpush.msra.mxu0 %v488
  %1213 = vmatpush.msra.mxu0 %v487
  %1214 = vmatpush.msra.mxu0 %v486
  %1215 = vmatmul.f32.gmra.mxu0 %v584
  %v1216 = vpop.f32.mrf.mxu0
  %v1217 = vadd.f32 %v1197, %v1216
  %1218 = vdwg.mxu0
  %1219 = vmatpush.msra.mxu0 %v517
  %1220 = vmatpush.msra.mxu0 %v516
  %1221 = vmatpush.msra.mxu0 %v515
  %1222 = vmatpush.msra.mxu0 %v514
  %1223 = vmatpush.msra.mxu0 %v513
  %1224 = vmatpush.msra.mxu0 %v512
  %1225 = vmatpush.msra.mxu0 %v511
  %1226 = vmatpush.msra.mxu0 %v510
  %1227 = vmatpush.msra.mxu0 %v509
  %1228 = vmatpush.msra.mxu0 %v508
  %1229 = vmatpush.msra.mxu0 %v507
  %1230 = vmatpush.msra.mxu0 %v506
  %1231 = vmatpush.msra.mxu0 %v505
  %1232 = vmatpush.msra.mxu0 %v504
  %1233 = vmatpush.msra.mxu0 %v503
  %1234 = vmatpush.msra.mxu0 %v502
  %1235 = vmatmul.f32.gmra.mxu0 %v585
  %v1236 = vpop.f32.mrf.mxu0
  %v1237 = vadd.f32 %v1217, %v1236
  %1238 = vdwg.mxu0
  %1239 = vmatpush.msra.mxu0 %v533
  %1240 = vmatpush.msra.mxu0 %v532
  %1241 = vmatpush.msra.mxu0 %v531
  %1242 = vmatpush.msra.mxu0 %v530
  %1243 = vmatpush.msra.mxu0 %v529
  %1244 = vmatpush.msra.mxu0 %v528
  %1245 = vmatpush.msra.mxu0 %v527
  %1246 = vmatpush.msra.mxu0 %v526
  %1247 = vmatpush.msra.mxu0 %v525
  %1248 = vmatpush.msra.mxu0 %v524
  %1249 = vmatpush.msra.mxu0 %v523
  %1250 = vmatpush.msra.mxu0 %v522
  %1251 = vmatpush.msra.mxu0 %v521
  %1252 = vmatpush.msra.mxu0 %v520
  %1253 = vmatpush.msra.mxu0 %v519
  %1254 = vmatpush.msra.mxu0 %v518
  %1255 = vmatmul.f32.gmra.mxu0 %v586
  %v1256 = vpop.f32.mrf.mxu0
  %v1257 = vadd.f32 %v1237, %v1256
  %1258 = vdwg.mxu0
  %vm1259 = vcmask 517120
  %v1260 = vsel %vm1259, %v1257, 0.0
  %1261 = vadd.xlane.f32.xlu0 %v1260
  %v1262 = vpop.xlane.xlu0 %1261
  %v1263 = vrcp.pop 64.0
  %v1264 = vmul.f32 64.0, %v1263
  %v1265 = vsub.f32 1.0, %v1264
  %v1266 = vmul.f32 %v1263, %v1265
  %v1267 = vadd.f32 %v1263, %v1266
  %vm1268 = vweird.f32 %v1263
  %v1269 = vsel %vm1268, %v1263, %v1267
  %v1270 = vmul.f32 %v1262, %v1269
  %v1271 = vmul.f32 %v1257, %v1257
  %v1272 = vsel %vm1259, %v1271, 0.0
  %1273 = vadd.xlane.f32.xlu0 %v1272
  %v1274 = vpop.xlane.xlu0 %1273
  %v1275 = vmul.f32 %v1274, %v1269
  %v1276 = vmul.f32 %v1270, %v1270
  %v1277 = vsub.f32 %v1275, %v1276
  %v1278 = vsub.f32 %v1257, %v1270
  %v1279 = vadd.f32 %v1277, 1e-05
  %v1280 = vrsqrt.pop %v1279
  %v1281 = vmul.f32 %v1280, %v1279
  %v1282 = vmul.f32 %v1281, %v1280
  %v1283 = vmul.f32 0.5, %v1282
  %v1284 = vsub.f32 1.5, %v1283
  %v1285 = vmul.f32 %v1280, %v1284
  %vm1286 = vweird.f32 %v1279
  %vm1287 = vweird.f32 %v1280
  %vm1288 = vmor %vm1286, %vm1287
  %v1289 = vsel %vm1288, %v1280, %v1285
  %v1290 = vmul.f32 %v1278, %v1289
  %v1291 = vmax.f32 %v1290, 0.0
  %1292 = vst.msk [vmem:[%s3] sm:$0x3] %vm1259, %v1291
  // Predicated region
  $region14: #{mesh_encoder_forward.10} parent=0 // pred_check
    _
  $region15: #{mesh_encoder_forward.10} parent=0 // pred_check_branch
    %1294 = sbr.rel (0) target = $region17
  $region16: #{mesh_encoder_forward.10} parent=0 // pred_region
    _
  $region17: #{mesh_encoder_forward.10} parent=0 // pred_fallthru
    _
  // Predicated region
  $region18: #{mesh_encoder_forward.10} parent=0 // pred_check
    _
  $region19: #{mesh_encoder_forward.10} parent=0 // pred_check_branch
    %1296 = sbr.rel (0) target = $region21
  $region20: #{mesh_encoder_forward.10} parent=0 // pred_region
    _
  $region21: #{mesh_encoder_forward.10} parent=0 // pred_fallthru
    _

</llo_original>
